<compile_context>
chip_gen: v6e
topology: v6e:2x2x1
jax: 0.10.0
libtpu: 0.0.40
codegen_flags: <defaults>
</compile_context>

<pallas_src>
import functools

import numpy as np

import jax
import jax.numpy as jnp
from jax.experimental import pallas as pl
from jax.experimental.pallas import tpu as pltpu

VMEM = pl.BlockSpec(memory_space=pltpu.MemorySpace.VMEM)
BN_EPS = 1e-5
NUM_ACTIONS = 12
FC2_PAD = 128      # lane-dense fc2 output width
SMALL_LANES = 256  # lane width of the packed small-parameter slab


def _round_up(n, m):
    return ((n + m - 1) // m) * m


# ------------------------------ fused kernel ------------------------------- #

def _fused_kernel(x_ref, small_ref,
                  w1_ref, w2_ref, w3_ref, w4_ref,
                  wfc1_ref, wfc2_ref, out_ref, *, batch):
    f32, bf16 = jnp.float32, jnp.bfloat16
    rp = x_ref.shape[0]               # padded row count (multiple of 8)

    # Static tap geometry for a 3x3 / pad=1 conv on a 3x3 map with rows ordered
    # (y*3 + x)*batch + b: tap (dy, dx) reads row r + (dy*3 + dx)*batch.
    offs = [(dy * 3 + dx) * batch for dy in (-1, 0, 1) for dx in (-1, 0, 1)]
    # Per-tap 0/1 validity columns ([rp, 1], zero on padded rows), precomputed
    # on the host and packed into rows 8 : 8+rp of the small-parameter slab.
    mask_cols = [small_ref[8:8 + rp, t:t + 1] for t in range(9)]

    def shift_rows(a, off):
        # Shifted copy a[r] <- a[r + off]; wrapped/out-of-range rows are always
        # masked to zero by mask_cols, so a circular roll is exact here.
        return a if off == 0 else jnp.roll(a, -off, axis=0)

    def conv3x3_relu(act, w_ref, bias_row):
        # act: [rp, Cin] f32.  Build the im2col slab [rp, 9*Cin] (tap-major,
        # channel-minor lanes) and do a single K = 9*Cin MXU dot in bf16.
        patches = jnp.concatenate(
            [mask_cols[t] * shift_rows(act, offs[t]) for t in range(9)],
            axis=1)
        y = jnp.dot(patches.astype(bf16), w_ref[...],
                    preferred_element_type=f32)
        return jnp.maximum(y + bias_row, 0.0)

    # bn0 (inference affine), applied before the convs' implicit zero padding.
    c0 = x_ref.shape[1]
    act = x_ref[...] * small_ref[0:1, 0:c0] + small_ref[1:2, 0:c0]   # [rp, 6]

    act = conv3x3_relu(act, w1_ref, small_ref[2:3, 0:w1_ref.shape[1]])   # 32
    act = conv3x3_relu(act, w2_ref, small_ref[3:4, 0:w2_ref.shape[1]])   # 64
    act = conv3x3_relu(act, w3_ref, small_ref[4:5, 0:w3_ref.shape[1]])   # 128
    act = conv3x3_relu(act, w4_ref, small_ref[5:6, 0:w4_ref.shape[1]])   # 256

    # fc1 (bn1 pre-folded into wfc1/bias); Dropout(0.1) is identity in eval.
    # Relayout (spatial, batch) rows -> [batch, 9*256] lanes (NCHW flatten
    # order handled by weight prep), then a single K = 2304 dot.
    h_in = jnp.concatenate(
        [act[s * batch:(s + 1) * batch, :] for s in range(9)], axis=1)
    h = jnp.dot(h_in.astype(bf16), wfc1_ref[...], preferred_element_type=f32)
    h = jnp.maximum(h + small_ref[6:7, 0:wfc1_ref.shape[1]], 0.0)

    # fc2, padded to 128 output lanes for a lane-dense store (sliced outside).
    out = (jnp.dot(h.astype(bf16), wfc2_ref[...], preferred_element_type=f32)
           + small_ref[7:8, 0:wfc2_ref.shape[1]])
    out_ref[...] = out.astype(out_ref.dtype)


# ------------------------- parameter preparation --------------------------- #

def prepare_params(params, batch, h=3, w=3):
    """One-time (outside jit) weight prep: reshape conv weights to
    [9*Cin, Cout] bf16, fold bn1 into fc1, pad fc2 to 128 lanes, and pack all
    small operands (bn0 affine, biases, tap masks) into one f32 slab."""
    P = jax.lax.Precision.HIGHEST
    assert h == 3 and w == 3, "QNetwork2DConv fc1 assumes a 3x3 spatial map"
    rows = h * w * batch
    rp = _round_up(rows, 8)
    prep = {}

    # Conv weights: [Cout, Cin, 3, 3] -> [9*Cin, Cout] (tap-major rows).
    for i in (1, 2, 3, 4):
        wt = params[f"conv{i}_w"]
        cout, cin = wt.shape[0], wt.shape[1]
        prep[f"w{i}"] = (jnp.transpose(wt, (2, 3, 1, 0))
                         .reshape(9 * cin, cout).astype(jnp.bfloat16))

    # fc1 with bn1 folded exactly; PyTorch NCHW flatten order: col = c*9 + s.
    s1 = params["bn1"]["gamma"] / jnp.sqrt(params["bn1"]["running_var"] + BN_EPS)
    t1 = params["bn1"]["beta"] - params["bn1"]["running_mean"] * s1
    wf1 = params["fc1_w"]
    nout, nin = wf1.shape
    c = nin // (h * w)
    assert nin == c * h * w
    w3 = wf1.reshape(nout, c, h * w)                     # [out, c, s]
    prep["wfc1"] = (jnp.transpose(w3 * s1[None, :, None], (2, 1, 0))
                    .reshape(h * w * c, nout).astype(jnp.bfloat16))
    bfc1 = params["fc1_b"] + jnp.dot(w3.sum(axis=2), t1, precision=P)

    # fc2 padded to 128 output lanes.
    wf2 = params["fc2_w"]                                # [12, 256]
    pad = FC2_PAD - wf2.shape[0]
    prep["wfc2"] = jnp.pad(wf2.T, ((0, 0), (0, pad))).astype(jnp.bfloat16)
    bfc2 = jnp.pad(params["fc2_b"], (0, pad))

    # bn0 inference affine.
    s0 = params["bn0"]["gamma"] / jnp.sqrt(params["bn0"]["running_var"] + BN_EPS)
    t0 = params["bn0"]["beta"] - params["bn0"]["running_mean"] * s0

    # 3x3 / pad=1 tap-validity masks per (row, tap); padded rows stay zero.
    masks = np.zeros((rp, SMALL_LANES), np.float32)
    taps = [(dy, dx) for dy in (-1, 0, 1) for dx in (-1, 0, 1)]
    for y in range(h):
        for x in range(w):
            for b in range(batch):
                r = (y * w + x) * batch + b
                for t, (dy, dx) in enumerate(taps):
                    if 0 <= y + dy < h and 0 <= x + dx < w:
                        masks[r, t] = 1.0

    def row(v):
        v = jnp.asarray(v, jnp.float32).reshape(-1)
        return jnp.pad(v, (0, SMALL_LANES - v.shape[0]))

    prep["small"] = jnp.concatenate([
        jnp.stack([row(s0), row(t0),
                   row(params["conv1_b"]), row(params["conv2_b"]),
                   row(params["conv3_b"]), row(params["conv4_b"]),
                   row(bfc1), row(bfc2)]),
        jnp.asarray(masks)], axis=0)                      # [8 + rp, 256] f32
    return prep


# ------------------------------ forward pass ------------------------------- #

def qnetwork2dconv_forward(x_nchw, prep):
    B, C, H, W = x_nchw.shape
    assert (H, W) == (3, 3), "QNetwork2DConv fc1 assumes a 3x3 spatial map"
    rows = B * H * W
    rp = prep["small"].shape[0] - 8
    # NCHW -> [rows = (spatial, batch), channels], zero-padded to a sublane
    # multiple.  Padded rows are garbage inside the kernel but are masked out
    # of every conv dot and never read by fc1.
    x2d = jnp.transpose(x_nchw, (2, 3, 0, 1)).reshape(rows, C)
    x2d = jnp.pad(x2d, ((0, rp - rows), (0, 0)))

    out = pl.pallas_call(
        functools.partial(_fused_kernel, batch=B),
        out_shape=jax.ShapeDtypeStruct((B, FC2_PAD), jnp.float32),
        in_specs=[VMEM] * 8,
        out_specs=VMEM,
    )(x2d, prep["small"], prep["w1"], prep["w2"], prep["w3"], prep["w4"],
      prep["wfc1"], prep["wfc2"])
    return out[:, :NUM_ACTIONS]


# --------------------------- reference (plain JAX) -------------------------- #

def reference_forward(x, params):
    P = jax.lax.Precision.HIGHEST

    def bn(x, p):
        s = p["gamma"] / jnp.sqrt(p["running_var"] + BN_EPS)
        t = p["beta"] - p["running_mean"] * s
        return x * s[None, :, None, None] + t[None, :, None, None]

    def conv(x, w, b):
        y = jax.lax.conv_general_dilated(
            x, w, window_strides=(1, 1), padding=((1, 1), (1, 1)),
            dimension_numbers=("NCHW", "OIHW", "NCHW"), precision=P)
        return y + b[None, :, None, None]

    x = bn(x, params["bn0"])
    x = jax.nn.relu(conv(x, params["conv1_w"], params["conv1_b"]))
    x = jax.nn.relu(conv(x, params["conv2_w"], params["conv2_b"]))
    x = jax.nn.relu(conv(x, params["conv3_w"], params["conv3_b"]))
    x = jax.nn.relu(conv(x, params["conv4_w"], params["conv4_b"]))
    x = bn(x, params["bn1"])
    xf = x.reshape(x.shape[0], -1)
    xf = jax.nn.relu(jnp.dot(xf, params["fc1_w"].T, precision=P) + params["fc1_b"])
    return jnp.dot(xf, params["fc2_w"].T, precision=P) + params["fc2_b"]


# ----------------------------- parameter init ------------------------------ #

def init_params(key):
    ks = jax.random.split(key, 20)

    def conv(kw, cout, cin):
        w = jax.random.normal(kw, (cout, cin, 3, 3), jnp.float32) * 0.05
        return w, jnp.zeros((cout,), jnp.float32)

    def linear(kw, cout, cin):
        w = jax.random.normal(kw, (cout, cin), jnp.float32) * 0.02
        return w, jnp.zeros((cout,), jnp.float32)

    def bn(kg, kb, km, kv, c):
        return {
            "gamma": 1.0 + 0.1 * jax.random.normal(kg, (c,), jnp.float32),
            "beta": 0.1 * jax.random.normal(kb, (c,), jnp.float32),
            "running_mean": 0.1 * jax.random.normal(km, (c,), jnp.float32),
            "running_var": 1.0 + 0.1 * jnp.abs(jax.random.normal(kv, (c,), jnp.float32)),
        }

    p = {}
    p["bn0"] = bn(ks[0], ks[1], ks[2], ks[3], 6)
    p["conv1_w"], p["conv1_b"] = conv(ks[4], 32, 6)
    p["conv2_w"], p["conv2_b"] = conv(ks[5], 64, 32)
    p["conv3_w"], p["conv3_b"] = conv(ks[6], 128, 64)
    p["conv4_w"], p["conv4_b"] = conv(ks[7], 256, 128)
    p["bn1"] = bn(ks[8], ks[9], ks[10], ks[11], 256)
    p["fc1_w"], p["fc1_b"] = linear(ks[12], 256, 256 * 3 * 3)
    p["fc2_w"], p["fc2_b"] = linear(ks[13], 12, 256)
    return p


if __name__ == "__main__":
    key = jax.random.PRNGKey(0)
    k_params, k_x = jax.random.split(key)
    params = init_params(k_params)
    x = jax.random.normal(k_x, (2, 6, 3, 3), jnp.float32)   # NCHW, B=2

    prep = prepare_params(params, batch=x.shape[0])          # once, outside jit
    fwd = jax.jit(qnetwork2dconv_forward)
    out = fwd(x, prep)
    jax.block_until_ready(out)

    ref = reference_forward(x, params)
    assert out.shape == (2, NUM_ACTIONS) and out.dtype == jnp.float32
    err = float(jnp.max(jnp.abs(out - ref)))
    # Tolerance covers bf16 MXU operands (f32 accumulation) vs the f32 reference.
    assert err < 3e-2, f"max abs err {err}"
    print("KERNEL_OK")
</pallas_src>

<mosaic_0001>
module attributes {stable_mosaic.version = 11 : i64} {
  func.func @_fused_kernel(%arg0: memref<24x6xf32, #tpu.memory_space<vmem>>, %arg1: memref<32x256xf32, #tpu.memory_space<vmem>>, %arg2: memref<54x32xbf16, #tpu.memory_space<vmem>>, %arg3: memref<288x64xbf16, #tpu.memory_space<vmem>>, %arg4: memref<576x128xbf16, #tpu.memory_space<vmem>>, %arg5: memref<1152x256xbf16, #tpu.memory_space<vmem>>, %arg6: memref<2304x256xbf16, #tpu.memory_space<vmem>>, %arg7: memref<256x128xbf16, #tpu.memory_space<vmem>>, %arg8: memref<2x128xf32, #tpu.memory_space<vmem>>) attributes {dimension_semantics = [], scalar_prefetch = 0 : i64, scratch_operands = 0 : i64, tpu.core_type = #tpu.core_type<tc>} {
    %c8 = arith.constant 8 : index
    %c0 = arith.constant 0 : index
    %0 = vector.load %arg1[%c8, %c0] : memref<32x256xf32, #tpu.memory_space<vmem>>, vector<24x1xf32>
    %c8_0 = arith.constant 8 : index
    %c1 = arith.constant 1 : index
    %1 = vector.load %arg1[%c8_0, %c1] : memref<32x256xf32, #tpu.memory_space<vmem>>, vector<24x1xf32>
    %c8_1 = arith.constant 8 : index
    %c2 = arith.constant 2 : index
    %2 = vector.load %arg1[%c8_1, %c2] : memref<32x256xf32, #tpu.memory_space<vmem>>, vector<24x1xf32>
    %c8_2 = arith.constant 8 : index
    %c3 = arith.constant 3 : index
    %3 = vector.load %arg1[%c8_2, %c3] : memref<32x256xf32, #tpu.memory_space<vmem>>, vector<24x1xf32>
    %c8_3 = arith.constant 8 : index
    %c4 = arith.constant 4 : index
    %4 = vector.load %arg1[%c8_3, %c4] : memref<32x256xf32, #tpu.memory_space<vmem>>, vector<24x1xf32>
    %c8_4 = arith.constant 8 : index
    %c5 = arith.constant 5 : index
    %5 = vector.load %arg1[%c8_4, %c5] : memref<32x256xf32, #tpu.memory_space<vmem>>, vector<24x1xf32>
    %c8_5 = arith.constant 8 : index
    %c6 = arith.constant 6 : index
    %6 = vector.load %arg1[%c8_5, %c6] : memref<32x256xf32, #tpu.memory_space<vmem>>, vector<24x1xf32>
    %c8_6 = arith.constant 8 : index
    %c7 = arith.constant 7 : index
    %7 = vector.load %arg1[%c8_6, %c7] : memref<32x256xf32, #tpu.memory_space<vmem>>, vector<24x1xf32>
    %c8_7 = arith.constant 8 : index
    %c8_8 = arith.constant 8 : index
    %8 = vector.load %arg1[%c8_7, %c8_8] : memref<32x256xf32, #tpu.memory_space<vmem>>, vector<24x1xf32>
    %c0_9 = arith.constant 0 : index
    %c0_10 = arith.constant 0 : index
    %9 = vector.load %arg0[%c0_9, %c0_10] : memref<24x6xf32, #tpu.memory_space<vmem>>, vector<24x6xf32>
    %c0_11 = arith.constant 0 : index
    %c0_12 = arith.constant 0 : index
    %10 = vector.load %arg1[%c0_11, %c0_12] : memref<32x256xf32, #tpu.memory_space<vmem>>, vector<1x6xf32>
    %11 = vector.broadcast %10 : vector<1x6xf32> to vector<24x6xf32>
    %12 = arith.mulf %9, %11 : vector<24x6xf32>
    %c1_13 = arith.constant 1 : index
    %c0_14 = arith.constant 0 : index
    %13 = vector.load %arg1[%c1_13, %c0_14] : memref<32x256xf32, #tpu.memory_space<vmem>>, vector<1x6xf32>
    %14 = vector.broadcast %13 : vector<1x6xf32> to vector<24x6xf32>
    %15 = arith.addf %12, %14 : vector<24x6xf32>
    %c2_15 = arith.constant 2 : index
    %c0_16 = arith.constant 0 : index
    %16 = vector.load %arg1[%c2_15, %c0_16] : memref<32x256xf32, #tpu.memory_space<vmem>>, vector<1x32xf32>
    %17 = vector.extract_strided_slice %15 {offsets = [16, 0], sizes = [8, 6], strides = [1, 1]} : vector<24x6xf32> to vector<8x6xf32>
    %18 = vector.extract_strided_slice %15 {offsets = [0, 0], sizes = [16, 6], strides = [1, 1]} : vector<24x6xf32> to vector<16x6xf32>
    %19 = tpu.concatenate %17, %18 in 0 : vector<8x6xf32>, vector<16x6xf32> -> vector<24x6xf32>
    %20 = vector.broadcast %0 : vector<24x1xf32> to vector<24x6xf32>
    %21 = arith.mulf %20, %19 : vector<24x6xf32>
    %22 = vector.extract_strided_slice %15 {offsets = [18, 0], sizes = [6, 6], strides = [1, 1]} : vector<24x6xf32> to vector<6x6xf32>
    %23 = vector.extract_strided_slice %15 {offsets = [0, 0], sizes = [18, 6], strides = [1, 1]} : vector<24x6xf32> to vector<18x6xf32>
    %24 = tpu.concatenate %22, %23 in 0 : vector<6x6xf32>, vector<18x6xf32> -> vector<24x6xf32>
    %25 = vector.broadcast %1 : vector<24x1xf32> to vector<24x6xf32>
    %26 = arith.mulf %25, %24 : vector<24x6xf32>
    %27 = vector.extract_strided_slice %15 {offsets = [20, 0], sizes = [4, 6], strides = [1, 1]} : vector<24x6xf32> to vector<4x6xf32>
    %28 = vector.extract_strided_slice %15 {offsets = [0, 0], sizes = [20, 6], strides = [1, 1]} : vector<24x6xf32> to vector<20x6xf32>
    %29 = tpu.concatenate %27, %28 in 0 : vector<4x6xf32>, vector<20x6xf32> -> vector<24x6xf32>
    %30 = vector.broadcast %2 : vector<24x1xf32> to vector<24x6xf32>
    %31 = arith.mulf %30, %29 : vector<24x6xf32>
    %32 = vector.extract_strided_slice %15 {offsets = [22, 0], sizes = [2, 6], strides = [1, 1]} : vector<24x6xf32> to vector<2x6xf32>
    %33 = vector.extract_strided_slice %15 {offsets = [0, 0], sizes = [22, 6], strides = [1, 1]} : vector<24x6xf32> to vector<22x6xf32>
    %34 = tpu.concatenate %32, %33 in 0 : vector<2x6xf32>, vector<22x6xf32> -> vector<24x6xf32>
    %35 = vector.broadcast %3 : vector<24x1xf32> to vector<24x6xf32>
    %36 = arith.mulf %35, %34 : vector<24x6xf32>
    %37 = vector.broadcast %4 : vector<24x1xf32> to vector<24x6xf32>
    %38 = arith.mulf %37, %15 : vector<24x6xf32>
    %39 = vector.extract_strided_slice %15 {offsets = [2, 0], sizes = [22, 6], strides = [1, 1]} : vector<24x6xf32> to vector<22x6xf32>
    %40 = vector.extract_strided_slice %15 {offsets = [0, 0], sizes = [2, 6], strides = [1, 1]} : vector<24x6xf32> to vector<2x6xf32>
    %41 = tpu.concatenate %39, %40 in 0 : vector<22x6xf32>, vector<2x6xf32> -> vector<24x6xf32>
    %42 = vector.broadcast %5 : vector<24x1xf32> to vector<24x6xf32>
    %43 = arith.mulf %42, %41 : vector<24x6xf32>
    %44 = vector.extract_strided_slice %15 {offsets = [4, 0], sizes = [20, 6], strides = [1, 1]} : vector<24x6xf32> to vector<20x6xf32>
    %45 = vector.extract_strided_slice %15 {offsets = [0, 0], sizes = [4, 6], strides = [1, 1]} : vector<24x6xf32> to vector<4x6xf32>
    %46 = tpu.concatenate %44, %45 in 0 : vector<20x6xf32>, vector<4x6xf32> -> vector<24x6xf32>
    %47 = vector.broadcast %6 : vector<24x1xf32> to vector<24x6xf32>
    %48 = arith.mulf %47, %46 : vector<24x6xf32>
    %49 = vector.extract_strided_slice %15 {offsets = [6, 0], sizes = [18, 6], strides = [1, 1]} : vector<24x6xf32> to vector<18x6xf32>
    %50 = vector.extract_strided_slice %15 {offsets = [0, 0], sizes = [6, 6], strides = [1, 1]} : vector<24x6xf32> to vector<6x6xf32>
    %51 = tpu.concatenate %49, %50 in 0 : vector<18x6xf32>, vector<6x6xf32> -> vector<24x6xf32>
    %52 = vector.broadcast %7 : vector<24x1xf32> to vector<24x6xf32>
    %53 = arith.mulf %52, %51 : vector<24x6xf32>
    %54 = vector.extract_strided_slice %15 {offsets = [8, 0], sizes = [16, 6], strides = [1, 1]} : vector<24x6xf32> to vector<16x6xf32>
    %55 = vector.extract_strided_slice %15 {offsets = [0, 0], sizes = [8, 6], strides = [1, 1]} : vector<24x6xf32> to vector<8x6xf32>
    %56 = tpu.concatenate %54, %55 in 0 : vector<16x6xf32>, vector<8x6xf32> -> vector<24x6xf32>
    %57 = vector.broadcast %8 : vector<24x1xf32> to vector<24x6xf32>
    %58 = arith.mulf %57, %56 : vector<24x6xf32>
    %59 = tpu.concatenate %21, %26, %31, %36, %38, %43, %48, %53, %58 in 1 : vector<24x6xf32>, vector<24x6xf32>, vector<24x6xf32>, vector<24x6xf32>, vector<24x6xf32>, vector<24x6xf32>, vector<24x6xf32>, vector<24x6xf32>, vector<24x6xf32> -> vector<24x54xf32>
    %60 = arith.truncf %59 : vector<24x54xf32> to vector<24x54xbf16>
    %c0_17 = arith.constant 0 : index
    %c0_18 = arith.constant 0 : index
    %61 = vector.load %arg2[%c0_17, %c0_18] : memref<54x32xbf16, #tpu.memory_space<vmem>>, vector<54x32xbf16>
    %cst = arith.constant dense<0.000000e+00> : vector<24x32xf32>
    %62 = tpu.matmul %60, %61, %cst {dimension_numbers = #tpu.dot_dimension_numbers<[1], [0], [0], [1], [0, 0, 1, 1], [], []>} : vector<24x54xbf16>, vector<54x32xbf16>, vector<24x32xf32> -> vector<24x32xf32>
    %63 = vector.broadcast %16 : vector<1x32xf32> to vector<24x32xf32>
    %64 = arith.addf %62, %63 : vector<24x32xf32>
    %cst_19 = arith.constant 0.000000e+00 : f32
    %65 = vector.broadcast %cst_19 : f32 to vector<24x32xf32>
    %66 = arith.maximumf %64, %65 : vector<24x32xf32>
    %c3_20 = arith.constant 3 : index
    %c0_21 = arith.constant 0 : index
    %67 = vector.load %arg1[%c3_20, %c0_21] : memref<32x256xf32, #tpu.memory_space<vmem>>, vector<1x64xf32>
    %68 = vector.extract_strided_slice %66 {offsets = [16, 0], sizes = [8, 32], strides = [1, 1]} : vector<24x32xf32> to vector<8x32xf32>
    %69 = vector.extract_strided_slice %66 {offsets = [0, 0], sizes = [16, 32], strides = [1, 1]} : vector<24x32xf32> to vector<16x32xf32>
    %70 = tpu.concatenate %68, %69 in 0 : vector<8x32xf32>, vector<16x32xf32> -> vector<24x32xf32>
    %71 = vector.broadcast %0 : vector<24x1xf32> to vector<24x32xf32>
    %72 = arith.mulf %71, %70 : vector<24x32xf32>
    %73 = vector.extract_strided_slice %66 {offsets = [18, 0], sizes = [6, 32], strides = [1, 1]} : vector<24x32xf32> to vector<6x32xf32>
    %74 = vector.extract_strided_slice %66 {offsets = [0, 0], sizes = [18, 32], strides = [1, 1]} : vector<24x32xf32> to vector<18x32xf32>
    %75 = tpu.concatenate %73, %74 in 0 : vector<6x32xf32>, vector<18x32xf32> -> vector<24x32xf32>
    %76 = vector.broadcast %1 : vector<24x1xf32> to vector<24x32xf32>
    %77 = arith.mulf %76, %75 : vector<24x32xf32>
    %78 = vector.extract_strided_slice %66 {offsets = [20, 0], sizes = [4, 32], strides = [1, 1]} : vector<24x32xf32> to vector<4x32xf32>
    %79 = vector.extract_strided_slice %66 {offsets = [0, 0], sizes = [20, 32], strides = [1, 1]} : vector<24x32xf32> to vector<20x32xf32>
    %80 = tpu.concatenate %78, %79 in 0 : vector<4x32xf32>, vector<20x32xf32> -> vector<24x32xf32>
    %81 = vector.broadcast %2 : vector<24x1xf32> to vector<24x32xf32>
    %82 = arith.mulf %81, %80 : vector<24x32xf32>
    %83 = vector.extract_strided_slice %66 {offsets = [22, 0], sizes = [2, 32], strides = [1, 1]} : vector<24x32xf32> to vector<2x32xf32>
    %84 = vector.extract_strided_slice %66 {offsets = [0, 0], sizes = [22, 32], strides = [1, 1]} : vector<24x32xf32> to vector<22x32xf32>
    %85 = tpu.concatenate %83, %84 in 0 : vector<2x32xf32>, vector<22x32xf32> -> vector<24x32xf32>
    %86 = vector.broadcast %3 : vector<24x1xf32> to vector<24x32xf32>
    %87 = arith.mulf %86, %85 : vector<24x32xf32>
    %88 = vector.broadcast %4 : vector<24x1xf32> to vector<24x32xf32>
    %89 = arith.mulf %88, %66 : vector<24x32xf32>
    %90 = vector.extract_strided_slice %66 {offsets = [2, 0], sizes = [22, 32], strides = [1, 1]} : vector<24x32xf32> to vector<22x32xf32>
    %91 = vector.extract_strided_slice %66 {offsets = [0, 0], sizes = [2, 32], strides = [1, 1]} : vector<24x32xf32> to vector<2x32xf32>
    %92 = tpu.concatenate %90, %91 in 0 : vector<22x32xf32>, vector<2x32xf32> -> vector<24x32xf32>
    %93 = vector.broadcast %5 : vector<24x1xf32> to vector<24x32xf32>
    %94 = arith.mulf %93, %92 : vector<24x32xf32>
    %95 = vector.extract_strided_slice %66 {offsets = [4, 0], sizes = [20, 32], strides = [1, 1]} : vector<24x32xf32> to vector<20x32xf32>
    %96 = vector.extract_strided_slice %66 {offsets = [0, 0], sizes = [4, 32], strides = [1, 1]} : vector<24x32xf32> to vector<4x32xf32>
    %97 = tpu.concatenate %95, %96 in 0 : vector<20x32xf32>, vector<4x32xf32> -> vector<24x32xf32>
    %98 = vector.broadcast %6 : vector<24x1xf32> to vector<24x32xf32>
    %99 = arith.mulf %98, %97 : vector<24x32xf32>
    %100 = vector.extract_strided_slice %66 {offsets = [6, 0], sizes = [18, 32], strides = [1, 1]} : vector<24x32xf32> to vector<18x32xf32>
    %101 = vector.extract_strided_slice %66 {offsets = [0, 0], sizes = [6, 32], strides = [1, 1]} : vector<24x32xf32> to vector<6x32xf32>
    %102 = tpu.concatenate %100, %101 in 0 : vector<18x32xf32>, vector<6x32xf32> -> vector<24x32xf32>
    %103 = vector.broadcast %7 : vector<24x1xf32> to vector<24x32xf32>
    %104 = arith.mulf %103, %102 : vector<24x32xf32>
    %105 = vector.extract_strided_slice %66 {offsets = [8, 0], sizes = [16, 32], strides = [1, 1]} : vector<24x32xf32> to vector<16x32xf32>
    %106 = vector.extract_strided_slice %66 {offsets = [0, 0], sizes = [8, 32], strides = [1, 1]} : vector<24x32xf32> to vector<8x32xf32>
    %107 = tpu.concatenate %105, %106 in 0 : vector<16x32xf32>, vector<8x32xf32> -> vector<24x32xf32>
    %108 = vector.broadcast %8 : vector<24x1xf32> to vector<24x32xf32>
    %109 = arith.mulf %108, %107 : vector<24x32xf32>
    %110 = tpu.concatenate %72, %77, %82, %87, %89, %94, %99, %104, %109 in 1 : vector<24x32xf32>, vector<24x32xf32>, vector<24x32xf32>, vector<24x32xf32>, vector<24x32xf32>, vector<24x32xf32>, vector<24x32xf32>, vector<24x32xf32>, vector<24x32xf32> -> vector<24x288xf32>
    %111 = arith.truncf %110 : vector<24x288xf32> to vector<24x288xbf16>
    %c0_22 = arith.constant 0 : index
    %c0_23 = arith.constant 0 : index
    %112 = vector.load %arg3[%c0_22, %c0_23] : memref<288x64xbf16, #tpu.memory_space<vmem>>, vector<288x64xbf16>
    %cst_24 = arith.constant dense<0.000000e+00> : vector<24x64xf32>
    %113 = tpu.matmul %111, %112, %cst_24 {dimension_numbers = #tpu.dot_dimension_numbers<[1], [0], [0], [1], [0, 0, 1, 1], [], []>} : vector<24x288xbf16>, vector<288x64xbf16>, vector<24x64xf32> -> vector<24x64xf32>
    %114 = vector.broadcast %67 : vector<1x64xf32> to vector<24x64xf32>
    %115 = arith.addf %113, %114 : vector<24x64xf32>
    %cst_25 = arith.constant 0.000000e+00 : f32
    %116 = vector.broadcast %cst_25 : f32 to vector<24x64xf32>
    %117 = arith.maximumf %115, %116 : vector<24x64xf32>
    %c4_26 = arith.constant 4 : index
    %c0_27 = arith.constant 0 : index
    %118 = vector.load %arg1[%c4_26, %c0_27] : memref<32x256xf32, #tpu.memory_space<vmem>>, vector<1x128xf32>
    %119 = vector.extract_strided_slice %117 {offsets = [16, 0], sizes = [8, 64], strides = [1, 1]} : vector<24x64xf32> to vector<8x64xf32>
    %120 = vector.extract_strided_slice %117 {offsets = [0, 0], sizes = [16, 64], strides = [1, 1]} : vector<24x64xf32> to vector<16x64xf32>
    %121 = tpu.concatenate %119, %120 in 0 : vector<8x64xf32>, vector<16x64xf32> -> vector<24x64xf32>
    %122 = vector.broadcast %0 : vector<24x1xf32> to vector<24x64xf32>
    %123 = arith.mulf %122, %121 : vector<24x64xf32>
    %124 = vector.extract_strided_slice %117 {offsets = [18, 0], sizes = [6, 64], strides = [1, 1]} : vector<24x64xf32> to vector<6x64xf32>
    %125 = vector.extract_strided_slice %117 {offsets = [0, 0], sizes = [18, 64], strides = [1, 1]} : vector<24x64xf32> to vector<18x64xf32>
    %126 = tpu.concatenate %124, %125 in 0 : vector<6x64xf32>, vector<18x64xf32> -> vector<24x64xf32>
    %127 = vector.broadcast %1 : vector<24x1xf32> to vector<24x64xf32>
    %128 = arith.mulf %127, %126 : vector<24x64xf32>
    %129 = vector.extract_strided_slice %117 {offsets = [20, 0], sizes = [4, 64], strides = [1, 1]} : vector<24x64xf32> to vector<4x64xf32>
    %130 = vector.extract_strided_slice %117 {offsets = [0, 0], sizes = [20, 64], strides = [1, 1]} : vector<24x64xf32> to vector<20x64xf32>
    %131 = tpu.concatenate %129, %130 in 0 : vector<4x64xf32>, vector<20x64xf32> -> vector<24x64xf32>
    %132 = vector.broadcast %2 : vector<24x1xf32> to vector<24x64xf32>
    %133 = arith.mulf %132, %131 : vector<24x64xf32>
    %134 = vector.extract_strided_slice %117 {offsets = [22, 0], sizes = [2, 64], strides = [1, 1]} : vector<24x64xf32> to vector<2x64xf32>
    %135 = vector.extract_strided_slice %117 {offsets = [0, 0], sizes = [22, 64], strides = [1, 1]} : vector<24x64xf32> to vector<22x64xf32>
    %136 = tpu.concatenate %134, %135 in 0 : vector<2x64xf32>, vector<22x64xf32> -> vector<24x64xf32>
    %137 = vector.broadcast %3 : vector<24x1xf32> to vector<24x64xf32>
    %138 = arith.mulf %137, %136 : vector<24x64xf32>
    %139 = vector.broadcast %4 : vector<24x1xf32> to vector<24x64xf32>
    %140 = arith.mulf %139, %117 : vector<24x64xf32>
    %141 = vector.extract_strided_slice %117 {offsets = [2, 0], sizes = [22, 64], strides = [1, 1]} : vector<24x64xf32> to vector<22x64xf32>
    %142 = vector.extract_strided_slice %117 {offsets = [0, 0], sizes = [2, 64], strides = [1, 1]} : vector<24x64xf32> to vector<2x64xf32>
    %143 = tpu.concatenate %141, %142 in 0 : vector<22x64xf32>, vector<2x64xf32> -> vector<24x64xf32>
    %144 = vector.broadcast %5 : vector<24x1xf32> to vector<24x64xf32>
    %145 = arith.mulf %144, %143 : vector<24x64xf32>
    %146 = vector.extract_strided_slice %117 {offsets = [4, 0], sizes = [20, 64], strides = [1, 1]} : vector<24x64xf32> to vector<20x64xf32>
    %147 = vector.extract_strided_slice %117 {offsets = [0, 0], sizes = [4, 64], strides = [1, 1]} : vector<24x64xf32> to vector<4x64xf32>
    %148 = tpu.concatenate %146, %147 in 0 : vector<20x64xf32>, vector<4x64xf32> -> vector<24x64xf32>
    %149 = vector.broadcast %6 : vector<24x1xf32> to vector<24x64xf32>
    %150 = arith.mulf %149, %148 : vector<24x64xf32>
    %151 = vector.extract_strided_slice %117 {offsets = [6, 0], sizes = [18, 64], strides = [1, 1]} : vector<24x64xf32> to vector<18x64xf32>
    %152 = vector.extract_strided_slice %117 {offsets = [0, 0], sizes = [6, 64], strides = [1, 1]} : vector<24x64xf32> to vector<6x64xf32>
    %153 = tpu.concatenate %151, %152 in 0 : vector<18x64xf32>, vector<6x64xf32> -> vector<24x64xf32>
    %154 = vector.broadcast %7 : vector<24x1xf32> to vector<24x64xf32>
    %155 = arith.mulf %154, %153 : vector<24x64xf32>
    %156 = vector.extract_strided_slice %117 {offsets = [8, 0], sizes = [16, 64], strides = [1, 1]} : vector<24x64xf32> to vector<16x64xf32>
    %157 = vector.extract_strided_slice %117 {offsets = [0, 0], sizes = [8, 64], strides = [1, 1]} : vector<24x64xf32> to vector<8x64xf32>
    %158 = tpu.concatenate %156, %157 in 0 : vector<16x64xf32>, vector<8x64xf32> -> vector<24x64xf32>
    %159 = vector.broadcast %8 : vector<24x1xf32> to vector<24x64xf32>
    %160 = arith.mulf %159, %158 : vector<24x64xf32>
    %161 = tpu.concatenate %123, %128, %133, %138, %140, %145, %150, %155, %160 in 1 : vector<24x64xf32>, vector<24x64xf32>, vector<24x64xf32>, vector<24x64xf32>, vector<24x64xf32>, vector<24x64xf32>, vector<24x64xf32>, vector<24x64xf32>, vector<24x64xf32> -> vector<24x576xf32>
    %162 = arith.truncf %161 : vector<24x576xf32> to vector<24x576xbf16>
    %c0_28 = arith.constant 0 : index
    %c0_29 = arith.constant 0 : index
    %163 = vector.load %arg4[%c0_28, %c0_29] : memref<576x128xbf16, #tpu.memory_space<vmem>>, vector<576x128xbf16>
    %cst_30 = arith.constant dense<0.000000e+00> : vector<24x128xf32>
    %164 = tpu.matmul %162, %163, %cst_30 {dimension_numbers = #tpu.dot_dimension_numbers<[1], [0], [0], [1], [0, 0, 1, 1], [], []>} : vector<24x576xbf16>, vector<576x128xbf16>, vector<24x128xf32> -> vector<24x128xf32>
    %165 = vector.broadcast %118 : vector<1x128xf32> to vector<24x128xf32>
    %166 = arith.addf %164, %165 : vector<24x128xf32>
    %cst_31 = arith.constant 0.000000e+00 : f32
    %167 = vector.broadcast %cst_31 : f32 to vector<24x128xf32>
    %168 = arith.maximumf %166, %167 : vector<24x128xf32>
    %c5_32 = arith.constant 5 : index
    %c0_33 = arith.constant 0 : index
    %169 = vector.load %arg1[%c5_32, %c0_33] : memref<32x256xf32, #tpu.memory_space<vmem>>, vector<1x256xf32>
    %170 = vector.extract_strided_slice %168 {offsets = [16, 0], sizes = [8, 128], strides = [1, 1]} : vector<24x128xf32> to vector<8x128xf32>
    %171 = vector.extract_strided_slice %168 {offsets = [0, 0], sizes = [16, 128], strides = [1, 1]} : vector<24x128xf32> to vector<16x128xf32>
    %172 = tpu.concatenate %170, %171 in 0 : vector<8x128xf32>, vector<16x128xf32> -> vector<24x128xf32>
    %173 = vector.broadcast %0 : vector<24x1xf32> to vector<24x128xf32>
    %174 = arith.mulf %173, %172 : vector<24x128xf32>
    %175 = vector.extract_strided_slice %168 {offsets = [18, 0], sizes = [6, 128], strides = [1, 1]} : vector<24x128xf32> to vector<6x128xf32>
    %176 = vector.extract_strided_slice %168 {offsets = [0, 0], sizes = [18, 128], strides = [1, 1]} : vector<24x128xf32> to vector<18x128xf32>
    %177 = tpu.concatenate %175, %176 in 0 : vector<6x128xf32>, vector<18x128xf32> -> vector<24x128xf32>
    %178 = vector.broadcast %1 : vector<24x1xf32> to vector<24x128xf32>
    %179 = arith.mulf %178, %177 : vector<24x128xf32>
    %180 = vector.extract_strided_slice %168 {offsets = [20, 0], sizes = [4, 128], strides = [1, 1]} : vector<24x128xf32> to vector<4x128xf32>
    %181 = vector.extract_strided_slice %168 {offsets = [0, 0], sizes = [20, 128], strides = [1, 1]} : vector<24x128xf32> to vector<20x128xf32>
    %182 = tpu.concatenate %180, %181 in 0 : vector<4x128xf32>, vector<20x128xf32> -> vector<24x128xf32>
    %183 = vector.broadcast %2 : vector<24x1xf32> to vector<24x128xf32>
    %184 = arith.mulf %183, %182 : vector<24x128xf32>
    %185 = vector.extract_strided_slice %168 {offsets = [22, 0], sizes = [2, 128], strides = [1, 1]} : vector<24x128xf32> to vector<2x128xf32>
    %186 = vector.extract_strided_slice %168 {offsets = [0, 0], sizes = [22, 128], strides = [1, 1]} : vector<24x128xf32> to vector<22x128xf32>
    %187 = tpu.concatenate %185, %186 in 0 : vector<2x128xf32>, vector<22x128xf32> -> vector<24x128xf32>
    %188 = vector.broadcast %3 : vector<24x1xf32> to vector<24x128xf32>
    %189 = arith.mulf %188, %187 : vector<24x128xf32>
    %190 = vector.broadcast %4 : vector<24x1xf32> to vector<24x128xf32>
    %191 = arith.mulf %190, %168 : vector<24x128xf32>
    %192 = vector.extract_strided_slice %168 {offsets = [2, 0], sizes = [22, 128], strides = [1, 1]} : vector<24x128xf32> to vector<22x128xf32>
    %193 = vector.extract_strided_slice %168 {offsets = [0, 0], sizes = [2, 128], strides = [1, 1]} : vector<24x128xf32> to vector<2x128xf32>
    %194 = tpu.concatenate %192, %193 in 0 : vector<22x128xf32>, vector<2x128xf32> -> vector<24x128xf32>
    %195 = vector.broadcast %5 : vector<24x1xf32> to vector<24x128xf32>
    %196 = arith.mulf %195, %194 : vector<24x128xf32>
    %197 = vector.extract_strided_slice %168 {offsets = [4, 0], sizes = [20, 128], strides = [1, 1]} : vector<24x128xf32> to vector<20x128xf32>
    %198 = vector.extract_strided_slice %168 {offsets = [0, 0], sizes = [4, 128], strides = [1, 1]} : vector<24x128xf32> to vector<4x128xf32>
    %199 = tpu.concatenate %197, %198 in 0 : vector<20x128xf32>, vector<4x128xf32> -> vector<24x128xf32>
    %200 = vector.broadcast %6 : vector<24x1xf32> to vector<24x128xf32>
    %201 = arith.mulf %200, %199 : vector<24x128xf32>
    %202 = vector.extract_strided_slice %168 {offsets = [6, 0], sizes = [18, 128], strides = [1, 1]} : vector<24x128xf32> to vector<18x128xf32>
    %203 = vector.extract_strided_slice %168 {offsets = [0, 0], sizes = [6, 128], strides = [1, 1]} : vector<24x128xf32> to vector<6x128xf32>
    %204 = tpu.concatenate %202, %203 in 0 : vector<18x128xf32>, vector<6x128xf32> -> vector<24x128xf32>
    %205 = vector.broadcast %7 : vector<24x1xf32> to vector<24x128xf32>
    %206 = arith.mulf %205, %204 : vector<24x128xf32>
    %207 = vector.extract_strided_slice %168 {offsets = [8, 0], sizes = [16, 128], strides = [1, 1]} : vector<24x128xf32> to vector<16x128xf32>
    %208 = vector.extract_strided_slice %168 {offsets = [0, 0], sizes = [8, 128], strides = [1, 1]} : vector<24x128xf32> to vector<8x128xf32>
    %209 = tpu.concatenate %207, %208 in 0 : vector<16x128xf32>, vector<8x128xf32> -> vector<24x128xf32>
    %210 = vector.broadcast %8 : vector<24x1xf32> to vector<24x128xf32>
    %211 = arith.mulf %210, %209 : vector<24x128xf32>
    %212 = tpu.concatenate %174, %179, %184, %189, %191, %196, %201, %206, %211 in 1 : vector<24x128xf32>, vector<24x128xf32>, vector<24x128xf32>, vector<24x128xf32>, vector<24x128xf32>, vector<24x128xf32>, vector<24x128xf32>, vector<24x128xf32>, vector<24x128xf32> -> vector<24x1152xf32>
    %213 = arith.truncf %212 : vector<24x1152xf32> to vector<24x1152xbf16>
    %c0_34 = arith.constant 0 : index
    %c0_35 = arith.constant 0 : index
    %214 = vector.load %arg5[%c0_34, %c0_35] : memref<1152x256xbf16, #tpu.memory_space<vmem>>, vector<1152x256xbf16>
    %cst_36 = arith.constant dense<0.000000e+00> : vector<24x256xf32>
    %215 = tpu.matmul %213, %214, %cst_36 {dimension_numbers = #tpu.dot_dimension_numbers<[1], [0], [0], [1], [0, 0, 1, 1], [], []>} : vector<24x1152xbf16>, vector<1152x256xbf16>, vector<24x256xf32> -> vector<24x256xf32>
    %216 = vector.broadcast %169 : vector<1x256xf32> to vector<24x256xf32>
    %217 = arith.addf %215, %216 : vector<24x256xf32>
    %cst_37 = arith.constant 0.000000e+00 : f32
    %218 = vector.broadcast %cst_37 : f32 to vector<24x256xf32>
    %219 = arith.maximumf %217, %218 : vector<24x256xf32>
    %220 = vector.extract_strided_slice %219 {offsets = [0, 0], sizes = [2, 256], strides = [1, 1]} : vector<24x256xf32> to vector<2x256xf32>
    %221 = vector.extract_strided_slice %219 {offsets = [2, 0], sizes = [2, 256], strides = [1, 1]} : vector<24x256xf32> to vector<2x256xf32>
    %222 = vector.extract_strided_slice %219 {offsets = [4, 0], sizes = [2, 256], strides = [1, 1]} : vector<24x256xf32> to vector<2x256xf32>
    %223 = vector.extract_strided_slice %219 {offsets = [6, 0], sizes = [2, 256], strides = [1, 1]} : vector<24x256xf32> to vector<2x256xf32>
    %224 = vector.extract_strided_slice %219 {offsets = [8, 0], sizes = [2, 256], strides = [1, 1]} : vector<24x256xf32> to vector<2x256xf32>
    %225 = vector.extract_strided_slice %219 {offsets = [10, 0], sizes = [2, 256], strides = [1, 1]} : vector<24x256xf32> to vector<2x256xf32>
    %226 = vector.extract_strided_slice %219 {offsets = [12, 0], sizes = [2, 256], strides = [1, 1]} : vector<24x256xf32> to vector<2x256xf32>
    %227 = vector.extract_strided_slice %219 {offsets = [14, 0], sizes = [2, 256], strides = [1, 1]} : vector<24x256xf32> to vector<2x256xf32>
    %228 = vector.extract_strided_slice %219 {offsets = [16, 0], sizes = [2, 256], strides = [1, 1]} : vector<24x256xf32> to vector<2x256xf32>
    %229 = tpu.concatenate %220, %221, %222, %223, %224, %225, %226, %227, %228 in 1 : vector<2x256xf32>, vector<2x256xf32>, vector<2x256xf32>, vector<2x256xf32>, vector<2x256xf32>, vector<2x256xf32>, vector<2x256xf32>, vector<2x256xf32>, vector<2x256xf32> -> vector<2x2304xf32>
    %230 = arith.truncf %229 : vector<2x2304xf32> to vector<2x2304xbf16>
    %c0_38 = arith.constant 0 : index
    %c0_39 = arith.constant 0 : index
    %231 = vector.load %arg6[%c0_38, %c0_39] : memref<2304x256xbf16, #tpu.memory_space<vmem>>, vector<2304x256xbf16>
    %cst_40 = arith.constant dense<0.000000e+00> : vector<2x256xf32>
    %232 = tpu.matmul %230, %231, %cst_40 {dimension_numbers = #tpu.dot_dimension_numbers<[1], [0], [0], [1], [0, 0, 1, 1], [], []>} : vector<2x2304xbf16>, vector<2304x256xbf16>, vector<2x256xf32> -> vector<2x256xf32>
    %c6_41 = arith.constant 6 : index
    %c0_42 = arith.constant 0 : index
    %233 = vector.load %arg1[%c6_41, %c0_42] : memref<32x256xf32, #tpu.memory_space<vmem>>, vector<1x256xf32>
    %234 = vector.broadcast %233 : vector<1x256xf32> to vector<2x256xf32>
    %235 = arith.addf %232, %234 : vector<2x256xf32>
    %cst_43 = arith.constant 0.000000e+00 : f32
    %236 = vector.broadcast %cst_43 : f32 to vector<2x256xf32>
    %237 = arith.maximumf %235, %236 : vector<2x256xf32>
    %238 = arith.truncf %237 : vector<2x256xf32> to vector<2x256xbf16>
    %c0_44 = arith.constant 0 : index
    %c0_45 = arith.constant 0 : index
    %239 = vector.load %arg7[%c0_44, %c0_45] : memref<256x128xbf16, #tpu.memory_space<vmem>>, vector<256x128xbf16>
    %cst_46 = arith.constant dense<0.000000e+00> : vector<2x128xf32>
    %240 = tpu.matmul %238, %239, %cst_46 {dimension_numbers = #tpu.dot_dimension_numbers<[1], [0], [0], [1], [0, 0, 1, 1], [], []>} : vector<2x256xbf16>, vector<256x128xbf16>, vector<2x128xf32> -> vector<2x128xf32>
    %c7_47 = arith.constant 7 : index
    %c0_48 = arith.constant 0 : index
    %241 = vector.load %arg1[%c7_47, %c0_48] : memref<32x256xf32, #tpu.memory_space<vmem>>, vector<1x128xf32>
    %242 = vector.broadcast %241 : vector<1x128xf32> to vector<2x128xf32>
    %243 = arith.addf %240, %242 : vector<2x128xf32>
    %c0_49 = arith.constant 0 : index
    %c0_50 = arith.constant 0 : index
    %244 = vector.load %arg8[%c0_49, %c0_50] : memref<2x128xf32, #tpu.memory_space<vmem>>, vector<2x128xf32>
    tpu.vector_store %arg8[%c0_49, %c0_50], %243 {strides = array<i32>} : memref<2x128xf32, #tpu.memory_space<vmem>>, vector<2x128xf32>,
    return
  }
}

</mosaic_0001>

<llo_original>
// kernel: qnetwork2dconv_forward.1
$region0: #{qnetwork2dconv_forward.1}
  #allocation0 [shape = 'u32[]', space=smem, size = 0x4, offset = 0x4, fixed_abs, tag = 'smem constant byte address 0x4 - core index']
  #allocation1 [shape = 'u32[144,128]{1,0:T(1,128)}', space=vmem, size = 0x12000, scoped, tag = 'internal scratch']
  %s0 = inlined_call_operand.vmem [shape: f32[24,6], index: 0, kind: input, shape index: {}]
  %s1 = inlined_call_operand.hbm [shape: f32[32,256], index: 1, kind: input, shape index: {}]
  %s2 = inlined_call_operand.vmem [shape: bf16[54,32], index: 2, kind: input, shape index: {}]
  %s3 = inlined_call_operand.vmem [shape: bf16[288,64], index: 3, kind: input, shape index: {}]
  %s4 = inlined_call_operand.hbm [shape: bf16[576,128], index: 4, kind: input, shape index: {}]
  %s5 = inlined_call_operand.hbm [shape: bf16[1152,256], index: 5, kind: input, shape index: {}]
  %s6 = inlined_call_operand.hbm [shape: bf16[2304,256], index: 6, kind: input, shape index: {}]
  %s7 = inlined_call_operand.hbm [shape: bf16[256,128], index: 7, kind: input, shape index: {}]
  %s8 = inlined_call_operand.hbm [shape: f32[2,128], index: 8, kind: output, shape index: {}]
  %s9 = sld [smem:[#allocation0]]
  $region62: #{qnetwork2dconv_forward.1} parent=0
    _
  %s11 = ssub.s32 1, %s9
  %s12 = scalar_select 0, %s11, %s9
  $region1: #{qnetwork2dconv_forward.1} parent=0
    #allocation2 [shape = 'u8[32768]{0}', space=vmem, size = 0x8000, scoped, tag = 'input window, operand 1, single buffered']
    #allocation3 [shape = 's32[1]{0}', space=sflag, size = 0x4, scoped, tag = 'scoped memory for qnetwork2dconv_forward.1']
    #allocation4 [shape = 's32[1]{0}', space=sflag, size = 0x4, scoped, tag = 'scoped memory for qnetwork2dconv_forward.1']
    #allocation5 [shape = 'u8[147456]{0}', space=vmem, size = 0x24000, scoped, tag = 'input window, operand 4, single buffered']
    #allocation6 [shape = 's32[1]{0}', space=sflag, size = 0x4, scoped, tag = 'scoped memory for qnetwork2dconv_forward.1']
    #allocation7 [shape = 'u8[589824]{0}', space=vmem, size = 0x90000, scoped, tag = 'input window, operand 5, single buffered']
    #allocation8 [shape = 'u8[1179648]{0}', space=vmem, size = 0x120000, scoped, tag = 'input window, operand 6, single buffered']
    #allocation9 [shape = 's32[1]{0}', space=sflag, size = 0x4, scoped, tag = 'scoped memory for qnetwork2dconv_forward.1']
    #allocation10 [shape = 'u8[65536]{0}', space=vmem, size = 0x10000, scoped, tag = 'input window, operand 7, single buffered']
    #allocation11 [shape = 'u8[1024]{0}', space=vmem, size = 0x400, scoped, tag = 'output window, operand 0, single buffered']
    %13 = vsyncpa [#allocation3], 0
    %14 = vsyncpa [#allocation6], 0
    %15 = vsyncpa [#allocation9], 0
    %16 = vsyncpa [#allocation4], 0
    // Predicated region
    $region2: #{qnetwork2dconv_forward.1} parent=1 // pred_check
      _
    $region3: #{qnetwork2dconv_forward.1} parent=1 // pred_check_branch
      %18 = sbr.rel (0) target = $region5
    $region4: #{qnetwork2dconv_forward.1} parent=1 // pred_region
      _
    $region5: #{qnetwork2dconv_forward.1} parent=1 // pred_fallthru
      _
    // Predicated region
    $region6: #{qnetwork2dconv_forward.1} parent=1 // pred_check
      _
    $region7: #{qnetwork2dconv_forward.1} parent=1 // pred_check_branch
      %20 = sbr.rel (0) target = $region9
    $region8: #{qnetwork2dconv_forward.1} parent=1 // pred_region
      %s22 = ssub.s32 1024, 1024
      %23 = vsyncadd [#allocation3], %s22
      %s24 = sshll.u32 [#allocation2], 4
      %s25 = int_to_ptr.vmem [resolvable:$true] %s24
      %30 = dma.hbm_to_vmem [thread:$0]  %s1, 1024, %s25, [#allocation3], 256, 256, 16
    $region9: #{qnetwork2dconv_forward.1} parent=1 // pred_fallthru
      _
    // Predicated region
    $region10: #{qnetwork2dconv_forward.1} parent=1 // pred_check
      _
    $region11: #{qnetwork2dconv_forward.1} parent=1 // pred_check_branch
      %32 = sbr.rel (0) target = $region13
    $region12: #{qnetwork2dconv_forward.1} parent=1 // pred_region
      _
    $region13: #{qnetwork2dconv_forward.1} parent=1 // pred_fallthru
      _
    // Predicated region
    $region14: #{qnetwork2dconv_forward.1} parent=1 // pred_check
      _
    $region15: #{qnetwork2dconv_forward.1} parent=1 // pred_check_branch
      %34 = sbr.rel (0) target = $region17
    $region16: #{qnetwork2dconv_forward.1} parent=1 // pred_region
      _
    $region17: #{qnetwork2dconv_forward.1} parent=1 // pred_fallthru
      _
    // Predicated region
    $region18: #{qnetwork2dconv_forward.1} parent=1 // pred_check
      _
    $region19: #{qnetwork2dconv_forward.1} parent=1 // pred_check_branch
      %36 = sbr.rel (0) target = $region21
    $region20: #{qnetwork2dconv_forward.1} parent=1 // pred_region
      %s38 = ssub.s32 4608, 4608
      %39 = vsyncadd [#allocation6], %s38
      %s40 = sshll.u32 [#allocation5], 4
      %s41 = int_to_ptr.vmem [resolvable:$true] %s40
      %46 = dma.hbm_to_vmem [thread:$0]  %s4, 4608, %s41, [#allocation6], 64, 64, 4
    $region21: #{qnetwork2dconv_forward.1} parent=1 // pred_fallthru
      _
    // Predicated region
    $region22: #{qnetwork2dconv_forward.1} parent=1 // pred_check
      _
    $region23: #{qnetwork2dconv_forward.1} parent=1 // pred_check_branch
      %48 = sbr.rel (0) target = $region25
    $region24: #{qnetwork2dconv_forward.1} parent=1 // pred_region
      %s50 = ssub.s32 18432, 18432
      %51 = vsyncadd [#allocation6], %s50
      %s52 = sshll.u32 [#allocation7], 4
      %s53 = int_to_ptr.vmem [resolvable:$true] %s52
      %58 = dma.hbm_to_vmem [thread:$0]  %s5, 18432, %s53, [#allocation6], 128, 128, 8
    $region25: #{qnetwork2dconv_forward.1} parent=1 // pred_fallthru
      _
    // Predicated region
    $region26: #{qnetwork2dconv_forward.1} parent=1 // pred_check
      _
    $region27: #{qnetwork2dconv_forward.1} parent=1 // pred_check_branch
      %60 = sbr.rel (0) target = $region29
    $region28: #{qnetwork2dconv_forward.1} parent=1 // pred_region
      %s62 = ssub.s32 36864, 36864
      %63 = vsyncadd [#allocation9], %s62
      %s64 = sshll.u32 [#allocation8], 4
      %s65 = int_to_ptr.vmem [resolvable:$true] %s64
      %70 = dma.hbm_to_vmem [thread:$0]  %s6, 36864, %s65, [#allocation9], 128, 128, 8
    $region29: #{qnetwork2dconv_forward.1} parent=1 // pred_fallthru
      _
    // Predicated region
    $region30: #{qnetwork2dconv_forward.1} parent=1 // pred_check
      _
    $region31: #{qnetwork2dconv_forward.1} parent=1 // pred_check_branch
      %72 = sbr.rel (0) target = $region33
    $region32: #{qnetwork2dconv_forward.1} parent=1 // pred_region
      %s74 = ssub.s32 2048, 2048
      %75 = vsyncadd [#allocation9], %s74
      %s76 = sshll.u32 [#allocation10], 4
      %s77 = int_to_ptr.vmem [resolvable:$true] %s76
      %82 = dma.hbm_to_vmem [thread:$0]  %s7, 2048, %s77, [#allocation9], 64, 64, 4
    $region33: #{qnetwork2dconv_forward.1} parent=1 // pred_fallthru
      _
    // Predicated region
    $region34: #{qnetwork2dconv_forward.1} parent=1 // pred_check
      _
    $region35: #{qnetwork2dconv_forward.1} parent=1 // pred_check_branch
      %84 = sbr.rel (0) target = $region37
    $region36: #{qnetwork2dconv_forward.1} parent=1 // pred_region
      %85 = dma.done [#allocation3], 1024
    $region37: #{qnetwork2dconv_forward.1} parent=1 // pred_fallthru
      _
    // Predicated region
    $region38: #{qnetwork2dconv_forward.1} parent=1 // pred_check
      _
    $region39: #{qnetwork2dconv_forward.1} parent=1 // pred_check_branch
      %87 = sbr.rel (0) target = $region41
    $region40: #{qnetwork2dconv_forward.1} parent=1 // pred_region
      %88 = dma.done [#allocation6], 4608
    $region41: #{qnetwork2dconv_forward.1} parent=1 // pred_fallthru
      _
    // Predicated region
    $region42: #{qnetwork2dconv_forward.1} parent=1 // pred_check
      _
    $region43: #{qnetwork2dconv_forward.1} parent=1 // pred_check_branch
      %90 = sbr.rel (0) target = $region45
    $region44: #{qnetwork2dconv_forward.1} parent=1 // pred_region
      %91 = dma.done [#allocation6], 18432
    $region45: #{qnetwork2dconv_forward.1} parent=1 // pred_fallthru
      _
    // Predicated region
    $region46: #{qnetwork2dconv_forward.1} parent=1 // pred_check
      _
    $region47: #{qnetwork2dconv_forward.1} parent=1 // pred_check_branch
      %93 = sbr.rel (0) target = $region49
    $region48: #{qnetwork2dconv_forward.1} parent=1 // pred_region
      %94 = dma.done [#allocation9], 36864
    $region49: #{qnetwork2dconv_forward.1} parent=1 // pred_fallthru
      _
    // Predicated region
    $region50: #{qnetwork2dconv_forward.1} parent=1 // pred_check
      _
    $region51: #{qnetwork2dconv_forward.1} parent=1 // pred_check_branch
      %96 = sbr.rel (0) target = $region53
    $region52: #{qnetwork2dconv_forward.1} parent=1 // pred_region
      %97 = dma.done [#allocation9], 2048
    $region53: #{qnetwork2dconv_forward.1} parent=1 // pred_fallthru
      _
    %v99 = vld [vmem:[#allocation2 + $0x10] sm:$0xff]
    %v100 = vld [vmem:[#allocation2 + $0x20] sm:$0xff]
    %v101 = vld [vmem:[#allocation2 + $0x30] sm:$0xff]
    %v102 = vld [vmem:[%s0] sm:$0xff]
    %v103 = vld [vmem:[%s0 + $0x8] sm:$0xff]
    %v104 = vld [vmem:[%s0 + $0x10] sm:$0xff]
    %v105 = vld [vmem:[#allocation2] ss:$0 sm:$0xff]
    %v106 = vmul.f32 %v102, %v105
    %v107 = vmul.f32 %v103, %v105
    %v108 = vmul.f32 %v104, %v105
    %v109 = vld [vmem:[#allocation2 + $0x1] ss:$0 sm:$0xff]
    %v110 = vadd.f32 %v106, %v109
    %v111 = vadd.f32 %v107, %v109
    %v112 = vadd.f32 %v108, %v109
    %v113 = vld [vmem:[#allocation2 + $0x2] ss:$0 sm:$0xff]
    %115 = vset.pattern.permute.xlu0 0
    %116 = vperm.xlu0 %115, %v99
    %v117 = vpop.permute.xlu0 %116
    %120 = vset.pattern.permute.xlu0 0
    %121 = vperm.xlu0 %120, %v100
    %v122 = vpop.permute.xlu0 %121
    %125 = vset.pattern.permute.xlu0 0
    %126 = vperm.xlu0 %125, %v101
    %v127 = vpop.permute.xlu0 %126
    %v129 = vmul.f32 %v117, %v112
    %v130 = vmul.f32 %v122, %v110
    %v131 = vmul.f32 %v127, %v111
    %v133 = vrot.slane %v112, 2
    %vm137 = vcmask 1045504
    %v138 = vrot.slane %v110, 2
    %v139 = vrot.slane %v111, 2
    %v140 = vsel %vm137, %v138, %v139
    %v141 = vsel %vm137, %v139, %v133
    %v145 = vsel %vm137, %v133, %v138
    %146 = vset.pattern.permute.xlu0 1
    %147 = vperm.xlu0 %146, %v99
    %v148 = vpop.permute.xlu0 %147
    %150 = vset.pattern.permute.xlu0 1
    %151 = vperm.xlu0 %150, %v100
    %v152 = vpop.permute.xlu0 %151
    %154 = vset.pattern.permute.xlu0 1
    %155 = vperm.xlu0 %154, %v101
    %v156 = vpop.permute.xlu0 %155
    %v158 = vmul.f32 %v148, %v145
    %v159 = vmul.f32 %v152, %v140
    %v160 = vmul.f32 %v156, %v141
    %v161 = vrot.slane %v112, 4
    %vm163 = vcmask 1043456
    %v164 = vrot.slane %v110, 4
    %v165 = vrot.slane %v111, 4
    %v166 = vsel %vm163, %v164, %v165
    %v167 = vsel %vm163, %v165, %v161
    %v171 = vsel %vm163, %v161, %v164
    %172 = vset.pattern.permute.xlu0 2
    %173 = vperm.xlu0 %172, %v99
    %v174 = vpop.permute.xlu0 %173
    %176 = vset.pattern.permute.xlu0 2
    %177 = vperm.xlu0 %176, %v100
    %v178 = vpop.permute.xlu0 %177
    %180 = vset.pattern.permute.xlu0 2
    %181 = vperm.xlu0 %180, %v101
    %v182 = vpop.permute.xlu0 %181
    %v184 = vmul.f32 %v174, %v171
    %v185 = vmul.f32 %v178, %v166
    %v186 = vmul.f32 %v182, %v167
    %v187 = vrot.slane %v112, 6
    %vm189 = vcmask 1041408
    %v190 = vrot.slane %v110, 6
    %v191 = vrot.slane %v111, 6
    %v192 = vsel %vm189, %v190, %v191
    %v193 = vsel %vm189, %v191, %v187
    %v197 = vsel %vm189, %v187, %v190
    %198 = vset.pattern.permute.xlu0 3
    %199 = vperm.xlu0 %198, %v99
    %v200 = vpop.permute.xlu0 %199
    %202 = vset.pattern.permute.xlu0 3
    %203 = vperm.xlu0 %202, %v100
    %v204 = vpop.permute.xlu0 %203
    %206 = vset.pattern.permute.xlu0 3
    %207 = vperm.xlu0 %206, %v101
    %v208 = vpop.permute.xlu0 %207
    %v210 = vmul.f32 %v200, %v197
    %v211 = vmul.f32 %v204, %v192
    %v212 = vmul.f32 %v208, %v193
    %213 = vset.pattern.permute.xlu0 4
    %214 = vperm.xlu0 %213, %v99
    %v215 = vpop.permute.xlu0 %214
    %217 = vset.pattern.permute.xlu0 4
    %218 = vperm.xlu0 %217, %v100
    %v219 = vpop.permute.xlu0 %218
    %221 = vset.pattern.permute.xlu0 4
    %222 = vperm.xlu0 %221, %v101
    %v223 = vpop.permute.xlu0 %222
    %v225 = vmul.f32 %v215, %v110
    %v226 = vmul.f32 %v219, %v111
    %v227 = vmul.f32 %v223, %v112
    %228 = vset.pattern.permute.xlu0 5
    %229 = vperm.xlu0 %228, %v99
    %v230 = vpop.permute.xlu0 %229
    %232 = vset.pattern.permute.xlu0 5
    %233 = vperm.xlu0 %232, %v100
    %v234 = vpop.permute.xlu0 %233
    %236 = vset.pattern.permute.xlu0 5
    %237 = vperm.xlu0 %236, %v101
    %v238 = vpop.permute.xlu0 %237
    %v240 = vmul.f32 %v230, %v140
    %v241 = vmul.f32 %v234, %v141
    %v242 = vmul.f32 %v238, %v145
    %243 = vset.pattern.permute.xlu0 6
    %244 = vperm.xlu0 %243, %v99
    %v245 = vpop.permute.xlu0 %244
    %247 = vset.pattern.permute.xlu0 6
    %248 = vperm.xlu0 %247, %v100
    %v249 = vpop.permute.xlu0 %248
    %251 = vset.pattern.permute.xlu0 6
    %252 = vperm.xlu0 %251, %v101
    %v253 = vpop.permute.xlu0 %252
    %v255 = vmul.f32 %v245, %v166
    %v256 = vmul.f32 %v249, %v167
    %v257 = vmul.f32 %v253, %v171
    %258 = vset.pattern.permute.xlu0 7
    %259 = vperm.xlu0 %258, %v99
    %v260 = vpop.permute.xlu0 %259
    %262 = vset.pattern.permute.xlu0 7
    %263 = vperm.xlu0 %262, %v100
    %v264 = vpop.permute.xlu0 %263
    %266 = vset.pattern.permute.xlu0 7
    %267 = vperm.xlu0 %266, %v101
    %v268 = vpop.permute.xlu0 %267
    %v270 = vmul.f32 %v260, %v192
    %v271 = vmul.f32 %v264, %v193
    %v272 = vmul.f32 %v268, %v197
    %273 = vset.pattern.permute.xlu0 8
    %274 = vperm.xlu0 %273, %v99
    %v275 = vpop.permute.xlu0 %274
    %277 = vset.pattern.permute.xlu0 8
    %278 = vperm.xlu0 %277, %v100
    %v279 = vpop.permute.xlu0 %278
    %281 = vset.pattern.permute.xlu0 8
    %282 = vperm.xlu0 %281, %v101
    %v283 = vpop.permute.xlu0 %282
    %v285 = vmul.f32 %v275, %v111
    %v286 = vmul.f32 %v279, %v112
    %v287 = vmul.f32 %v283, %v110
    %291 = vrot.lane.b32.xlu0 %v158, 6
    %v292 = vpop.permute.xlu0 %291
    %293 = vrot.lane.b32.xlu0 %v159, 6
    %v294 = vpop.permute.xlu0 %293
    %295 = vrot.lane.b32.xlu0 %v160, 6
    %v296 = vpop.permute.xlu0 %295
    %303 = vrot.lane.b32.xlu0 %v184, 12
    %v304 = vpop.permute.xlu0 %303
    %305 = vrot.lane.b32.xlu0 %v185, 12
    %v306 = vpop.permute.xlu0 %305
    %307 = vrot.lane.b32.xlu0 %v186, 12
    %v308 = vpop.permute.xlu0 %307
    %315 = vrot.lane.b32.xlu0 %v210, 18
    %v316 = vpop.permute.xlu0 %315
    %317 = vrot.lane.b32.xlu0 %v211, 18
    %v318 = vpop.permute.xlu0 %317
    %319 = vrot.lane.b32.xlu0 %v212, 18
    %v320 = vpop.permute.xlu0 %319
    %327 = vrot.lane.b32.xlu0 %v225, 24
    %v328 = vpop.permute.xlu0 %327
    %329 = vrot.lane.b32.xlu0 %v226, 24
    %v330 = vpop.permute.xlu0 %329
    %331 = vrot.lane.b32.xlu0 %v227, 24
    %v332 = vpop.permute.xlu0 %331
    %339 = vrot.lane.b32.xlu0 %v240, 30
    %v340 = vpop.permute.xlu0 %339
    %341 = vrot.lane.b32.xlu0 %v241, 30
    %v342 = vpop.permute.xlu0 %341
    %343 = vrot.lane.b32.xlu0 %v242, 30
    %v344 = vpop.permute.xlu0 %343
    %351 = vrot.lane.b32.xlu0 %v255, 36
    %v352 = vpop.permute.xlu0 %351
    %353 = vrot.lane.b32.xlu0 %v256, 36
    %v354 = vpop.permute.xlu0 %353
    %355 = vrot.lane.b32.xlu0 %v257, 36
    %v356 = vpop.permute.xlu0 %355
    %363 = vrot.lane.b32.xlu0 %v270, 42
    %v364 = vpop.permute.xlu0 %363
    %365 = vrot.lane.b32.xlu0 %v271, 42
    %v366 = vpop.permute.xlu0 %365
    %367 = vrot.lane.b32.xlu0 %v272, 42
    %v368 = vpop.permute.xlu0 %367
    %375 = vrot.lane.b32.xlu0 %v285, 48
    %v376 = vpop.permute.xlu0 %375
    %377 = vrot.lane.b32.xlu0 %v286, 48
    %v378 = vpop.permute.xlu0 %377
    %379 = vrot.lane.b32.xlu0 %v287, 48
    %v380 = vpop.permute.xlu0 %379
    %vm384 = vcmask 48128
    %v385 = vsel %vm384, %v129, %v292
    %v386 = vsel %vm384, %v130, %v294
    %v387 = vsel %vm384, %v131, %v296
    %vm388 = vcmask 97280
    %v389 = vsel %vm388, %v385, %v304
    %v390 = vsel %vm388, %v386, %v306
    %v391 = vsel %vm388, %v387, %v308
    %vm392 = vcmask 146432
    %v393 = vsel %vm392, %v389, %v316
    %v394 = vsel %vm392, %v390, %v318
    %v395 = vsel %vm392, %v391, %v320
    %vm396 = vcmask 195584
    %v397 = vsel %vm396, %v393, %v328
    %v398 = vsel %vm396, %v394, %v330
    %v399 = vsel %vm396, %v395, %v332
    %vm400 = vcmask 244736
    %v401 = vsel %vm400, %v397, %v340
    %v402 = vsel %vm400, %v398, %v342
    %v403 = vsel %vm400, %v399, %v344
    %vm404 = vcmask 293888
    %v405 = vsel %vm404, %v401, %v352
    %v406 = vsel %vm404, %v402, %v354
    %v407 = vsel %vm404, %v403, %v356
    %vm408 = vcmask 343040
    %v409 = vsel %vm408, %v405, %v364
    %v410 = vsel %vm408, %v406, %v366
    %v411 = vsel %vm408, %v407, %v368
    %vm412 = vcmask 392192
    %v413 = vsel %vm412, %v409, %v376
    %v414 = vsel %vm412, %v410, %v378
    %v415 = vsel %vm412, %v411, %v380
    %v416 = vpack.c.bf16 %v414, %v413
    %v417 = vpack.c.bf16 %v415, %v415
    %v418 = vld [vmem:[%s2] sm:$0xf]
    %v419 = vld [vmem:[%s2 + $0x4] sm:$0xf]
    %v420 = vld [vmem:[%s2 + $0x8] sm:$0xf]
    %v421 = vld [vmem:[%s2 + $0xc] sm:$0xf]
    %v422 = vld [vmem:[%s2 + $0x10] sm:$0xf]
    %v423 = vld [vmem:[%s2 + $0x14] sm:$0xf]
    %v424 = vld [vmem:[%s2 + $0x18] sm:$0x7]
    %v432 = vunpack.c.l.b16 %v418
    %v433 = vunpack.c.l.b16 %v419
    %v434 = vunpack.c.l.b16 %v420
    %v435 = vunpack.c.l.b16 %v421
    %v436 = vunpack.c.l.b16 %v422
    %v437 = vunpack.c.l.b16 %v423
    %v438 = vunpack.c.l.b16 %v424
    %v439 = vpack.c.b16 %v433, %v432
    %v440 = vpack.c.b16 %v435, %v434
    %v441 = vpack.c.b16 %v437, %v436
    %v442 = vpack.c.b16 %v438, %v438
    %vm446 = vcmask 441344
    %v448 = vsel %vm446, %v416, 0
    %v451 = vsel %vm446, %v417, 0
    %vm453 = vcmask 1042432
    %v455 = vsel %vm453, %v442, 0
    %457 = vmatprep.subr.bf16.mxu0 0
    %458 = vmatpush1.bf16.msra.mxu0 0
    %459 = vmatprep.subr.bf16.mxu0 0
    %460 = vmatpush1.bf16.msra.mxu0 0
    %461 = vmatprep.subr.bf16.mxu0 0
    %462 = vmatpush1.bf16.msra.mxu0 0
    %463 = vmatprep.subr.bf16.mxu0 0
    %464 = vmatpush1.bf16.msra.mxu0 0
    %465 = vmatprep.subr.bf16.mxu0 0
    %466 = vmatpush1.bf16.msra.mxu0 %v455
    %467 = vmatprep.subr.bf16.mxu0 0
    %468 = vmatpush1.bf16.msra.mxu0 %v441
    %469 = vmatprep.subr.bf16.mxu0 0
    %470 = vmatpush1.bf16.msra.mxu0 %v440
    %471 = vmatprep.subr.bf16.mxu0 0
    %472 = vmatpush1.bf16.msra.mxu0 %v439
    %473 = vmatprep.subr.bf16.mxu0 0
    %474 = vmatpush2.bf16.msra.mxu0 0
    %475 = vmatprep.subr.bf16.mxu0 0
    %476 = vmatpush2.bf16.msra.mxu0 0
    %477 = vmatprep.subr.bf16.mxu0 0
    %478 = vmatpush2.bf16.msra.mxu0 0
    %479 = vmatprep.subr.bf16.mxu0 0
    %480 = vmatpush2.bf16.msra.mxu0 0
    %481 = vmatprep.subr.bf16.mxu0 0
    %482 = vmatpush2.bf16.msra.mxu0 0
    %483 = vmatprep.subr.bf16.mxu0 0
    %484 = vmatpush2.bf16.msra.mxu0 0
    %485 = vmatprep.subr.bf16.mxu0 0
    %486 = vmatpush2.bf16.msra.mxu0 0
    %487 = vmatprep.subr.bf16.mxu0 0
    %488 = vmatpush2.bf16.msra.mxu0 0
    %489 = vmatprep.mubr.bf16.mxu0 0
    %490 = vmatmul.mubr.bf16.gmra.mxu0 %v448
    %v491 = vpop.f32.mrf.mxu0
    %v492 = vadd.f32 %v113, %v491
    %v493 = vpop.f32.mrf.mxu0
    %v494 = vpop.f32.mrf.mxu0
    %v495 = vadd.f32 %v113, %v494
    %v496 = vpop.f32.mrf.mxu0
    %497 = vmatprep.mubr.bf16.mxu0 0
    %498 = vmatmul.mubr.bf16.gmra.mxu0 %v451
    %v499 = vpop.f32.mrf.mxu0
    %v500 = vadd.f32 %v113, %v499
    %v501 = vpop.f32.mrf.mxu0
    %v502 = vpop.f32.mrf.mxu0
    %v503 = vpop.f32.mrf.mxu0
    %504 = vdwg.mxu0
    %v505 = vmax.f32 %v492, 0.0
    %v506 = vmax.f32 %v495, 0.0
    %v507 = vmax.f32 %v500, 0.0
    %v508 = vld [vmem:[#allocation2 + $0x3] ss:$0 sm:$0xff]
    %v509 = vmul.f32 %v117, %v507
    %v510 = vmul.f32 %v122, %v505
    %v511 = vmul.f32 %v127, %v506
    %v513 = vrot.slane %v507, 2
    %v517 = vrot.slane %v505, 2
    %v518 = vrot.slane %v506, 2
    %v519 = vsel %vm137, %v517, %v518
    %v520 = vsel %vm137, %v518, %v513
    %v524 = vsel %vm137, %v513, %v517
    %v525 = vmul.f32 %v148, %v524
    %v526 = vmul.f32 %v152, %v519
    %v527 = vmul.f32 %v156, %v520
    %v528 = vrot.slane %v507, 4
    %v530 = vrot.slane %v505, 4
    %v531 = vrot.slane %v506, 4
    %v532 = vsel %vm163, %v530, %v531
    %v533 = vsel %vm163, %v531, %v528
    %v537 = vsel %vm163, %v528, %v530
    %v538 = vmul.f32 %v174, %v537
    %v539 = vmul.f32 %v178, %v532
    %v540 = vmul.f32 %v182, %v533
    %v541 = vrot.slane %v507, 6
    %v543 = vrot.slane %v505, 6
    %v544 = vrot.slane %v506, 6
    %v545 = vsel %vm189, %v543, %v544
    %v546 = vsel %vm189, %v544, %v541
    %v550 = vsel %vm189, %v541, %v543
    %v551 = vmul.f32 %v200, %v550
    %v552 = vmul.f32 %v204, %v545
    %v553 = vmul.f32 %v208, %v546
    %v554 = vmul.f32 %v215, %v505
    %v555 = vmul.f32 %v219, %v506
    %v556 = vmul.f32 %v223, %v507
    %v557 = vmul.f32 %v230, %v519
    %v558 = vmul.f32 %v234, %v520
    %v559 = vmul.f32 %v238, %v524
    %v560 = vmul.f32 %v245, %v532
    %v561 = vmul.f32 %v249, %v533
    %v562 = vmul.f32 %v253, %v537
    %v563 = vmul.f32 %v260, %v545
    %v564 = vmul.f32 %v264, %v546
    %v565 = vmul.f32 %v268, %v550
    %v566 = vmul.f32 %v275, %v506
    %v567 = vmul.f32 %v279, %v507
    %v568 = vmul.f32 %v283, %v505
    %572 = vrot.lane.b32.xlu0 %v525, 32
    %v573 = vpop.permute.xlu0 %572
    %574 = vrot.lane.b32.xlu0 %v526, 32
    %v575 = vpop.permute.xlu0 %574
    %576 = vrot.lane.b32.xlu0 %v527, 32
    %v577 = vpop.permute.xlu0 %576
    %584 = vrot.lane.b32.xlu0 %v538, 64
    %v585 = vpop.permute.xlu0 %584
    %586 = vrot.lane.b32.xlu0 %v539, 64
    %v587 = vpop.permute.xlu0 %586
    %588 = vrot.lane.b32.xlu0 %v540, 64
    %v589 = vpop.permute.xlu0 %588
    %596 = vrot.lane.b32.xlu0 %v551, 96
    %v597 = vpop.permute.xlu0 %596
    %598 = vrot.lane.b32.xlu0 %v552, 96
    %v599 = vpop.permute.xlu0 %598
    %600 = vrot.lane.b32.xlu0 %v553, 96
    %v601 = vpop.permute.xlu0 %600
    %608 = vrot.lane.b32.xlu0 %v557, 32
    %v609 = vpop.permute.xlu0 %608
    %610 = vrot.lane.b32.xlu0 %v558, 32
    %v611 = vpop.permute.xlu0 %610
    %612 = vrot.lane.b32.xlu0 %v559, 32
    %v613 = vpop.permute.xlu0 %612
    %620 = vrot.lane.b32.xlu0 %v560, 64
    %v621 = vpop.permute.xlu0 %620
    %622 = vrot.lane.b32.xlu0 %v561, 64
    %v623 = vpop.permute.xlu0 %622
    %624 = vrot.lane.b32.xlu0 %v562, 64
    %v625 = vpop.permute.xlu0 %624
    %632 = vrot.lane.b32.xlu0 %v563, 96
    %v633 = vpop.permute.xlu0 %632
    %634 = vrot.lane.b32.xlu0 %v564, 96
    %v635 = vpop.permute.xlu0 %634
    %636 = vrot.lane.b32.xlu0 %v565, 96
    %v637 = vpop.permute.xlu0 %636
    %vm641 = vcmask 261120
    %v642 = vsel %vm641, %v509, %v573
    %v643 = vsel %vm641, %v510, %v575
    %v644 = vsel %vm641, %v511, %v577
    %vm645 = vcmask 523264
    %v646 = vsel %vm645, %v642, %v585
    %v647 = vsel %vm645, %v643, %v587
    %v648 = vsel %vm645, %v644, %v589
    %vm649 = vcmask 785408
    %v650 = vsel %vm649, %v646, %v597
    %v651 = vsel %vm649, %v647, %v599
    %v652 = vsel %vm649, %v648, %v601
    %v653 = vsel %vm641, %v554, %v609
    %v654 = vsel %vm641, %v555, %v611
    %v655 = vsel %vm641, %v556, %v613
    %v656 = vsel %vm645, %v653, %v621
    %v657 = vsel %vm645, %v654, %v623
    %v658 = vsel %vm645, %v655, %v625
    %v659 = vsel %vm649, %v656, %v633
    %v660 = vsel %vm649, %v657, %v635
    %v661 = vsel %vm649, %v658, %v637
    %v662 = vpack.c.bf16 %v651, %v650
    %v663 = vpack.c.bf16 %v660, %v659
    %v664 = vpack.c.bf16 %v567, %v566
    %v665 = vpack.c.bf16 %v652, %v652
    %v666 = vpack.c.bf16 %v661, %v661
    %v667 = vpack.c.bf16 %v568, %v568
    %v668 = vld [vmem:[%s3] sm:$0xf]
    %v669 = vld [vmem:[%s3 + $0x4] sm:$0xf]
    %v670 = vld [vmem:[%s3 + $0x8] sm:$0xf]
    %v671 = vld [vmem:[%s3 + $0xc] sm:$0xf]
    %v672 = vld [vmem:[%s3 + $0x10] sm:$0xf]
    %v673 = vld [vmem:[%s3 + $0x14] sm:$0xf]
    %v674 = vld [vmem:[%s3 + $0x18] sm:$0xf]
    %v675 = vld [vmem:[%s3 + $0x1c] sm:$0xf]
    %v676 = vld [vmem:[%s3 + $0x20] sm:$0xf]
    %v677 = vld [vmem:[%s3 + $0x24] sm:$0xf]
    %v678 = vld [vmem:[%s3 + $0x28] sm:$0xf]
    %v679 = vld [vmem:[%s3 + $0x2c] sm:$0xf]
    %v680 = vld [vmem:[%s3 + $0x30] sm:$0xf]
    %v681 = vld [vmem:[%s3 + $0x34] sm:$0xf]
    %v682 = vld [vmem:[%s3 + $0x38] sm:$0xf]
    %v683 = vld [vmem:[%s3 + $0x3c] sm:$0xf]
    %v684 = vld [vmem:[%s3 + $0x40] sm:$0xf]
    %v685 = vld [vmem:[%s3 + $0x44] sm:$0xf]
    %v686 = vld [vmem:[%s3 + $0x48] sm:$0xf]
    %v687 = vld [vmem:[%s3 + $0x4c] sm:$0xf]
    %v688 = vld [vmem:[%s3 + $0x50] sm:$0xf]
    %v689 = vld [vmem:[%s3 + $0x54] sm:$0xf]
    %v690 = vld [vmem:[%s3 + $0x58] sm:$0xf]
    %v691 = vld [vmem:[%s3 + $0x5c] sm:$0xf]
    %v692 = vld [vmem:[%s3 + $0x60] sm:$0xf]
    %v693 = vld [vmem:[%s3 + $0x64] sm:$0xf]
    %v694 = vld [vmem:[%s3 + $0x68] sm:$0xf]
    %v695 = vld [vmem:[%s3 + $0x6c] sm:$0xf]
    %v696 = vld [vmem:[%s3 + $0x70] sm:$0xf]
    %v697 = vld [vmem:[%s3 + $0x74] sm:$0xf]
    %v698 = vld [vmem:[%s3 + $0x78] sm:$0xf]
    %v699 = vld [vmem:[%s3 + $0x7c] sm:$0xf]
    %v700 = vld [vmem:[%s3 + $0x80] sm:$0xf]
    %v701 = vld [vmem:[%s3 + $0x84] sm:$0xf]
    %v702 = vld [vmem:[%s3 + $0x88] sm:$0xf]
    %v703 = vld [vmem:[%s3 + $0x8c] sm:$0xf]
    %v740 = vunpack.c.l.b16 %v668
    %v741 = vunpack.c.l.b16 %v669
    %v742 = vunpack.c.l.b16 %v670
    %v743 = vunpack.c.l.b16 %v671
    %v744 = vunpack.c.l.b16 %v672
    %v745 = vunpack.c.l.b16 %v673
    %v746 = vunpack.c.l.b16 %v674
    %v747 = vunpack.c.l.b16 %v675
    %v748 = vunpack.c.l.b16 %v676
    %v749 = vunpack.c.l.b16 %v677
    %v750 = vunpack.c.l.b16 %v678
    %v751 = vunpack.c.l.b16 %v679
    %v752 = vunpack.c.l.b16 %v680
    %v753 = vunpack.c.l.b16 %v681
    %v754 = vunpack.c.l.b16 %v682
    %v755 = vunpack.c.l.b16 %v683
    %v756 = vunpack.c.l.b16 %v684
    %v757 = vunpack.c.l.b16 %v685
    %v758 = vunpack.c.l.b16 %v686
    %v759 = vunpack.c.l.b16 %v687
    %v760 = vunpack.c.l.b16 %v688
    %v761 = vunpack.c.l.b16 %v689
    %v762 = vunpack.c.l.b16 %v690
    %v763 = vunpack.c.l.b16 %v691
    %v764 = vunpack.c.l.b16 %v692
    %v765 = vunpack.c.l.b16 %v693
    %v766 = vunpack.c.l.b16 %v694
    %v767 = vunpack.c.l.b16 %v695
    %v768 = vunpack.c.l.b16 %v696
    %v769 = vunpack.c.l.b16 %v697
    %v770 = vunpack.c.l.b16 %v698
    %v771 = vunpack.c.l.b16 %v699
    %v772 = vunpack.c.l.b16 %v700
    %v773 = vunpack.c.l.b16 %v701
    %v774 = vunpack.c.l.b16 %v702
    %v775 = vunpack.c.l.b16 %v703
    %v776 = vpack.c.b16 %v741, %v740
    %v777 = vpack.c.b16 %v743, %v742
    %v778 = vpack.c.b16 %v745, %v744
    %v779 = vpack.c.b16 %v747, %v746
    %v780 = vpack.c.b16 %v749, %v748
    %v781 = vpack.c.b16 %v751, %v750
    %v782 = vpack.c.b16 %v753, %v752
    %v783 = vpack.c.b16 %v755, %v754
    %v784 = vpack.c.b16 %v757, %v756
    %v785 = vpack.c.b16 %v759, %v758
    %v786 = vpack.c.b16 %v761, %v760
    %v787 = vpack.c.b16 %v763, %v762
    %v788 = vpack.c.b16 %v765, %v764
    %v789 = vpack.c.b16 %v767, %v766
    %v790 = vpack.c.b16 %v769, %v768
    %v791 = vpack.c.b16 %v771, %v770
    %v792 = vpack.c.b16 %v773, %v772
    %v793 = vpack.c.b16 %v775, %v774
    %v813 = vsel %vm641, %v664, 0
    %v816 = vsel %vm641, %v667, 0
    %818 = vmatprep.subr.bf16.mxu0 0
    %819 = vmatpush1.bf16.msra.mxu0 %v783
    %820 = vmatprep.subr.bf16.mxu0 0
    %821 = vmatpush1.bf16.msra.mxu0 %v782
    %822 = vmatprep.subr.bf16.mxu0 0
    %823 = vmatpush1.bf16.msra.mxu0 %v781
    %824 = vmatprep.subr.bf16.mxu0 0
    %825 = vmatpush1.bf16.msra.mxu0 %v780
    %826 = vmatprep.subr.bf16.mxu0 0
    %827 = vmatpush1.bf16.msra.mxu0 %v779
    %828 = vmatprep.subr.bf16.mxu0 0
    %829 = vmatpush1.bf16.msra.mxu0 %v778
    %830 = vmatprep.subr.bf16.mxu0 0
    %831 = vmatpush1.bf16.msra.mxu0 %v777
    %832 = vmatprep.subr.bf16.mxu0 0
    %833 = vmatpush1.bf16.msra.mxu0 %v776
    %834 = vmatprep.subr.bf16.mxu0 0
    %835 = vmatpush2.bf16.msra.mxu0 %v791
    %836 = vmatprep.subr.bf16.mxu0 0
    %837 = vmatpush2.bf16.msra.mxu0 %v790
    %838 = vmatprep.subr.bf16.mxu0 0
    %839 = vmatpush2.bf16.msra.mxu0 %v789
    %840 = vmatprep.subr.bf16.mxu0 0
    %841 = vmatpush2.bf16.msra.mxu0 %v788
    %842 = vmatprep.subr.bf16.mxu0 0
    %843 = vmatpush2.bf16.msra.mxu0 %v787
    %844 = vmatprep.subr.bf16.mxu0 0
    %845 = vmatpush2.bf16.msra.mxu0 %v786
    %846 = vmatprep.subr.bf16.mxu0 0
    %847 = vmatpush2.bf16.msra.mxu0 %v785
    %848 = vmatprep.subr.bf16.mxu0 0
    %849 = vmatpush2.bf16.msra.mxu0 %v784
    %850 = vmatprep.mubr.bf16.mxu0 %v663
    %851 = vmatmul.mubr.bf16.gmra.mxu0 %v662
    %v852 = vpop.f32.mrf.mxu0
    %v853 = vadd.f32 %v508, %v852
    %v854 = vpop.f32.mrf.mxu0
    %v855 = vpop.f32.mrf.mxu0
    %v856 = vadd.f32 %v508, %v855
    %v857 = vpop.f32.mrf.mxu0
    %858 = vmatprep.mubr.bf16.mxu0 %v666
    %859 = vmatmul.mubr.bf16.gmra.mxu0 %v665
    %v860 = vpop.f32.mrf.mxu0
    %v861 = vadd.f32 %v508, %v860
    %v862 = vpop.f32.mrf.mxu0
    %v863 = vpop.f32.mrf.mxu0
    %v864 = vpop.f32.mrf.mxu0
    %865 = vdwg.mxu0
    %866 = vmatprep.subr.bf16.mxu0 0
    %867 = vmatpush1.bf16.msra.mxu0 0
    %868 = vmatprep.subr.bf16.mxu0 0
    %869 = vmatpush1.bf16.msra.mxu0 0
    %870 = vmatprep.subr.bf16.mxu0 0
    %871 = vmatpush1.bf16.msra.mxu0 0
    %872 = vmatprep.subr.bf16.mxu0 0
    %873 = vmatpush1.bf16.msra.mxu0 0
    %874 = vmatprep.subr.bf16.mxu0 0
    %875 = vmatpush1.bf16.msra.mxu0 0
    %876 = vmatprep.subr.bf16.mxu0 0
    %877 = vmatpush1.bf16.msra.mxu0 0
    %878 = vmatprep.subr.bf16.mxu0 0
    %879 = vmatpush1.bf16.msra.mxu0 %v793
    %880 = vmatprep.subr.bf16.mxu0 0
    %881 = vmatpush1.bf16.msra.mxu0 %v792
    %882 = vmatprep.subr.bf16.mxu0 0
    %883 = vmatpush2.bf16.msra.mxu0 0
    %884 = vmatprep.subr.bf16.mxu0 0
    %885 = vmatpush2.bf16.msra.mxu0 0
    %886 = vmatprep.subr.bf16.mxu0 0
    %887 = vmatpush2.bf16.msra.mxu0 0
    %888 = vmatprep.subr.bf16.mxu0 0
    %889 = vmatpush2.bf16.msra.mxu0 0
    %890 = vmatprep.subr.bf16.mxu0 0
    %891 = vmatpush2.bf16.msra.mxu0 0
    %892 = vmatprep.subr.bf16.mxu0 0
    %893 = vmatpush2.bf16.msra.mxu0 0
    %894 = vmatprep.subr.bf16.mxu0 0
    %895 = vmatpush2.bf16.msra.mxu0 0
    %896 = vmatprep.subr.bf16.mxu0 0
    %897 = vmatpush2.bf16.msra.mxu0 0
    %898 = vmatprep.mubr.bf16.mxu0 0
    %899 = vmatmul.mubr.bf16.gmra.mxu0 %v813
    %v900 = vpop.f32.mrf.mxu0
    %v901 = vadd.f32 %v853, %v900
    %v902 = vpop.f32.mrf.mxu0
    %v903 = vpop.f32.mrf.mxu0
    %v904 = vadd.f32 %v856, %v903
    %v905 = vpop.f32.mrf.mxu0
    %906 = vmatprep.mubr.bf16.mxu0 0
    %907 = vmatmul.mubr.bf16.gmra.mxu0 %v816
    %v908 = vpop.f32.mrf.mxu0
    %v909 = vadd.f32 %v861, %v908
    %v910 = vpop.f32.mrf.mxu0
    %v911 = vpop.f32.mrf.mxu0
    %v912 = vpop.f32.mrf.mxu0
    %913 = vdwg.mxu0
    %v914 = vmax.f32 %v901, 0.0
    %v915 = vmax.f32 %v904, 0.0
    %v916 = vmax.f32 %v909, 0.0
    %v917 = vld [vmem:[#allocation2 + $0x4] ss:$0 sm:$0xff]
    %v918 = vmul.f32 %v117, %v916
    %v919 = vmul.f32 %v122, %v914
    %v920 = vmul.f32 %v127, %v915
    %v922 = vrot.slane %v916, 2
    %v926 = vrot.slane %v914, 2
    %v927 = vrot.slane %v915, 2
    %v928 = vsel %vm137, %v926, %v927
    %v929 = vsel %vm137, %v927, %v922
    %v933 = vsel %vm137, %v922, %v926
    %v934 = vmul.f32 %v148, %v933
    %v935 = vmul.f32 %v152, %v928
    %v936 = vmul.f32 %v156, %v929
    %v937 = vrot.slane %v916, 4
    %v939 = vrot.slane %v914, 4
    %v940 = vrot.slane %v915, 4
    %v941 = vsel %vm163, %v939, %v940
    %v942 = vsel %vm163, %v940, %v937
    %v946 = vsel %vm163, %v937, %v939
    %v947 = vmul.f32 %v174, %v946
    %v948 = vmul.f32 %v178, %v941
    %v949 = vmul.f32 %v182, %v942
    %v950 = vrot.slane %v916, 6
    %v952 = vrot.slane %v914, 6
    %v953 = vrot.slane %v915, 6
    %v954 = vsel %vm189, %v952, %v953
    %v955 = vsel %vm189, %v953, %v950
    %v959 = vsel %vm189, %v950, %v952
    %v960 = vmul.f32 %v200, %v959
    %v961 = vmul.f32 %v204, %v954
    %v962 = vmul.f32 %v208, %v955
    %v963 = vmul.f32 %v215, %v914
    %v964 = vmul.f32 %v219, %v915
    %v965 = vmul.f32 %v223, %v916
    %v966 = vmul.f32 %v230, %v928
    %v967 = vmul.f32 %v234, %v929
    %v968 = vmul.f32 %v238, %v933
    %v969 = vmul.f32 %v245, %v941
    %v970 = vmul.f32 %v249, %v942
    %v971 = vmul.f32 %v253, %v946
    %v972 = vmul.f32 %v260, %v954
    %v973 = vmul.f32 %v264, %v955
    %v974 = vmul.f32 %v268, %v959
    %v975 = vmul.f32 %v275, %v915
    %v976 = vmul.f32 %v279, %v916
    %v977 = vmul.f32 %v283, %v914
    %981 = vrot.lane.b32.xlu0 %v934, 64
    %v982 = vpop.permute.xlu0 %981
    %983 = vrot.lane.b32.xlu0 %v935, 64
    %v984 = vpop.permute.xlu0 %983
    %985 = vrot.lane.b32.xlu0 %v936, 64
    %v986 = vpop.permute.xlu0 %985
    %993 = vrot.lane.b32.xlu0 %v960, 64
    %v994 = vpop.permute.xlu0 %993
    %995 = vrot.lane.b32.xlu0 %v961, 64
    %v996 = vpop.permute.xlu0 %995
    %997 = vrot.lane.b32.xlu0 %v962, 64
    %v998 = vpop.permute.xlu0 %997
    %1005 = vrot.lane.b32.xlu0 %v966, 64
    %v1006 = vpop.permute.xlu0 %1005
    %1007 = vrot.lane.b32.xlu0 %v967, 64
    %v1008 = vpop.permute.xlu0 %1007
    %1009 = vrot.lane.b32.xlu0 %v968, 64
    %v1010 = vpop.permute.xlu0 %1009
    %1017 = vrot.lane.b32.xlu0 %v972, 64
    %v1018 = vpop.permute.xlu0 %1017
    %1019 = vrot.lane.b32.xlu0 %v973, 64
    %v1020 = vpop.permute.xlu0 %1019
    %1021 = vrot.lane.b32.xlu0 %v974, 64
    %v1022 = vpop.permute.xlu0 %1021
    %v1026 = vsel %vm645, %v918, %v982
    %v1027 = vsel %vm645, %v919, %v984
    %v1028 = vsel %vm645, %v920, %v986
    %v1029 = vsel %vm645, %v947, %v994
    %v1030 = vsel %vm645, %v948, %v996
    %v1031 = vsel %vm645, %v949, %v998
    %v1032 = vsel %vm645, %v963, %v1006
    %v1033 = vsel %vm645, %v964, %v1008
    %v1034 = vsel %vm645, %v965, %v1010
    %v1035 = vsel %vm645, %v969, %v1018
    %v1036 = vsel %vm645, %v970, %v1020
    %v1037 = vsel %vm645, %v971, %v1022
    %v1038 = vpack.c.bf16 %v1027, %v1026
    %v1039 = vpack.c.bf16 %v1030, %v1029
    %v1040 = vpack.c.bf16 %v1033, %v1032
    %v1041 = vpack.c.bf16 %v1036, %v1035
    %v1042 = vpack.c.bf16 %v976, %v975
    %v1043 = vpack.c.bf16 %v1028, %v1028
    %v1044 = vpack.c.bf16 %v1031, %v1031
    %v1045 = vpack.c.bf16 %v1034, %v1034
    %v1046 = vpack.c.bf16 %v1037, %v1037
    %v1047 = vpack.c.bf16 %v977, %v977
    %v1048 = vld [vmem:[#allocation5] sm:$0xf]
    %v1049 = vld [vmem:[#allocation5 + $0x4] sm:$0xf]
    %v1050 = vld [vmem:[#allocation5 + $0x8] sm:$0xf]
    %v1051 = vld [vmem:[#allocation5 + $0xc] sm:$0xf]
    %v1052 = vld [vmem:[#allocation5 + $0x10] sm:$0xf]
    %v1053 = vld [vmem:[#allocation5 + $0x14] sm:$0xf]
    %v1054 = vld [vmem:[#allocation5 + $0x18] sm:$0xf]
    %v1055 = vld [vmem:[#allocation5 + $0x1c] sm:$0xf]
    %v1056 = vld [vmem:[#allocation5 + $0x20] sm:$0xf]
    %v1057 = vld [vmem:[#allocation5 + $0x24] sm:$0xf]
    %v1058 = vld [vmem:[#allocation5 + $0x28] sm:$0xf]
    %v1059 = vld [vmem:[#allocation5 + $0x2c] sm:$0xf]
    %v1060 = vld [vmem:[#allocation5 + $0x30] sm:$0xf]
    %v1061 = vld [vmem:[#allocation5 + $0x34] sm:$0xf]
    %v1062 = vld [vmem:[#allocation5 + $0x38] sm:$0xf]
    %v1063 = vld [vmem:[#allocation5 + $0x3c] sm:$0xf]
    %v1064 = vld [vmem:[#allocation5 + $0x40] sm:$0xf]
    %v1065 = vld [vmem:[#allocation5 + $0x44] sm:$0xf]
    %v1066 = vld [vmem:[#allocation5 + $0x48] sm:$0xf]
    %v1067 = vld [vmem:[#allocation5 + $0x4c] sm:$0xf]
    %v1068 = vld [vmem:[#allocation5 + $0x50] sm:$0xf]
    %v1069 = vld [vmem:[#allocation5 + $0x54] sm:$0xf]
    %v1070 = vld [vmem:[#allocation5 + $0x58] sm:$0xf]
    %v1071 = vld [vmem:[#allocation5 + $0x5c] sm:$0xf]
    %v1072 = vld [vmem:[#allocation5 + $0x60] sm:$0xf]
    %v1073 = vld [vmem:[#allocation5 + $0x64] sm:$0xf]
    %v1074 = vld [vmem:[#allocation5 + $0x68] sm:$0xf]
    %v1075 = vld [vmem:[#allocation5 + $0x6c] sm:$0xf]
    %v1076 = vld [vmem:[#allocation5 + $0x70] sm:$0xf]
    %v1077 = vld [vmem:[#allocation5 + $0x74] sm:$0xf]
    %v1078 = vld [vmem:[#allocation5 + $0x78] sm:$0xf]
    %v1079 = vld [vmem:[#allocation5 + $0x7c] sm:$0xf]
    %v1080 = vld [vmem:[#allocation5 + $0x80] sm:$0xf]
    %v1081 = vld [vmem:[#allocation5 + $0x84] sm:$0xf]
    %v1082 = vld [vmem:[#allocation5 + $0x88] sm:$0xf]
    %v1083 = vld [vmem:[#allocation5 + $0x8c] sm:$0xf]
    %v1084 = vld [vmem:[#allocation5 + $0x90] sm:$0xf]
    %v1085 = vld [vmem:[#allocation5 + $0x94] sm:$0xf]
    %v1086 = vld [vmem:[#allocation5 + $0x98] sm:$0xf]
    %v1087 = vld [vmem:[#allocation5 + $0x9c] sm:$0xf]
    %v1088 = vld [vmem:[#allocation5 + $0xa0] sm:$0xf]
    %v1089 = vld [vmem:[#allocation5 + $0xa4] sm:$0xf]
    %v1090 = vld [vmem:[#allocation5 + $0xa8] sm:$0xf]
    %v1091 = vld [vmem:[#allocation5 + $0xac] sm:$0xf]
    %v1092 = vld [vmem:[#allocation5 + $0xb0] sm:$0xf]
    %v1093 = vld [vmem:[#allocation5 + $0xb4] sm:$0xf]
    %v1094 = vld [vmem:[#allocation5 + $0xb8] sm:$0xf]
    %v1095 = vld [vmem:[#allocation5 + $0xbc] sm:$0xf]
    %v1096 = vld [vmem:[#allocation5 + $0xc0] sm:$0xf]
    %v1097 = vld [vmem:[#allocation5 + $0xc4] sm:$0xf]
    %v1098 = vld [vmem:[#allocation5 + $0xc8] sm:$0xf]
    %v1099 = vld [vmem:[#allocation5 + $0xcc] sm:$0xf]
    %v1100 = vld [vmem:[#allocation5 + $0xd0] sm:$0xf]
    %v1101 = vld [vmem:[#allocation5 + $0xd4] sm:$0xf]
    %v1102 = vld [vmem:[#allocation5 + $0xd8] sm:$0xf]
    %v1103 = vld [vmem:[#allocation5 + $0xdc] sm:$0xf]
    %v1104 = vld [vmem:[#allocation5 + $0xe0] sm:$0xf]
    %v1105 = vld [vmem:[#allocation5 + $0xe4] sm:$0xf]
    %v1106 = vld [vmem:[#allocation5 + $0xe8] sm:$0xf]
    %v1107 = vld [vmem:[#allocation5 + $0xec] sm:$0xf]
    %v1108 = vld [vmem:[#allocation5 + $0xf0] sm:$0xf]
    %v1109 = vld [vmem:[#allocation5 + $0xf4] sm:$0xf]
    %v1110 = vld [vmem:[#allocation5 + $0xf8] sm:$0xf]
    %v1111 = vld [vmem:[#allocation5 + $0xfc] sm:$0xf]
    %v1112 = vld [vmem:[#allocation5 + $0x100] sm:$0xf]
    %v1113 = vld [vmem:[#allocation5 + $0x104] sm:$0xf]
    %v1114 = vld [vmem:[#allocation5 + $0x108] sm:$0xf]
    %v1115 = vld [vmem:[#allocation5 + $0x10c] sm:$0xf]
    %v1116 = vld [vmem:[#allocation5 + $0x110] sm:$0xf]
    %v1117 = vld [vmem:[#allocation5 + $0x114] sm:$0xf]
    %v1118 = vld [vmem:[#allocation5 + $0x118] sm:$0xf]
    %v1119 = vld [vmem:[#allocation5 + $0x11c] sm:$0xf]
    %v1192 = vunpack.c.l.b16 %v1048
    %v1193 = vunpack.c.l.b16 %v1049
    %v1194 = vunpack.c.l.b16 %v1050
    %v1195 = vunpack.c.l.b16 %v1051
    %v1196 = vunpack.c.l.b16 %v1052
    %v1197 = vunpack.c.l.b16 %v1053
    %v1198 = vunpack.c.l.b16 %v1054
    %v1199 = vunpack.c.l.b16 %v1055
    %v1200 = vunpack.c.l.b16 %v1056
    %v1201 = vunpack.c.l.b16 %v1057
    %v1202 = vunpack.c.l.b16 %v1058
    %v1203 = vunpack.c.l.b16 %v1059
    %v1204 = vunpack.c.l.b16 %v1060
    %v1205 = vunpack.c.l.b16 %v1061
    %v1206 = vunpack.c.l.b16 %v1062
    %v1207 = vunpack.c.l.b16 %v1063
    %v1208 = vunpack.c.l.b16 %v1064
    %v1209 = vunpack.c.l.b16 %v1065
    %v1210 = vunpack.c.l.b16 %v1066
    %v1211 = vunpack.c.l.b16 %v1067
    %v1212 = vunpack.c.l.b16 %v1068
    %v1213 = vunpack.c.l.b16 %v1069
    %v1214 = vunpack.c.l.b16 %v1070
    %v1215 = vunpack.c.l.b16 %v1071
    %v1216 = vunpack.c.l.b16 %v1072
    %v1217 = vunpack.c.l.b16 %v1073
    %v1218 = vunpack.c.l.b16 %v1074
    %v1219 = vunpack.c.l.b16 %v1075
    %v1220 = vunpack.c.l.b16 %v1076
    %v1221 = vunpack.c.l.b16 %v1077
    %v1222 = vunpack.c.l.b16 %v1078
    %v1223 = vunpack.c.l.b16 %v1079
    %v1224 = vunpack.c.l.b16 %v1080
    %v1225 = vunpack.c.l.b16 %v1081
    %v1226 = vunpack.c.l.b16 %v1082
    %v1227 = vunpack.c.l.b16 %v1083
    %v1228 = vunpack.c.l.b16 %v1084
    %v1229 = vunpack.c.l.b16 %v1085
    %v1230 = vunpack.c.l.b16 %v1086
    %v1231 = vunpack.c.l.b16 %v1087
    %v1232 = vunpack.c.l.b16 %v1088
    %v1233 = vunpack.c.l.b16 %v1089
    %v1234 = vunpack.c.l.b16 %v1090
    %v1235 = vunpack.c.l.b16 %v1091
    %v1236 = vunpack.c.l.b16 %v1092
    %v1237 = vunpack.c.l.b16 %v1093
    %v1238 = vunpack.c.l.b16 %v1094
    %v1239 = vunpack.c.l.b16 %v1095
    %v1240 = vunpack.c.l.b16 %v1096
    %v1241 = vunpack.c.l.b16 %v1097
    %v1242 = vunpack.c.l.b16 %v1098
    %v1243 = vunpack.c.l.b16 %v1099
    %v1244 = vunpack.c.l.b16 %v1100
    %v1245 = vunpack.c.l.b16 %v1101
    %v1246 = vunpack.c.l.b16 %v1102
    %v1247 = vunpack.c.l.b16 %v1103
    %v1248 = vunpack.c.l.b16 %v1104
    %v1249 = vunpack.c.l.b16 %v1105
    %v1250 = vunpack.c.l.b16 %v1106
    %v1251 = vunpack.c.l.b16 %v1107
    %v1252 = vunpack.c.l.b16 %v1108
    %v1253 = vunpack.c.l.b16 %v1109
    %v1254 = vunpack.c.l.b16 %v1110
    %v1255 = vunpack.c.l.b16 %v1111
    %v1256 = vunpack.c.l.b16 %v1112
    %v1257 = vunpack.c.l.b16 %v1113
    %v1258 = vunpack.c.l.b16 %v1114
    %v1259 = vunpack.c.l.b16 %v1115
    %v1260 = vunpack.c.l.b16 %v1116
    %v1261 = vunpack.c.l.b16 %v1117
    %v1262 = vunpack.c.l.b16 %v1118
    %v1263 = vunpack.c.l.b16 %v1119
    %v1264 = vpack.c.b16 %v1193, %v1192
    %v1265 = vpack.c.b16 %v1195, %v1194
    %v1266 = vpack.c.b16 %v1197, %v1196
    %v1267 = vpack.c.b16 %v1199, %v1198
    %v1268 = vpack.c.b16 %v1201, %v1200
    %v1269 = vpack.c.b16 %v1203, %v1202
    %v1270 = vpack.c.b16 %v1205, %v1204
    %v1271 = vpack.c.b16 %v1207, %v1206
    %v1272 = vpack.c.b16 %v1209, %v1208
    %v1273 = vpack.c.b16 %v1211, %v1210
    %v1274 = vpack.c.b16 %v1213, %v1212
    %v1275 = vpack.c.b16 %v1215, %v1214
    %v1276 = vpack.c.b16 %v1217, %v1216
    %v1277 = vpack.c.b16 %v1219, %v1218
    %v1278 = vpack.c.b16 %v1221, %v1220
    %v1279 = vpack.c.b16 %v1223, %v1222
    %v1280 = vpack.c.b16 %v1225, %v1224
    %v1281 = vpack.c.b16 %v1227, %v1226
    %v1282 = vpack.c.b16 %v1229, %v1228
    %v1283 = vpack.c.b16 %v1231, %v1230
    %v1284 = vpack.c.b16 %v1233, %v1232
    %v1285 = vpack.c.b16 %v1235, %v1234
    %v1286 = vpack.c.b16 %v1237, %v1236
    %v1287 = vpack.c.b16 %v1239, %v1238
    %v1288 = vpack.c.b16 %v1241, %v1240
    %v1289 = vpack.c.b16 %v1243, %v1242
    %v1290 = vpack.c.b16 %v1245, %v1244
    %v1291 = vpack.c.b16 %v1247, %v1246
    %v1292 = vpack.c.b16 %v1249, %v1248
    %v1293 = vpack.c.b16 %v1251, %v1250
    %v1294 = vpack.c.b16 %v1253, %v1252
    %v1295 = vpack.c.b16 %v1255, %v1254
    %v1296 = vpack.c.b16 %v1257, %v1256
    %v1297 = vpack.c.b16 %v1259, %v1258
    %v1298 = vpack.c.b16 %v1261, %v1260
    %v1299 = vpack.c.b16 %v1263, %v1262
    %v1337 = vsel %vm645, %v1042, 0
    %v1340 = vsel %vm645, %v1047, 0
    %1342 = vmatprep.subr.bf16.mxu0 0
    %1343 = vmatpush1.bf16.msra.mxu0 %v1271
    %1344 = vmatprep.subr.bf16.mxu0 0
    %1345 = vmatpush1.bf16.msra.mxu0 %v1270
    %1346 = vmatprep.subr.bf16.mxu0 0
    %1347 = vmatpush1.bf16.msra.mxu0 %v1269
    %1348 = vmatprep.subr.bf16.mxu0 0
    %1349 = vmatpush1.bf16.msra.mxu0 %v1268
    %1350 = vmatprep.subr.bf16.mxu0 0
    %1351 = vmatpush1.bf16.msra.mxu0 %v1267
    %1352 = vmatprep.subr.bf16.mxu0 0
    %1353 = vmatpush1.bf16.msra.mxu0 %v1266
    %1354 = vmatprep.subr.bf16.mxu0 0
    %1355 = vmatpush1.bf16.msra.mxu0 %v1265
    %1356 = vmatprep.subr.bf16.mxu0 0
    %1357 = vmatpush1.bf16.msra.mxu0 %v1264
    %1358 = vmatprep.subr.bf16.mxu0 0
    %1359 = vmatpush2.bf16.msra.mxu0 %v1279
    %1360 = vmatprep.subr.bf16.mxu0 0
    %1361 = vmatpush2.bf16.msra.mxu0 %v1278
    %1362 = vmatprep.subr.bf16.mxu0 0
    %1363 = vmatpush2.bf16.msra.mxu0 %v1277
    %1364 = vmatprep.subr.bf16.mxu0 0
    %1365 = vmatpush2.bf16.msra.mxu0 %v1276
    %1366 = vmatprep.subr.bf16.mxu0 0
    %1367 = vmatpush2.bf16.msra.mxu0 %v1275
    %1368 = vmatprep.subr.bf16.mxu0 0
    %1369 = vmatpush2.bf16.msra.mxu0 %v1274
    %1370 = vmatprep.subr.bf16.mxu0 0
    %1371 = vmatpush2.bf16.msra.mxu0 %v1273
    %1372 = vmatprep.subr.bf16.mxu0 0
    %1373 = vmatpush2.bf16.msra.mxu0 %v1272
    %1374 = vmatprep.mubr.bf16.mxu0 %v1039
    %1375 = vmatmul.mubr.bf16.gmra.mxu0 %v1038
    %v1376 = vpop.f32.mrf.mxu0
    %v1377 = vadd.f32 %v917, %v1376
    %v1378 = vpop.f32.mrf.mxu0
    %v1379 = vpop.f32.mrf.mxu0
    %v1380 = vadd.f32 %v917, %v1379
    %v1381 = vpop.f32.mrf.mxu0
    %1382 = vmatprep.mubr.bf16.mxu0 %v1044
    %1383 = vmatmul.mubr.bf16.gmra.mxu0 %v1043
    %v1384 = vpop.f32.mrf.mxu0
    %v1385 = vadd.f32 %v917, %v1384
    %v1386 = vpop.f32.mrf.mxu0
    %v1387 = vpop.f32.mrf.mxu0
    %v1388 = vpop.f32.mrf.mxu0
    %1389 = vdwg.mxu0
    %1390 = vmatprep.subr.bf16.mxu0 0
    %1391 = vmatpush1.bf16.msra.mxu0 %v1287
    %1392 = vmatprep.subr.bf16.mxu0 0
    %1393 = vmatpush1.bf16.msra.mxu0 %v1286
    %1394 = vmatprep.subr.bf16.mxu0 0
    %1395 = vmatpush1.bf16.msra.mxu0 %v1285
    %1396 = vmatprep.subr.bf16.mxu0 0
    %1397 = vmatpush1.bf16.msra.mxu0 %v1284
    %1398 = vmatprep.subr.bf16.mxu0 0
    %1399 = vmatpush1.bf16.msra.mxu0 %v1283
    %1400 = vmatprep.subr.bf16.mxu0 0
    %1401 = vmatpush1.bf16.msra.mxu0 %v1282
    %1402 = vmatprep.subr.bf16.mxu0 0
    %1403 = vmatpush1.bf16.msra.mxu0 %v1281
    %1404 = vmatprep.subr.bf16.mxu0 0
    %1405 = vmatpush1.bf16.msra.mxu0 %v1280
    %1406 = vmatprep.subr.bf16.mxu0 0
    %1407 = vmatpush2.bf16.msra.mxu0 %v1295
    %1408 = vmatprep.subr.bf16.mxu0 0
    %1409 = vmatpush2.bf16.msra.mxu0 %v1294
    %1410 = vmatprep.subr.bf16.mxu0 0
    %1411 = vmatpush2.bf16.msra.mxu0 %v1293
    %1412 = vmatprep.subr.bf16.mxu0 0
    %1413 = vmatpush2.bf16.msra.mxu0 %v1292
    %1414 = vmatprep.subr.bf16.mxu0 0
    %1415 = vmatpush2.bf16.msra.mxu0 %v1291
    %1416 = vmatprep.subr.bf16.mxu0 0
    %1417 = vmatpush2.bf16.msra.mxu0 %v1290
    %1418 = vmatprep.subr.bf16.mxu0 0
    %1419 = vmatpush2.bf16.msra.mxu0 %v1289
    %1420 = vmatprep.subr.bf16.mxu0 0
    %1421 = vmatpush2.bf16.msra.mxu0 %v1288
    %1422 = vmatprep.mubr.bf16.mxu0 %v1041
    %1423 = vmatmul.mubr.bf16.gmra.mxu0 %v1040
    %v1424 = vpop.f32.mrf.mxu0
    %v1425 = vadd.f32 %v1377, %v1424
    %v1426 = vpop.f32.mrf.mxu0
    %v1427 = vpop.f32.mrf.mxu0
    %v1428 = vadd.f32 %v1380, %v1427
    %v1429 = vpop.f32.mrf.mxu0
    %1430 = vmatprep.mubr.bf16.mxu0 %v1046
    %1431 = vmatmul.mubr.bf16.gmra.mxu0 %v1045
    %v1432 = vpop.f32.mrf.mxu0
    %v1433 = vadd.f32 %v1385, %v1432
    %v1434 = vpop.f32.mrf.mxu0
    %v1435 = vpop.f32.mrf.mxu0
    %v1436 = vpop.f32.mrf.mxu0
    %1437 = vdwg.mxu0
    %1438 = vmatprep.subr.bf16.mxu0 0
    %1439 = vmatpush1.bf16.msra.mxu0 0
    %1440 = vmatprep.subr.bf16.mxu0 0
    %1441 = vmatpush1.bf16.msra.mxu0 0
    %1442 = vmatprep.subr.bf16.mxu0 0
    %1443 = vmatpush1.bf16.msra.mxu0 0
    %1444 = vmatprep.subr.bf16.mxu0 0
    %1445 = vmatpush1.bf16.msra.mxu0 0
    %1446 = vmatprep.subr.bf16.mxu0 0
    %1447 = vmatpush1.bf16.msra.mxu0 %v1299
    %1448 = vmatprep.subr.bf16.mxu0 0
    %1449 = vmatpush1.bf16.msra.mxu0 %v1298
    %1450 = vmatprep.subr.bf16.mxu0 0
    %1451 = vmatpush1.bf16.msra.mxu0 %v1297
    %1452 = vmatprep.subr.bf16.mxu0 0
    %1453 = vmatpush1.bf16.msra.mxu0 %v1296
    %1454 = vmatprep.subr.bf16.mxu0 0
    %1455 = vmatpush2.bf16.msra.mxu0 0
    %1456 = vmatprep.subr.bf16.mxu0 0
    %1457 = vmatpush2.bf16.msra.mxu0 0
    %1458 = vmatprep.subr.bf16.mxu0 0
    %1459 = vmatpush2.bf16.msra.mxu0 0
    %1460 = vmatprep.subr.bf16.mxu0 0
    %1461 = vmatpush2.bf16.msra.mxu0 0
    %1462 = vmatprep.subr.bf16.mxu0 0
    %1463 = vmatpush2.bf16.msra.mxu0 0
    %1464 = vmatprep.subr.bf16.mxu0 0
    %1465 = vmatpush2.bf16.msra.mxu0 0
    %1466 = vmatprep.subr.bf16.mxu0 0
    %1467 = vmatpush2.bf16.msra.mxu0 0
    %1468 = vmatprep.subr.bf16.mxu0 0
    %1469 = vmatpush2.bf16.msra.mxu0 0
    %1470 = vmatprep.mubr.bf16.mxu0 0
    %1471 = vmatmul.mubr.bf16.gmra.mxu0 %v1337
    %v1472 = vpop.f32.mrf.mxu0
    %v1473 = vadd.f32 %v1425, %v1472
    %v1474 = vpop.f32.mrf.mxu0
    %v1475 = vpop.f32.mrf.mxu0
    %v1476 = vadd.f32 %v1428, %v1475
    %v1477 = vpop.f32.mrf.mxu0
    %1478 = vmatprep.mubr.bf16.mxu0 0
    %1479 = vmatmul.mubr.bf16.gmra.mxu0 %v1340
    %v1480 = vpop.f32.mrf.mxu0
    %v1481 = vadd.f32 %v1433, %v1480
    %v1482 = vpop.f32.mrf.mxu0
    %v1483 = vpop.f32.mrf.mxu0
    %v1484 = vpop.f32.mrf.mxu0
    %1485 = vdwg.mxu0
    %v1486 = vmax.f32 %v1473, 0.0
    %v1487 = vmax.f32 %v1476, 0.0
    %v1488 = vmax.f32 %v1481, 0.0
    %s1489 = scalar_lea.vmem [#allocation2], 5
    %v1490 = vld [vmem:[%s1489] ss:$8 sm:$0x3]
    %v1491 = vmul.f32 %v117, %v1488
    %v1492 = vmul.f32 %v122, %v1486
    %v1493 = vmul.f32 %v127, %v1487
    %v1495 = vrot.slane %v1488, 2
    %v1499 = vrot.slane %v1486, 2
    %v1500 = vrot.slane %v1487, 2
    %v1501 = vsel %vm137, %v1499, %v1500
    %v1502 = vsel %vm137, %v1500, %v1495
    %v1506 = vsel %vm137, %v1495, %v1499
    %v1507 = vmul.f32 %v148, %v1506
    %v1508 = vmul.f32 %v152, %v1501
    %v1509 = vmul.f32 %v156, %v1502
    %v1510 = vrot.slane %v1488, 4
    %v1512 = vrot.slane %v1486, 4
    %v1513 = vrot.slane %v1487, 4
    %v1514 = vsel %vm163, %v1512, %v1513
    %v1515 = vsel %vm163, %v1513, %v1510
    %v1519 = vsel %vm163, %v1510, %v1512
    %v1520 = vmul.f32 %v174, %v1519
    %v1521 = vmul.f32 %v178, %v1514
    %v1522 = vmul.f32 %v182, %v1515
    %v1523 = vrot.slane %v1488, 6
    %v1525 = vrot.slane %v1486, 6
    %v1526 = vrot.slane %v1487, 6
    %v1527 = vsel %vm189, %v1525, %v1526
    %v1528 = vsel %vm189, %v1526, %v1523
    %v1532 = vsel %vm189, %v1523, %v1525
    %v1533 = vmul.f32 %v200, %v1532
    %v1534 = vmul.f32 %v204, %v1527
    %v1535 = vmul.f32 %v208, %v1528
    %v1536 = vmul.f32 %v215, %v1486
    %v1537 = vmul.f32 %v219, %v1487
    %v1538 = vmul.f32 %v223, %v1488
    %v1539 = vmul.f32 %v230, %v1501
    %v1540 = vmul.f32 %v234, %v1502
    %v1541 = vmul.f32 %v238, %v1506
    %v1542 = vmul.f32 %v245, %v1514
    %v1543 = vmul.f32 %v249, %v1515
    %v1544 = vmul.f32 %v253, %v1519
    %v1545 = vmul.f32 %v260, %v1527
    %v1546 = vmul.f32 %v264, %v1528
    %v1547 = vmul.f32 %v268, %v1532
    %v1548 = vmul.f32 %v275, %v1487
    %v1549 = vmul.f32 %v279, %v1488
    %v1550 = vmul.f32 %v283, %v1486
    %v1551 = vpack.c.bf16 %v1492, %v1491
    %v1552 = vpack.c.bf16 %v1508, %v1507
    %v1553 = vpack.c.bf16 %v1521, %v1520
    %v1554 = vpack.c.bf16 %v1534, %v1533
    %v1555 = vpack.c.bf16 %v1537, %v1536
    %v1556 = vpack.c.bf16 %v1540, %v1539
    %v1557 = vpack.c.bf16 %v1543, %v1542
    %v1558 = vpack.c.bf16 %v1546, %v1545
    %v1559 = vpack.c.bf16 %v1549, %v1548
    %v1560 = vpack.c.bf16 %v1493, %v1493
    %v1561 = vpack.c.bf16 %v1509, %v1509
    %v1562 = vpack.c.bf16 %v1522, %v1522
    %v1563 = vpack.c.bf16 %v1535, %v1535
    %v1564 = vpack.c.bf16 %v1538, %v1538
    %v1565 = vpack.c.bf16 %v1541, %v1541
    %v1566 = vpack.c.bf16 %v1544, %v1544
    %v1567 = vpack.c.bf16 %v1547, %v1547
    %v1568 = vpack.c.bf16 %v1550, %v1550
    %v1569 = vld [vmem:[#allocation7] sm:$0xff]
    %v1570 = vld [vmem:[#allocation7 + $0x8] sm:$0xff]
    %v1571 = vld [vmem:[#allocation7 + $0x10] sm:$0xff]
    %v1572 = vld [vmem:[#allocation7 + $0x18] sm:$0xff]
    %v1573 = vld [vmem:[#allocation7 + $0x20] sm:$0xff]
    %v1574 = vld [vmem:[#allocation7 + $0x28] sm:$0xff]
    %v1575 = vld [vmem:[#allocation7 + $0x30] sm:$0xff]
    %v1576 = vld [vmem:[#allocation7 + $0x38] sm:$0xff]
    %v1577 = vld [vmem:[#allocation7 + $0x40] sm:$0xff]
    %v1578 = vld [vmem:[#allocation7 + $0x48] sm:$0xff]
    %v1579 = vld [vmem:[#allocation7 + $0x50] sm:$0xff]
    %v1580 = vld [vmem:[#allocation7 + $0x58] sm:$0xff]
    %v1581 = vld [vmem:[#allocation7 + $0x60] sm:$0xff]
    %v1582 = vld [vmem:[#allocation7 + $0x68] sm:$0xff]
    %v1583 = vld [vmem:[#allocation7 + $0x70] sm:$0xff]
    %v1584 = vld [vmem:[#allocation7 + $0x78] sm:$0xff]
    %v1585 = vld [vmem:[#allocation7 + $0x80] sm:$0xff]
    %v1586 = vld [vmem:[#allocation7 + $0x88] sm:$0xff]
    %v1587 = vld [vmem:[#allocation7 + $0x90] sm:$0xff]
    %v1588 = vld [vmem:[#allocation7 + $0x98] sm:$0xff]
    %v1589 = vld [vmem:[#allocation7 + $0xa0] sm:$0xff]
    %v1590 = vld [vmem:[#allocation7 + $0xa8] sm:$0xff]
    %v1591 = vld [vmem:[#allocation7 + $0xb0] sm:$0xff]
    %v1592 = vld [vmem:[#allocation7 + $0xb8] sm:$0xff]
    %v1593 = vld [vmem:[#allocation7 + $0xc0] sm:$0xff]
    %v1594 = vld [vmem:[#allocation7 + $0xc8] sm:$0xff]
    %v1595 = vld [vmem:[#allocation7 + $0xd0] sm:$0xff]
    %v1596 = vld [vmem:[#allocation7 + $0xd8] sm:$0xff]
    %v1597 = vld [vmem:[#allocation7 + $0xe0] sm:$0xff]
    %v1598 = vld [vmem:[#allocation7 + $0xe8] sm:$0xff]
    %v1599 = vld [vmem:[#allocation7 + $0xf0] sm:$0xff]
    %v1600 = vld [vmem:[#allocation7 + $0xf8] sm:$0xff]
    %v1601 = vld [vmem:[#allocation7 + $0x100] sm:$0xff]
    %v1602 = vld [vmem:[#allocation7 + $0x108] sm:$0xff]
    %v1603 = vld [vmem:[#allocation7 + $0x110] sm:$0xff]
    %v1604 = vld [vmem:[#allocation7 + $0x118] sm:$0xff]
    %v1605 = vld [vmem:[#allocation7 + $0x120] sm:$0xff]
    %v1606 = vld [vmem:[#allocation7 + $0x128] sm:$0xff]
    %v1607 = vld [vmem:[#allocation7 + $0x130] sm:$0xff]
    %v1608 = vld [vmem:[#allocation7 + $0x138] sm:$0xff]
    %v1609 = vld [vmem:[#allocation7 + $0x140] sm:$0xff]
    %v1610 = vld [vmem:[#allocation7 + $0x148] sm:$0xff]
    %v1611 = vld [vmem:[#allocation7 + $0x150] sm:$0xff]
    %v1612 = vld [vmem:[#allocation7 + $0x158] sm:$0xff]
    %v1613 = vld [vmem:[#allocation7 + $0x160] sm:$0xff]
    %v1614 = vld [vmem:[#allocation7 + $0x168] sm:$0xff]
    %v1615 = vld [vmem:[#allocation7 + $0x170] sm:$0xff]
    %v1616 = vld [vmem:[#allocation7 + $0x178] sm:$0xff]
    %v1617 = vld [vmem:[#allocation7 + $0x180] sm:$0xff]
    %v1618 = vld [vmem:[#allocation7 + $0x188] sm:$0xff]
    %v1619 = vld [vmem:[#allocation7 + $0x190] sm:$0xff]
    %v1620 = vld [vmem:[#allocation7 + $0x198] sm:$0xff]
    %v1621 = vld [vmem:[#allocation7 + $0x1a0] sm:$0xff]
    %v1622 = vld [vmem:[#allocation7 + $0x1a8] sm:$0xff]
    %v1623 = vld [vmem:[#allocation7 + $0x1b0] sm:$0xff]
    %v1624 = vld [vmem:[#allocation7 + $0x1b8] sm:$0xff]
    %v1625 = vld [vmem:[#allocation7 + $0x1c0] sm:$0xff]
    %v1626 = vld [vmem:[#allocation7 + $0x1c8] sm:$0xff]
    %v1627 = vld [vmem:[#allocation7 + $0x1d0] sm:$0xff]
    %v1628 = vld [vmem:[#allocation7 + $0x1d8] sm:$0xff]
    %v1629 = vld [vmem:[#allocation7 + $0x1e0] sm:$0xff]
    %v1630 = vld [vmem:[#allocation7 + $0x1e8] sm:$0xff]
    %v1631 = vld [vmem:[#allocation7 + $0x1f0] sm:$0xff]
    %v1632 = vld [vmem:[#allocation7 + $0x1f8] sm:$0xff]
    %v1633 = vld [vmem:[#allocation7 + $0x200] sm:$0xff]
    %v1634 = vld [vmem:[#allocation7 + $0x208] sm:$0xff]
    %v1635 = vld [vmem:[#allocation7 + $0x210] sm:$0xff]
    %v1636 = vld [vmem:[#allocation7 + $0x218] sm:$0xff]
    %v1637 = vld [vmem:[#allocation7 + $0x220] sm:$0xff]
    %v1638 = vld [vmem:[#allocation7 + $0x228] sm:$0xff]
    %v1639 = vld [vmem:[#allocation7 + $0x230] sm:$0xff]
    %v1640 = vld [vmem:[#allocation7 + $0x238] sm:$0xff]
    %v1641 = vld [vmem:[#allocation7 + $0x240] sm:$0xff]
    %v1642 = vld [vmem:[#allocation7 + $0x248] sm:$0xff]
    %v1643 = vld [vmem:[#allocation7 + $0x250] sm:$0xff]
    %v1644 = vld [vmem:[#allocation7 + $0x258] sm:$0xff]
    %v1645 = vld [vmem:[#allocation7 + $0x260] sm:$0xff]
    %v1646 = vld [vmem:[#allocation7 + $0x268] sm:$0xff]
    %v1647 = vld [vmem:[#allocation7 + $0x270] sm:$0xff]
    %v1648 = vld [vmem:[#allocation7 + $0x278] sm:$0xff]
    %v1649 = vld [vmem:[#allocation7 + $0x280] sm:$0xff]
    %v1650 = vld [vmem:[#allocation7 + $0x288] sm:$0xff]
    %v1651 = vld [vmem:[#allocation7 + $0x290] sm:$0xff]
    %v1652 = vld [vmem:[#allocation7 + $0x298] sm:$0xff]
    %v1653 = vld [vmem:[#allocation7 + $0x2a0] sm:$0xff]
    %v1654 = vld [vmem:[#allocation7 + $0x2a8] sm:$0xff]
    %v1655 = vld [vmem:[#allocation7 + $0x2b0] sm:$0xff]
    %v1656 = vld [vmem:[#allocation7 + $0x2b8] sm:$0xff]
    %v1657 = vld [vmem:[#allocation7 + $0x2c0] sm:$0xff]
    %v1658 = vld [vmem:[#allocation7 + $0x2c8] sm:$0xff]
    %v1659 = vld [vmem:[#allocation7 + $0x2d0] sm:$0xff]
    %v1660 = vld [vmem:[#allocation7 + $0x2d8] sm:$0xff]
    %v1661 = vld [vmem:[#allocation7 + $0x2e0] sm:$0xff]
    %v1662 = vld [vmem:[#allocation7 + $0x2e8] sm:$0xff]
    %v1663 = vld [vmem:[#allocation7 + $0x2f0] sm:$0xff]
    %v1664 = vld [vmem:[#allocation7 + $0x2f8] sm:$0xff]
    %v1665 = vld [vmem:[#allocation7 + $0x300] sm:$0xff]
    %v1666 = vld [vmem:[#allocation7 + $0x308] sm:$0xff]
    %v1667 = vld [vmem:[#allocation7 + $0x310] sm:$0xff]
    %v1668 = vld [vmem:[#allocation7 + $0x318] sm:$0xff]
    %v1669 = vld [vmem:[#allocation7 + $0x320] sm:$0xff]
    %v1670 = vld [vmem:[#allocation7 + $0x328] sm:$0xff]
    %v1671 = vld [vmem:[#allocation7 + $0x330] sm:$0xff]
    %v1672 = vld [vmem:[#allocation7 + $0x338] sm:$0xff]
    %v1673 = vld [vmem:[#allocation7 + $0x340] sm:$0xff]
    %v1674 = vld [vmem:[#allocation7 + $0x348] sm:$0xff]
    %v1675 = vld [vmem:[#allocation7 + $0x350] sm:$0xff]
    %v1676 = vld [vmem:[#allocation7 + $0x358] sm:$0xff]
    %v1677 = vld [vmem:[#allocation7 + $0x360] sm:$0xff]
    %v1678 = vld [vmem:[#allocation7 + $0x368] sm:$0xff]
    %v1679 = vld [vmem:[#allocation7 + $0x370] sm:$0xff]
    %v1680 = vld [vmem:[#allocation7 + $0x378] sm:$0xff]
    %v1681 = vld [vmem:[#allocation7 + $0x380] sm:$0xff]
    %v1682 = vld [vmem:[#allocation7 + $0x388] sm:$0xff]
    %v1683 = vld [vmem:[#allocation7 + $0x390] sm:$0xff]
    %v1684 = vld [vmem:[#allocation7 + $0x398] sm:$0xff]
    %v1685 = vld [vmem:[#allocation7 + $0x3a0] sm:$0xff]
    %v1686 = vld [vmem:[#allocation7 + $0x3a8] sm:$0xff]
    %v1687 = vld [vmem:[#allocation7 + $0x3b0] sm:$0xff]
    %v1688 = vld [vmem:[#allocation7 + $0x3b8] sm:$0xff]
    %v1689 = vld [vmem:[#allocation7 + $0x3c0] sm:$0xff]
    %v1690 = vld [vmem:[#allocation7 + $0x3c8] sm:$0xff]
    %v1691 = vld [vmem:[#allocation7 + $0x3d0] sm:$0xff]
    %v1692 = vld [vmem:[#allocation7 + $0x3d8] sm:$0xff]
    %v1693 = vld [vmem:[#allocation7 + $0x3e0] sm:$0xff]
    %v1694 = vld [vmem:[#allocation7 + $0x3e8] sm:$0xff]
    %v1695 = vld [vmem:[#allocation7 + $0x3f0] sm:$0xff]
    %v1696 = vld [vmem:[#allocation7 + $0x3f8] sm:$0xff]
    %v1697 = vld [vmem:[#allocation7 + $0x400] sm:$0xff]
    %v1698 = vld [vmem:[#allocation7 + $0x408] sm:$0xff]
    %v1699 = vld [vmem:[#allocation7 + $0x410] sm:$0xff]
    %v1700 = vld [vmem:[#allocation7 + $0x418] sm:$0xff]
    %v1701 = vld [vmem:[#allocation7 + $0x420] sm:$0xff]
    %v1702 = vld [vmem:[#allocation7 + $0x428] sm:$0xff]
    %v1703 = vld [vmem:[#allocation7 + $0x430] sm:$0xff]
    %v1704 = vld [vmem:[#allocation7 + $0x438] sm:$0xff]
    %v1705 = vld [vmem:[#allocation7 + $0x440] sm:$0xff]
    %v1706 = vld [vmem:[#allocation7 + $0x448] sm:$0xff]
    %v1707 = vld [vmem:[#allocation7 + $0x450] sm:$0xff]
    %v1708 = vld [vmem:[#allocation7 + $0x458] sm:$0xff]
    %v1709 = vld [vmem:[#allocation7 + $0x460] sm:$0xff]
    %v1710 = vld [vmem:[#allocation7 + $0x468] sm:$0xff]
    %v1711 = vld [vmem:[#allocation7 + $0x470] sm:$0xff]
    %v1712 = vld [vmem:[#allocation7 + $0x478] sm:$0xff]
    %v1714 = vlaneseq
    %v1715 = vshrl.u32 %v1714, 7
    %v1716 = vsub.s32 0, %v1715
    %v1717 = vrot.slane %v1490, %v1716
    %v1718 = vlaneseq
    %v1719 = vshrl.u32 %v1718, 7
    %v1720 = vsub.s32 1, %v1719
    %v1721 = vrot.slane %v1490, %v1720
    %v1868 = vunpack.c.l.b16 %v1569
    %v1869 = vunpack.c.h.b16 %v1569
    %v1870 = vunpack.c.l.b16 %v1570
    %v1871 = vunpack.c.h.b16 %v1570
    %v1872 = vunpack.c.l.b16 %v1571
    %v1873 = vunpack.c.h.b16 %v1571
    %v1874 = vunpack.c.l.b16 %v1572
    %v1875 = vunpack.c.h.b16 %v1572
    %v1876 = vunpack.c.l.b16 %v1573
    %v1877 = vunpack.c.h.b16 %v1573
    %v1878 = vunpack.c.l.b16 %v1574
    %v1879 = vunpack.c.h.b16 %v1574
    %v1880 = vunpack.c.l.b16 %v1575
    %v1881 = vunpack.c.h.b16 %v1575
    %v1882 = vunpack.c.l.b16 %v1576
    %v1883 = vunpack.c.h.b16 %v1576
    %v1884 = vunpack.c.l.b16 %v1577
    %v1885 = vunpack.c.h.b16 %v1577
    %v1886 = vunpack.c.l.b16 %v1578
    %v1887 = vunpack.c.h.b16 %v1578
    %v1888 = vunpack.c.l.b16 %v1579
    %v1889 = vunpack.c.h.b16 %v1579
    %v1890 = vunpack.c.l.b16 %v1580
    %v1891 = vunpack.c.h.b16 %v1580
    %v1892 = vunpack.c.l.b16 %v1581
    %v1893 = vunpack.c.h.b16 %v1581
    %v1894 = vunpack.c.l.b16 %v1582
    %v1895 = vunpack.c.h.b16 %v1582
    %v1896 = vunpack.c.l.b16 %v1583
    %v1897 = vunpack.c.h.b16 %v1583
    %v1898 = vunpack.c.l.b16 %v1584
    %v1899 = vunpack.c.h.b16 %v1584
    %v1900 = vunpack.c.l.b16 %v1585
    %v1901 = vunpack.c.h.b16 %v1585
    %v1902 = vunpack.c.l.b16 %v1586
    %v1903 = vunpack.c.h.b16 %v1586
    %v1904 = vunpack.c.l.b16 %v1587
    %v1905 = vunpack.c.h.b16 %v1587
    %v1906 = vunpack.c.l.b16 %v1588
    %v1907 = vunpack.c.h.b16 %v1588
    %v1908 = vunpack.c.l.b16 %v1589
    %v1909 = vunpack.c.h.b16 %v1589
    %v1910 = vunpack.c.l.b16 %v1590
    %v1911 = vunpack.c.h.b16 %v1590
    %v1912 = vunpack.c.l.b16 %v1591
    %v1913 = vunpack.c.h.b16 %v1591
    %v1914 = vunpack.c.l.b16 %v1592
    %v1915 = vunpack.c.h.b16 %v1592
    %v1916 = vunpack.c.l.b16 %v1593
    %v1917 = vunpack.c.h.b16 %v1593
    %v1918 = vunpack.c.l.b16 %v1594
    %v1919 = vunpack.c.h.b16 %v1594
    %v1920 = vunpack.c.l.b16 %v1595
    %v1921 = vunpack.c.h.b16 %v1595
    %v1922 = vunpack.c.l.b16 %v1596
    %v1923 = vunpack.c.h.b16 %v1596
    %v1924 = vunpack.c.l.b16 %v1597
    %v1925 = vunpack.c.h.b16 %v1597
    %v1926 = vunpack.c.l.b16 %v1598
    %v1927 = vunpack.c.h.b16 %v1598
    %v1928 = vunpack.c.l.b16 %v1599
    %v1929 = vunpack.c.h.b16 %v1599
    %v1930 = vunpack.c.l.b16 %v1600
    %v1931 = vunpack.c.h.b16 %v1600
    %v1932 = vunpack.c.l.b16 %v1601
    %v1933 = vunpack.c.h.b16 %v1601
    %v1934 = vunpack.c.l.b16 %v1602
    %v1935 = vunpack.c.h.b16 %v1602
    %v1936 = vunpack.c.l.b16 %v1603
    %v1937 = vunpack.c.h.b16 %v1603
    %v1938 = vunpack.c.l.b16 %v1604
    %v1939 = vunpack.c.h.b16 %v1604
    %v1940 = vunpack.c.l.b16 %v1605
    %v1941 = vunpack.c.h.b16 %v1605
    %v1942 = vunpack.c.l.b16 %v1606
    %v1943 = vunpack.c.h.b16 %v1606
    %v1944 = vunpack.c.l.b16 %v1607
    %v1945 = vunpack.c.h.b16 %v1607
    %v1946 = vunpack.c.l.b16 %v1608
    %v1947 = vunpack.c.h.b16 %v1608
    %v1948 = vunpack.c.l.b16 %v1609
    %v1949 = vunpack.c.h.b16 %v1609
    %v1950 = vunpack.c.l.b16 %v1610
    %v1951 = vunpack.c.h.b16 %v1610
    %v1952 = vunpack.c.l.b16 %v1611
    %v1953 = vunpack.c.h.b16 %v1611
    %v1954 = vunpack.c.l.b16 %v1612
    %v1955 = vunpack.c.h.b16 %v1612
    %v1956 = vunpack.c.l.b16 %v1613
    %v1957 = vunpack.c.h.b16 %v1613
    %v1958 = vunpack.c.l.b16 %v1614
    %v1959 = vunpack.c.h.b16 %v1614
    %v1960 = vunpack.c.l.b16 %v1615
    %v1961 = vunpack.c.h.b16 %v1615
    %v1962 = vunpack.c.l.b16 %v1616
    %v1963 = vunpack.c.h.b16 %v1616
    %v1964 = vunpack.c.l.b16 %v1617
    %v1965 = vunpack.c.h.b16 %v1617
    %v1966 = vunpack.c.l.b16 %v1618
    %v1967 = vunpack.c.h.b16 %v1618
    %v1968 = vunpack.c.l.b16 %v1619
    %v1969 = vunpack.c.h.b16 %v1619
    %v1970 = vunpack.c.l.b16 %v1620
    %v1971 = vunpack.c.h.b16 %v1620
    %v1972 = vunpack.c.l.b16 %v1621
    %v1973 = vunpack.c.h.b16 %v1621
    %v1974 = vunpack.c.l.b16 %v1622
    %v1975 = vunpack.c.h.b16 %v1622
    %v1976 = vunpack.c.l.b16 %v1623
    %v1977 = vunpack.c.h.b16 %v1623
    %v1978 = vunpack.c.l.b16 %v1624
    %v1979 = vunpack.c.h.b16 %v1624
    %v1980 = vunpack.c.l.b16 %v1625
    %v1981 = vunpack.c.h.b16 %v1625
    %v1982 = vunpack.c.l.b16 %v1626
    %v1983 = vunpack.c.h.b16 %v1626
    %v1984 = vunpack.c.l.b16 %v1627
    %v1985 = vunpack.c.h.b16 %v1627
    %v1986 = vunpack.c.l.b16 %v1628
    %v1987 = vunpack.c.h.b16 %v1628
    %v1988 = vunpack.c.l.b16 %v1629
    %v1989 = vunpack.c.h.b16 %v1629
    %v1990 = vunpack.c.l.b16 %v1630
    %v1991 = vunpack.c.h.b16 %v1630
    %v1992 = vunpack.c.l.b16 %v1631
    %v1993 = vunpack.c.h.b16 %v1631
    %v1994 = vunpack.c.l.b16 %v1632
    %v1995 = vunpack.c.h.b16 %v1632
    %v1996 = vunpack.c.l.b16 %v1633
    %v1997 = vunpack.c.h.b16 %v1633
    %v1998 = vunpack.c.l.b16 %v1634
    %v1999 = vunpack.c.h.b16 %v1634
    %v2000 = vunpack.c.l.b16 %v1635
    %v2001 = vunpack.c.h.b16 %v1635
    %v2002 = vunpack.c.l.b16 %v1636
    %v2003 = vunpack.c.h.b16 %v1636
    %v2004 = vunpack.c.l.b16 %v1637
    %v2005 = vunpack.c.h.b16 %v1637
    %v2006 = vunpack.c.l.b16 %v1638
    %v2007 = vunpack.c.h.b16 %v1638
    %v2008 = vunpack.c.l.b16 %v1639
    %v2009 = vunpack.c.h.b16 %v1639
    %v2010 = vunpack.c.l.b16 %v1640
    %v2011 = vunpack.c.h.b16 %v1640
    %v2012 = vunpack.c.l.b16 %v1641
    %v2013 = vunpack.c.h.b16 %v1641
    %v2014 = vunpack.c.l.b16 %v1642
    %v2015 = vunpack.c.h.b16 %v1642
    %v2016 = vunpack.c.l.b16 %v1643
    %v2017 = vunpack.c.h.b16 %v1643
    %v2018 = vunpack.c.l.b16 %v1644
    %v2019 = vunpack.c.h.b16 %v1644
    %v2020 = vunpack.c.l.b16 %v1645
    %v2021 = vunpack.c.h.b16 %v1645
    %v2022 = vunpack.c.l.b16 %v1646
    %v2023 = vunpack.c.h.b16 %v1646
    %v2024 = vunpack.c.l.b16 %v1647
    %v2025 = vunpack.c.h.b16 %v1647
    %v2026 = vunpack.c.l.b16 %v1648
    %v2027 = vunpack.c.h.b16 %v1648
    %v2028 = vunpack.c.l.b16 %v1649
    %v2029 = vunpack.c.h.b16 %v1649
    %v2030 = vunpack.c.l.b16 %v1650
    %v2031 = vunpack.c.h.b16 %v1650
    %v2032 = vunpack.c.l.b16 %v1651
    %v2033 = vunpack.c.h.b16 %v1651
    %v2034 = vunpack.c.l.b16 %v1652
    %v2035 = vunpack.c.h.b16 %v1652
    %v2036 = vunpack.c.l.b16 %v1653
    %v2037 = vunpack.c.h.b16 %v1653
    %v2038 = vunpack.c.l.b16 %v1654
    %v2039 = vunpack.c.h.b16 %v1654
    %v2040 = vunpack.c.l.b16 %v1655
    %v2041 = vunpack.c.h.b16 %v1655
    %v2042 = vunpack.c.l.b16 %v1656
    %v2043 = vunpack.c.h.b16 %v1656
    %v2044 = vunpack.c.l.b16 %v1657
    %v2045 = vunpack.c.h.b16 %v1657
    %v2046 = vunpack.c.l.b16 %v1658
    %v2047 = vunpack.c.h.b16 %v1658
    %v2048 = vunpack.c.l.b16 %v1659
    %v2049 = vunpack.c.h.b16 %v1659
    %v2050 = vunpack.c.l.b16 %v1660
    %v2051 = vunpack.c.h.b16 %v1660
    %v2052 = vunpack.c.l.b16 %v1661
    %v2053 = vunpack.c.h.b16 %v1661
    %v2054 = vunpack.c.l.b16 %v1662
    %v2055 = vunpack.c.h.b16 %v1662
    %v2056 = vunpack.c.l.b16 %v1663
    %v2057 = vunpack.c.h.b16 %v1663
    %v2058 = vunpack.c.l.b16 %v1664
    %v2059 = vunpack.c.h.b16 %v1664
    %v2060 = vunpack.c.l.b16 %v1665
    %v2061 = vunpack.c.h.b16 %v1665
    %v2062 = vunpack.c.l.b16 %v1666
    %v2063 = vunpack.c.h.b16 %v1666
    %v2064 = vunpack.c.l.b16 %v1667
    %v2065 = vunpack.c.h.b16 %v1667
    %v2066 = vunpack.c.l.b16 %v1668
    %v2067 = vunpack.c.h.b16 %v1668
    %v2068 = vunpack.c.l.b16 %v1669
    %v2069 = vunpack.c.h.b16 %v1669
    %v2070 = vunpack.c.l.b16 %v1670
    %v2071 = vunpack.c.h.b16 %v1670
    %v2072 = vunpack.c.l.b16 %v1671
    %v2073 = vunpack.c.h.b16 %v1671
    %v2074 = vunpack.c.l.b16 %v1672
    %v2075 = vunpack.c.h.b16 %v1672
    %v2076 = vunpack.c.l.b16 %v1673
    %v2077 = vunpack.c.h.b16 %v1673
    %v2078 = vunpack.c.l.b16 %v1674
    %v2079 = vunpack.c.h.b16 %v1674
    %v2080 = vunpack.c.l.b16 %v1675
    %v2081 = vunpack.c.h.b16 %v1675
    %v2082 = vunpack.c.l.b16 %v1676
    %v2083 = vunpack.c.h.b16 %v1676
    %v2084 = vunpack.c.l.b16 %v1677
    %v2085 = vunpack.c.h.b16 %v1677
    %v2086 = vunpack.c.l.b16 %v1678
    %v2087 = vunpack.c.h.b16 %v1678
    %v2088 = vunpack.c.l.b16 %v1679
    %v2089 = vunpack.c.h.b16 %v1679
    %v2090 = vunpack.c.l.b16 %v1680
    %v2091 = vunpack.c.h.b16 %v1680
    %v2092 = vunpack.c.l.b16 %v1681
    %v2093 = vunpack.c.h.b16 %v1681
    %v2094 = vunpack.c.l.b16 %v1682
    %v2095 = vunpack.c.h.b16 %v1682
    %v2096 = vunpack.c.l.b16 %v1683
    %v2097 = vunpack.c.h.b16 %v1683
    %v2098 = vunpack.c.l.b16 %v1684
    %v2099 = vunpack.c.h.b16 %v1684
    %v2100 = vunpack.c.l.b16 %v1685
    %v2101 = vunpack.c.h.b16 %v1685
    %v2102 = vunpack.c.l.b16 %v1686
    %v2103 = vunpack.c.h.b16 %v1686
    %v2104 = vunpack.c.l.b16 %v1687
    %v2105 = vunpack.c.h.b16 %v1687
    %v2106 = vunpack.c.l.b16 %v1688
    %v2107 = vunpack.c.h.b16 %v1688
    %v2108 = vunpack.c.l.b16 %v1689
    %v2109 = vunpack.c.h.b16 %v1689
    %v2110 = vunpack.c.l.b16 %v1690
    %v2111 = vunpack.c.h.b16 %v1690
    %v2112 = vunpack.c.l.b16 %v1691
    %v2113 = vunpack.c.h.b16 %v1691
    %v2114 = vunpack.c.l.b16 %v1692
    %v2115 = vunpack.c.h.b16 %v1692
    %v2116 = vunpack.c.l.b16 %v1693
    %v2117 = vunpack.c.h.b16 %v1693
    %v2118 = vunpack.c.l.b16 %v1694
    %v2119 = vunpack.c.h.b16 %v1694
    %v2120 = vunpack.c.l.b16 %v1695
    %v2121 = vunpack.c.h.b16 %v1695
    %v2122 = vunpack.c.l.b16 %v1696
    %v2123 = vunpack.c.h.b16 %v1696
    %v2124 = vunpack.c.l.b16 %v1697
    %v2125 = vunpack.c.h.b16 %v1697
    %v2126 = vunpack.c.l.b16 %v1698
    %v2127 = vunpack.c.h.b16 %v1698
    %v2128 = vunpack.c.l.b16 %v1699
    %v2129 = vunpack.c.h.b16 %v1699
    %v2130 = vunpack.c.l.b16 %v1700
    %v2131 = vunpack.c.h.b16 %v1700
    %v2132 = vunpack.c.l.b16 %v1701
    %v2133 = vunpack.c.h.b16 %v1701
    %v2134 = vunpack.c.l.b16 %v1702
    %v2135 = vunpack.c.h.b16 %v1702
    %v2136 = vunpack.c.l.b16 %v1703
    %v2137 = vunpack.c.h.b16 %v1703
    %v2138 = vunpack.c.l.b16 %v1704
    %v2139 = vunpack.c.h.b16 %v1704
    %v2140 = vunpack.c.l.b16 %v1705
    %v2141 = vunpack.c.h.b16 %v1705
    %v2142 = vunpack.c.l.b16 %v1706
    %v2143 = vunpack.c.h.b16 %v1706
    %v2144 = vunpack.c.l.b16 %v1707
    %v2145 = vunpack.c.h.b16 %v1707
    %v2146 = vunpack.c.l.b16 %v1708
    %v2147 = vunpack.c.h.b16 %v1708
    %v2148 = vunpack.c.l.b16 %v1709
    %v2149 = vunpack.c.h.b16 %v1709
    %v2150 = vunpack.c.l.b16 %v1710
    %v2151 = vunpack.c.h.b16 %v1710
    %v2152 = vunpack.c.l.b16 %v1711
    %v2153 = vunpack.c.h.b16 %v1711
    %v2154 = vunpack.c.l.b16 %v1712
    %v2155 = vunpack.c.h.b16 %v1712
    %v2156 = vpack.c.b16 %v1870, %v1868
    %v2157 = vpack.c.b16 %v1871, %v1869
    %v2158 = vpack.c.b16 %v1874, %v1872
    %v2159 = vpack.c.b16 %v1875, %v1873
    %v2160 = vpack.c.b16 %v1878, %v1876
    %v2161 = vpack.c.b16 %v1879, %v1877
    %v2162 = vpack.c.b16 %v1882, %v1880
    %v2163 = vpack.c.b16 %v1883, %v1881
    %v2164 = vpack.c.b16 %v1886, %v1884
    %v2165 = vpack.c.b16 %v1887, %v1885
    %v2166 = vpack.c.b16 %v1890, %v1888
    %v2167 = vpack.c.b16 %v1891, %v1889
    %v2168 = vpack.c.b16 %v1894, %v1892
    %v2169 = vpack.c.b16 %v1895, %v1893
    %v2170 = vpack.c.b16 %v1898, %v1896
    %v2171 = vpack.c.b16 %v1899, %v1897
    %v2172 = vpack.c.b16 %v1902, %v1900
    %v2173 = vpack.c.b16 %v1903, %v1901
    %v2174 = vpack.c.b16 %v1906, %v1904
    %v2175 = vpack.c.b16 %v1907, %v1905
    %v2176 = vpack.c.b16 %v1910, %v1908
    %v2177 = vpack.c.b16 %v1911, %v1909
    %v2178 = vpack.c.b16 %v1914, %v1912
    %v2179 = vpack.c.b16 %v1915, %v1913
    %v2180 = vpack.c.b16 %v1918, %v1916
    %v2181 = vpack.c.b16 %v1919, %v1917
    %v2182 = vpack.c.b16 %v1922, %v1920
    %v2183 = vpack.c.b16 %v1923, %v1921
    %v2184 = vpack.c.b16 %v1926, %v1924
    %v2185 = vpack.c.b16 %v1927, %v1925
    %v2186 = vpack.c.b16 %v1930, %v1928
    %v2187 = vpack.c.b16 %v1931, %v1929
    %v2188 = vpack.c.b16 %v1934, %v1932
    %v2189 = vpack.c.b16 %v1935, %v1933
    %v2190 = vpack.c.b16 %v1938, %v1936
    %v2191 = vpack.c.b16 %v1939, %v1937
    %v2192 = vpack.c.b16 %v1942, %v1940
    %v2193 = vpack.c.b16 %v1943, %v1941
    %v2194 = vpack.c.b16 %v1946, %v1944
    %v2195 = vpack.c.b16 %v1947, %v1945
    %v2196 = vpack.c.b16 %v1950, %v1948
    %v2197 = vpack.c.b16 %v1951, %v1949
    %v2198 = vpack.c.b16 %v1954, %v1952
    %v2199 = vpack.c.b16 %v1955, %v1953
    %v2200 = vpack.c.b16 %v1958, %v1956
    %v2201 = vpack.c.b16 %v1959, %v1957
    %v2202 = vpack.c.b16 %v1962, %v1960
    %v2203 = vpack.c.b16 %v1963, %v1961
    %v2204 = vpack.c.b16 %v1966, %v1964
    %v2205 = vpack.c.b16 %v1967, %v1965
    %v2206 = vpack.c.b16 %v1970, %v1968
    %v2207 = vpack.c.b16 %v1971, %v1969
    %v2208 = vpack.c.b16 %v1974, %v1972
    %v2209 = vpack.c.b16 %v1975, %v1973
    %v2210 = vpack.c.b16 %v1978, %v1976
    %v2211 = vpack.c.b16 %v1979, %v1977
    %v2212 = vpack.c.b16 %v1982, %v1980
    %v2213 = vpack.c.b16 %v1983, %v1981
    %v2214 = vpack.c.b16 %v1986, %v1984
    %v2215 = vpack.c.b16 %v1987, %v1985
    %v2216 = vpack.c.b16 %v1990, %v1988
    %v2217 = vpack.c.b16 %v1991, %v1989
    %v2218 = vpack.c.b16 %v1994, %v1992
    %v2219 = vpack.c.b16 %v1995, %v1993
    %v2220 = vpack.c.b16 %v1998, %v1996
    %v2221 = vpack.c.b16 %v1999, %v1997
    %v2222 = vpack.c.b16 %v2002, %v2000
    %v2223 = vpack.c.b16 %v2003, %v2001
    %v2224 = vpack.c.b16 %v2006, %v2004
    %v2225 = vpack.c.b16 %v2007, %v2005
    %v2226 = vpack.c.b16 %v2010, %v2008
    %v2227 = vpack.c.b16 %v2011, %v2009
    %v2228 = vpack.c.b16 %v2014, %v2012
    %v2229 = vpack.c.b16 %v2015, %v2013
    %v2230 = vpack.c.b16 %v2018, %v2016
    %v2231 = vpack.c.b16 %v2019, %v2017
    %v2232 = vpack.c.b16 %v2022, %v2020
    %v2233 = vpack.c.b16 %v2023, %v2021
    %v2234 = vpack.c.b16 %v2026, %v2024
    %v2235 = vpack.c.b16 %v2027, %v2025
    %v2236 = vpack.c.b16 %v2030, %v2028
    %v2237 = vpack.c.b16 %v2031, %v2029
    %v2238 = vpack.c.b16 %v2034, %v2032
    %v2239 = vpack.c.b16 %v2035, %v2033
    %v2240 = vpack.c.b16 %v2038, %v2036
    %v2241 = vpack.c.b16 %v2039, %v2037
    %v2242 = vpack.c.b16 %v2042, %v2040
    %v2243 = vpack.c.b16 %v2043, %v2041
    %v2244 = vpack.c.b16 %v2046, %v2044
    %v2245 = vpack.c.b16 %v2047, %v2045
    %v2246 = vpack.c.b16 %v2050, %v2048
    %v2247 = vpack.c.b16 %v2051, %v2049
    %v2248 = vpack.c.b16 %v2054, %v2052
    %v2249 = vpack.c.b16 %v2055, %v2053
    %v2250 = vpack.c.b16 %v2058, %v2056
    %v2251 = vpack.c.b16 %v2059, %v2057
    %v2252 = vpack.c.b16 %v2062, %v2060
    %v2253 = vpack.c.b16 %v2063, %v2061
    %v2254 = vpack.c.b16 %v2066, %v2064
    %v2255 = vpack.c.b16 %v2067, %v2065
    %v2256 = vpack.c.b16 %v2070, %v2068
    %v2257 = vpack.c.b16 %v2071, %v2069
    %v2258 = vpack.c.b16 %v2074, %v2072
    %v2259 = vpack.c.b16 %v2075, %v2073
    %v2260 = vpack.c.b16 %v2078, %v2076
    %v2261 = vpack.c.b16 %v2079, %v2077
    %v2262 = vpack.c.b16 %v2082, %v2080
    %v2263 = vpack.c.b16 %v2083, %v2081
    %v2264 = vpack.c.b16 %v2086, %v2084
    %v2265 = vpack.c.b16 %v2087, %v2085
    %v2266 = vpack.c.b16 %v2090, %v2088
    %v2267 = vpack.c.b16 %v2091, %v2089
    %v2268 = vpack.c.b16 %v2094, %v2092
    %v2269 = vpack.c.b16 %v2095, %v2093
    %v2270 = vpack.c.b16 %v2098, %v2096
    %v2271 = vpack.c.b16 %v2099, %v2097
    %v2272 = vpack.c.b16 %v2102, %v2100
    %v2273 = vpack.c.b16 %v2103, %v2101
    %v2274 = vpack.c.b16 %v2106, %v2104
    %v2275 = vpack.c.b16 %v2107, %v2105
    %v2276 = vpack.c.b16 %v2110, %v2108
    %v2277 = vpack.c.b16 %v2111, %v2109
    %v2278 = vpack.c.b16 %v2114, %v2112
    %v2279 = vpack.c.b16 %v2115, %v2113
    %v2280 = vpack.c.b16 %v2118, %v2116
    %v2281 = vpack.c.b16 %v2119, %v2117
    %v2282 = vpack.c.b16 %v2122, %v2120
    %v2283 = vpack.c.b16 %v2123, %v2121
    %v2284 = vpack.c.b16 %v2126, %v2124
    %v2285 = vpack.c.b16 %v2127, %v2125
    %v2286 = vpack.c.b16 %v2130, %v2128
    %v2287 = vpack.c.b16 %v2131, %v2129
    %v2288 = vpack.c.b16 %v2134, %v2132
    %v2289 = vpack.c.b16 %v2135, %v2133
    %v2290 = vpack.c.b16 %v2138, %v2136
    %v2291 = vpack.c.b16 %v2139, %v2137
    %v2292 = vpack.c.b16 %v2142, %v2140
    %v2293 = vpack.c.b16 %v2143, %v2141
    %v2294 = vpack.c.b16 %v2146, %v2144
    %v2295 = vpack.c.b16 %v2147, %v2145
    %v2296 = vpack.c.b16 %v2150, %v2148
    %v2297 = vpack.c.b16 %v2151, %v2149
    %v2298 = vpack.c.b16 %v2154, %v2152
    %v2299 = vpack.c.b16 %v2155, %v2153
    %2444 = vmatprep.subr.bf16.mxu0 %v2171
    %2445 = vmatpush1.bf16.msra.mxu0 %v2170
    %2446 = vmatprep.subr.bf16.mxu0 %v2169
    %2447 = vmatpush1.bf16.msra.mxu0 %v2168
    %2448 = vmatprep.subr.bf16.mxu0 %v2167
    %2449 = vmatpush1.bf16.msra.mxu0 %v2166
    %2450 = vmatprep.subr.bf16.mxu0 %v2165
    %2451 = vmatpush1.bf16.msra.mxu0 %v2164
    %2452 = vmatprep.subr.bf16.mxu0 %v2163
    %2453 = vmatpush1.bf16.msra.mxu0 %v2162
    %2454 = vmatprep.subr.bf16.mxu0 %v2161
    %2455 = vmatpush1.bf16.msra.mxu0 %v2160
    %2456 = vmatprep.subr.bf16.mxu0 %v2159
    %2457 = vmatpush1.bf16.msra.mxu0 %v2158
    %2458 = vmatprep.subr.bf16.mxu0 %v2157
    %2459 = vmatpush1.bf16.msra.mxu0 %v2156
    %2460 = vmatprep.subr.bf16.mxu0 %v2187
    %2461 = vmatpush2.bf16.msra.mxu0 %v2186
    %2462 = vmatprep.subr.bf16.mxu0 %v2185
    %2463 = vmatpush2.bf16.msra.mxu0 %v2184
    %2464 = vmatprep.subr.bf16.mxu0 %v2183
    %2465 = vmatpush2.bf16.msra.mxu0 %v2182
    %2466 = vmatprep.subr.bf16.mxu0 %v2181
    %2467 = vmatpush2.bf16.msra.mxu0 %v2180
    %2468 = vmatprep.subr.bf16.mxu0 %v2179
    %2469 = vmatpush2.bf16.msra.mxu0 %v2178
    %2470 = vmatprep.subr.bf16.mxu0 %v2177
    %2471 = vmatpush2.bf16.msra.mxu0 %v2176
    %2472 = vmatprep.subr.bf16.mxu0 %v2175
    %2473 = vmatpush2.bf16.msra.mxu0 %v2174
    %2474 = vmatprep.subr.bf16.mxu0 %v2173
    %2475 = vmatpush2.bf16.msra.mxu0 %v2172
    %2476 = vmatprep.mubr.bf16.mxu0 %v1552
    %2477 = vmatmul.mubr.bf16.gmra.mxu0 %v1551
    %v2478 = vpop.f32.mrf.mxu0
    %v2479 = vadd.f32 %v1717, %v2478
    %v2480 = vpop.f32.mrf.mxu0
    %v2481 = vadd.f32 %v1721, %v2480
    %v2482 = vpop.f32.mrf.mxu0
    %v2483 = vadd.f32 %v1717, %v2482
    %v2484 = vpop.f32.mrf.mxu0
    %v2485 = vadd.f32 %v1721, %v2484
    %2486 = vmatprep.mubr.bf16.mxu0 %v1561
    %2487 = vmatmul.mubr.bf16.gmra.mxu0 %v1560
    %v2488 = vpop.f32.mrf.mxu0
    %v2489 = vadd.f32 %v1717, %v2488
    %v2490 = vpop.f32.mrf.mxu0
    %v2491 = vadd.f32 %v1721, %v2490
    %v2492 = vpop.f32.mrf.mxu0
    %v2493 = vpop.f32.mrf.mxu0
    %2494 = vdwg.mxu0
    %2495 = vmatprep.subr.bf16.mxu0 %v2203
    %2496 = vmatpush1.bf16.msra.mxu0 %v2202
    %2497 = vmatprep.subr.bf16.mxu0 %v2201
    %2498 = vmatpush1.bf16.msra.mxu0 %v2200
    %2499 = vmatprep.subr.bf16.mxu0 %v2199
    %2500 = vmatpush1.bf16.msra.mxu0 %v2198
    %2501 = vmatprep.subr.bf16.mxu0 %v2197
    %2502 = vmatpush1.bf16.msra.mxu0 %v2196
    %2503 = vmatprep.subr.bf16.mxu0 %v2195
    %2504 = vmatpush1.bf16.msra.mxu0 %v2194
    %2505 = vmatprep.subr.bf16.mxu0 %v2193
    %2506 = vmatpush1.bf16.msra.mxu0 %v2192
    %2507 = vmatprep.subr.bf16.mxu0 %v2191
    %2508 = vmatpush1.bf16.msra.mxu0 %v2190
    %2509 = vmatprep.subr.bf16.mxu0 %v2189
    %2510 = vmatpush1.bf16.msra.mxu0 %v2188
    %2511 = vmatprep.subr.bf16.mxu0 %v2219
    %2512 = vmatpush2.bf16.msra.mxu0 %v2218
    %2513 = vmatprep.subr.bf16.mxu0 %v2217
    %2514 = vmatpush2.bf16.msra.mxu0 %v2216
    %2515 = vmatprep.subr.bf16.mxu0 %v2215
    %2516 = vmatpush2.bf16.msra.mxu0 %v2214
    %2517 = vmatprep.subr.bf16.mxu0 %v2213
    %2518 = vmatpush2.bf16.msra.mxu0 %v2212
    %2519 = vmatprep.subr.bf16.mxu0 %v2211
    %2520 = vmatpush2.bf16.msra.mxu0 %v2210
    %2521 = vmatprep.subr.bf16.mxu0 %v2209
    %2522 = vmatpush2.bf16.msra.mxu0 %v2208
    %2523 = vmatprep.subr.bf16.mxu0 %v2207
    %2524 = vmatpush2.bf16.msra.mxu0 %v2206
    %2525 = vmatprep.subr.bf16.mxu0 %v2205
    %2526 = vmatpush2.bf16.msra.mxu0 %v2204
    %2527 = vmatprep.mubr.bf16.mxu0 %v1554
    %2528 = vmatmul.mubr.bf16.gmra.mxu0 %v1553
    %v2529 = vpop.f32.mrf.mxu0
    %v2530 = vadd.f32 %v2479, %v2529
    %v2531 = vpop.f32.mrf.mxu0
    %v2532 = vadd.f32 %v2481, %v2531
    %v2533 = vpop.f32.mrf.mxu0
    %v2534 = vadd.f32 %v2483, %v2533
    %v2535 = vpop.f32.mrf.mxu0
    %v2536 = vadd.f32 %v2485, %v2535
    %2537 = vmatprep.mubr.bf16.mxu0 %v1563
    %2538 = vmatmul.mubr.bf16.gmra.mxu0 %v1562
    %v2539 = vpop.f32.mrf.mxu0
    %v2540 = vadd.f32 %v2489, %v2539
    %v2541 = vpop.f32.mrf.mxu0
    %v2542 = vadd.f32 %v2491, %v2541
    %v2543 = vpop.f32.mrf.mxu0
    %v2544 = vpop.f32.mrf.mxu0
    %2545 = vdwg.mxu0
    %2546 = vmatprep.subr.bf16.mxu0 %v2235
    %2547 = vmatpush1.bf16.msra.mxu0 %v2234
    %2548 = vmatprep.subr.bf16.mxu0 %v2233
    %2549 = vmatpush1.bf16.msra.mxu0 %v2232
    %2550 = vmatprep.subr.bf16.mxu0 %v2231
    %2551 = vmatpush1.bf16.msra.mxu0 %v2230
    %2552 = vmatprep.subr.bf16.mxu0 %v2229
    %2553 = vmatpush1.bf16.msra.mxu0 %v2228
    %2554 = vmatprep.subr.bf16.mxu0 %v2227
    %2555 = vmatpush1.bf16.msra.mxu0 %v2226
    %2556 = vmatprep.subr.bf16.mxu0 %v2225
    %2557 = vmatpush1.bf16.msra.mxu0 %v2224
    %2558 = vmatprep.subr.bf16.mxu0 %v2223
    %2559 = vmatpush1.bf16.msra.mxu0 %v2222
    %2560 = vmatprep.subr.bf16.mxu0 %v2221
    %2561 = vmatpush1.bf16.msra.mxu0 %v2220
    %2562 = vmatprep.subr.bf16.mxu0 %v2251
    %2563 = vmatpush2.bf16.msra.mxu0 %v2250
    %2564 = vmatprep.subr.bf16.mxu0 %v2249
    %2565 = vmatpush2.bf16.msra.mxu0 %v2248
    %2566 = vmatprep.subr.bf16.mxu0 %v2247
    %2567 = vmatpush2.bf16.msra.mxu0 %v2246
    %2568 = vmatprep.subr.bf16.mxu0 %v2245
    %2569 = vmatpush2.bf16.msra.mxu0 %v2244
    %2570 = vmatprep.subr.bf16.mxu0 %v2243
    %2571 = vmatpush2.bf16.msra.mxu0 %v2242
    %2572 = vmatprep.subr.bf16.mxu0 %v2241
    %2573 = vmatpush2.bf16.msra.mxu0 %v2240
    %2574 = vmatprep.subr.bf16.mxu0 %v2239
    %2575 = vmatpush2.bf16.msra.mxu0 %v2238
    %2576 = vmatprep.subr.bf16.mxu0 %v2237
    %2577 = vmatpush2.bf16.msra.mxu0 %v2236
    %2578 = vmatprep.mubr.bf16.mxu0 %v1556
    %2579 = vmatmul.mubr.bf16.gmra.mxu0 %v1555
    %v2580 = vpop.f32.mrf.mxu0
    %v2581 = vadd.f32 %v2530, %v2580
    %v2582 = vpop.f32.mrf.mxu0
    %v2583 = vadd.f32 %v2532, %v2582
    %v2584 = vpop.f32.mrf.mxu0
    %v2585 = vadd.f32 %v2534, %v2584
    %v2586 = vpop.f32.mrf.mxu0
    %v2587 = vadd.f32 %v2536, %v2586
    %2588 = vmatprep.mubr.bf16.mxu0 %v1565
    %2589 = vmatmul.mubr.bf16.gmra.mxu0 %v1564
    %v2590 = vpop.f32.mrf.mxu0
    %v2591 = vadd.f32 %v2540, %v2590
    %v2592 = vpop.f32.mrf.mxu0
    %v2593 = vadd.f32 %v2542, %v2592
    %v2594 = vpop.f32.mrf.mxu0
    %v2595 = vpop.f32.mrf.mxu0
    %2596 = vdwg.mxu0
    %2597 = vmatprep.subr.bf16.mxu0 %v2267
    %2598 = vmatpush1.bf16.msra.mxu0 %v2266
    %2599 = vmatprep.subr.bf16.mxu0 %v2265
    %2600 = vmatpush1.bf16.msra.mxu0 %v2264
    %2601 = vmatprep.subr.bf16.mxu0 %v2263
    %2602 = vmatpush1.bf16.msra.mxu0 %v2262
    %2603 = vmatprep.subr.bf16.mxu0 %v2261
    %2604 = vmatpush1.bf16.msra.mxu0 %v2260
    %2605 = vmatprep.subr.bf16.mxu0 %v2259
    %2606 = vmatpush1.bf16.msra.mxu0 %v2258
    %2607 = vmatprep.subr.bf16.mxu0 %v2257
    %2608 = vmatpush1.bf16.msra.mxu0 %v2256
    %2609 = vmatprep.subr.bf16.mxu0 %v2255
    %2610 = vmatpush1.bf16.msra.mxu0 %v2254
    %2611 = vmatprep.subr.bf16.mxu0 %v2253
    %2612 = vmatpush1.bf16.msra.mxu0 %v2252
    %2613 = vmatprep.subr.bf16.mxu0 %v2283
    %2614 = vmatpush2.bf16.msra.mxu0 %v2282
    %2615 = vmatprep.subr.bf16.mxu0 %v2281
    %2616 = vmatpush2.bf16.msra.mxu0 %v2280
    %2617 = vmatprep.subr.bf16.mxu0 %v2279
    %2618 = vmatpush2.bf16.msra.mxu0 %v2278
    %2619 = vmatprep.subr.bf16.mxu0 %v2277
    %2620 = vmatpush2.bf16.msra.mxu0 %v2276
    %2621 = vmatprep.subr.bf16.mxu0 %v2275
    %2622 = vmatpush2.bf16.msra.mxu0 %v2274
    %2623 = vmatprep.subr.bf16.mxu0 %v2273
    %2624 = vmatpush2.bf16.msra.mxu0 %v2272
    %2625 = vmatprep.subr.bf16.mxu0 %v2271
    %2626 = vmatpush2.bf16.msra.mxu0 %v2270
    %2627 = vmatprep.subr.bf16.mxu0 %v2269
    %2628 = vmatpush2.bf16.msra.mxu0 %v2268
    %2629 = vmatprep.mubr.bf16.mxu0 %v1558
    %2630 = vmatmul.mubr.bf16.gmra.mxu0 %v1557
    %v2631 = vpop.f32.mrf.mxu0
    %v2632 = vadd.f32 %v2581, %v2631
    %v2633 = vpop.f32.mrf.mxu0
    %v2634 = vadd.f32 %v2583, %v2633
    %v2635 = vpop.f32.mrf.mxu0
    %v2636 = vadd.f32 %v2585, %v2635
    %v2637 = vpop.f32.mrf.mxu0
    %v2638 = vadd.f32 %v2587, %v2637
    %2639 = vmatprep.mubr.bf16.mxu0 %v1567
    %2640 = vmatmul.mubr.bf16.gmra.mxu0 %v1566
    %v2641 = vpop.f32.mrf.mxu0
    %v2642 = vadd.f32 %v2591, %v2641
    %v2643 = vpop.f32.mrf.mxu0
    %v2644 = vadd.f32 %v2593, %v2643
    %v2645 = vpop.f32.mrf.mxu0
    %v2646 = vpop.f32.mrf.mxu0
    %2647 = vdwg.mxu0
    %2648 = vmatprep.subr.bf16.mxu0 %v2299
    %2649 = vmatpush1.bf16.msra.mxu0 %v2298
    %2650 = vmatprep.subr.bf16.mxu0 %v2297
    %2651 = vmatpush1.bf16.msra.mxu0 %v2296
    %2652 = vmatprep.subr.bf16.mxu0 %v2295
    %2653 = vmatpush1.bf16.msra.mxu0 %v2294
    %2654 = vmatprep.subr.bf16.mxu0 %v2293
    %2655 = vmatpush1.bf16.msra.mxu0 %v2292
    %2656 = vmatprep.subr.bf16.mxu0 %v2291
    %2657 = vmatpush1.bf16.msra.mxu0 %v2290
    %2658 = vmatprep.subr.bf16.mxu0 %v2289
    %2659 = vmatpush1.bf16.msra.mxu0 %v2288
    %2660 = vmatprep.subr.bf16.mxu0 %v2287
    %2661 = vmatpush1.bf16.msra.mxu0 %v2286
    %2662 = vmatprep.subr.bf16.mxu0 %v2285
    %2663 = vmatpush1.bf16.msra.mxu0 %v2284
    %2664 = vmatprep.subr.bf16.mxu0 0
    %2665 = vmatpush2.bf16.msra.mxu0 0
    %2666 = vmatprep.subr.bf16.mxu0 0
    %2667 = vmatpush2.bf16.msra.mxu0 0
    %2668 = vmatprep.subr.bf16.mxu0 0
    %2669 = vmatpush2.bf16.msra.mxu0 0
    %2670 = vmatprep.subr.bf16.mxu0 0
    %2671 = vmatpush2.bf16.msra.mxu0 0
    %2672 = vmatprep.subr.bf16.mxu0 0
    %2673 = vmatpush2.bf16.msra.mxu0 0
    %2674 = vmatprep.subr.bf16.mxu0 0
    %2675 = vmatpush2.bf16.msra.mxu0 0
    %2676 = vmatprep.subr.bf16.mxu0 0
    %2677 = vmatpush2.bf16.msra.mxu0 0
    %2678 = vmatprep.subr.bf16.mxu0 0
    %2679 = vmatpush2.bf16.msra.mxu0 0
    %2680 = vmatprep.mubr.bf16.mxu0 0
    %2681 = vmatmul.mubr.bf16.gmra.mxu0 %v1559
    %v2682 = vpop.f32.mrf.mxu0
    %v2683 = vadd.f32 %v2632, %v2682
    %v2684 = vpop.f32.mrf.mxu0
    %v2685 = vadd.f32 %v2634, %v2684
    %v2686 = vpop.f32.mrf.mxu0
    %v2687 = vadd.f32 %v2636, %v2686
    %v2688 = vpop.f32.mrf.mxu0
    %v2689 = vadd.f32 %v2638, %v2688
    %2690 = vmatprep.mubr.bf16.mxu0 0
    %2691 = vmatmul.mubr.bf16.gmra.mxu0 %v1568
    %v2692 = vpop.f32.mrf.mxu0
    %v2693 = vadd.f32 %v2642, %v2692
    %v2694 = vpop.f32.mrf.mxu0
    %v2695 = vadd.f32 %v2644, %v2694
    %v2696 = vpop.f32.mrf.mxu0
    %v2697 = vpop.f32.mrf.mxu0
    %2698 = vdwg.mxu0
    %v2699 = vmax.f32 %v2683, 0.0
    %v2700 = vmax.f32 %v2685, 0.0
    %v2701 = vmax.f32 %v2687, 0.0
    %v2702 = vmax.f32 %v2689, 0.0
    %v2703 = vmax.f32 %v2693, 0.0
    %v2704 = vmax.f32 %v2695, 0.0
    %v2707 = vrot.slane %v2699, 2
    %v2708 = vrot.slane %v2700, 2
    %v2711 = vrot.slane %v2699, 4
    %v2712 = vrot.slane %v2700, 4
    %v2715 = vrot.slane %v2699, 6
    %v2716 = vrot.slane %v2700, 6
    %v2721 = vrot.slane %v2701, 2
    %v2722 = vrot.slane %v2702, 2
    %v2725 = vrot.slane %v2701, 4
    %v2726 = vrot.slane %v2702, 4
    %v2729 = vrot.slane %v2701, 6
    %v2730 = vrot.slane %v2702, 6
    %v2733 = vpack.c.bf16 %v2699, %v2699
    %v2734 = vpack.c.bf16 %v2700, %v2700
    %v2735 = vpack.c.bf16 %v2707, %v2707
    %v2736 = vpack.c.bf16 %v2708, %v2708
    %v2737 = vpack.c.bf16 %v2711, %v2711
    %v2738 = vpack.c.bf16 %v2712, %v2712
    %v2739 = vpack.c.bf16 %v2715, %v2715
    %v2740 = vpack.c.bf16 %v2716, %v2716
    %v2741 = vpack.c.bf16 %v2701, %v2701
    %v2742 = vpack.c.bf16 %v2702, %v2702
    %v2743 = vpack.c.bf16 %v2721, %v2721
    %v2744 = vpack.c.bf16 %v2722, %v2722
    %v2745 = vpack.c.bf16 %v2725, %v2725
    %v2746 = vpack.c.bf16 %v2726, %v2726
    %v2747 = vpack.c.bf16 %v2729, %v2729
    %v2748 = vpack.c.bf16 %v2730, %v2730
    %v2749 = vpack.c.bf16 %v2703, %v2703
    %v2750 = vpack.c.bf16 %v2704, %v2704
    %v2751 = vld [vmem:[#allocation8] sm:$0xff]
    %v2752 = vld [vmem:[#allocation8 + $0x8] sm:$0xff]
    %v2753 = vld [vmem:[#allocation8 + $0x10] sm:$0xff]
    %v2754 = vld [vmem:[#allocation8 + $0x18] sm:$0xff]
    %v2755 = vld [vmem:[#allocation8 + $0x20] sm:$0xff]
    %v2756 = vld [vmem:[#allocation8 + $0x28] sm:$0xff]
    %v2757 = vld [vmem:[#allocation8 + $0x30] sm:$0xff]
    %v2758 = vld [vmem:[#allocation8 + $0x38] sm:$0xff]
    %v2759 = vld [vmem:[#allocation8 + $0x40] sm:$0xff]
    %v2760 = vld [vmem:[#allocation8 + $0x48] sm:$0xff]
    %v2761 = vld [vmem:[#allocation8 + $0x50] sm:$0xff]
    %v2762 = vld [vmem:[#allocation8 + $0x58] sm:$0xff]
    %v2763 = vld [vmem:[#allocation8 + $0x60] sm:$0xff]
    %v2764 = vld [vmem:[#allocation8 + $0x68] sm:$0xff]
    %v2765 = vld [vmem:[#allocation8 + $0x70] sm:$0xff]
    %v2766 = vld [vmem:[#allocation8 + $0x78] sm:$0xff]
    %v2767 = vld [vmem:[#allocation8 + $0x80] sm:$0xff]
    %v2768 = vld [vmem:[#allocation8 + $0x88] sm:$0xff]
    %v2769 = vld [vmem:[#allocation8 + $0x90] sm:$0xff]
    %v2770 = vld [vmem:[#allocation8 + $0x98] sm:$0xff]
    %v2771 = vld [vmem:[#allocation8 + $0xa0] sm:$0xff]
    %v2772 = vld [vmem:[#allocation8 + $0xa8] sm:$0xff]
    %v2773 = vld [vmem:[#allocation8 + $0xb0] sm:$0xff]
    %v2774 = vld [vmem:[#allocation8 + $0xb8] sm:$0xff]
    %v2775 = vld [vmem:[#allocation8 + $0xc0] sm:$0xff]
    %v2776 = vld [vmem:[#allocation8 + $0xc8] sm:$0xff]
    %v2777 = vld [vmem:[#allocation8 + $0xd0] sm:$0xff]
    %v2778 = vld [vmem:[#allocation8 + $0xd8] sm:$0xff]
    %v2779 = vld [vmem:[#allocation8 + $0xe0] sm:$0xff]
    %v2780 = vld [vmem:[#allocation8 + $0xe8] sm:$0xff]
    %v2781 = vld [vmem:[#allocation8 + $0xf0] sm:$0xff]
    %v2782 = vld [vmem:[#allocation8 + $0xf8] sm:$0xff]
    %v2783 = vld [vmem:[#allocation8 + $0x100] sm:$0xff]
    %v2784 = vld [vmem:[#allocation8 + $0x108] sm:$0xff]
    %v2785 = vld [vmem:[#allocation8 + $0x110] sm:$0xff]
    %v2786 = vld [vmem:[#allocation8 + $0x118] sm:$0xff]
    %v2787 = vld [vmem:[#allocation8 + $0x120] sm:$0xff]
    %v2788 = vld [vmem:[#allocation8 + $0x128] sm:$0xff]
    %v2789 = vld [vmem:[#allocation8 + $0x130] sm:$0xff]
    %v2790 = vld [vmem:[#allocation8 + $0x138] sm:$0xff]
    %v2791 = vld [vmem:[#allocation8 + $0x140] sm:$0xff]
    %v2792 = vld [vmem:[#allocation8 + $0x148] sm:$0xff]
    %v2793 = vld [vmem:[#allocation8 + $0x150] sm:$0xff]
    %v2794 = vld [vmem:[#allocation8 + $0x158] sm:$0xff]
    %v2795 = vld [vmem:[#allocation8 + $0x160] sm:$0xff]
    %v2796 = vld [vmem:[#allocation8 + $0x168] sm:$0xff]
    %v2797 = vld [vmem:[#allocation8 + $0x170] sm:$0xff]
    %v2798 = vld [vmem:[#allocation8 + $0x178] sm:$0xff]
    %v2799 = vld [vmem:[#allocation8 + $0x180] sm:$0xff]
    %v2800 = vld [vmem:[#allocation8 + $0x188] sm:$0xff]
    %v2801 = vld [vmem:[#allocation8 + $0x190] sm:$0xff]
    %v2802 = vld [vmem:[#allocation8 + $0x198] sm:$0xff]
    %v2803 = vld [vmem:[#allocation8 + $0x1a0] sm:$0xff]
    %v2804 = vld [vmem:[#allocation8 + $0x1a8] sm:$0xff]
    %v2805 = vld [vmem:[#allocation8 + $0x1b0] sm:$0xff]
    %v2806 = vld [vmem:[#allocation8 + $0x1b8] sm:$0xff]
    %v2807 = vld [vmem:[#allocation8 + $0x1c0] sm:$0xff]
    %v2808 = vld [vmem:[#allocation8 + $0x1c8] sm:$0xff]
    %v2809 = vld [vmem:[#allocation8 + $0x1d0] sm:$0xff]
    %v2810 = vld [vmem:[#allocation8 + $0x1d8] sm:$0xff]
    %v2811 = vld [vmem:[#allocation8 + $0x1e0] sm:$0xff]
    %v2812 = vld [vmem:[#allocation8 + $0x1e8] sm:$0xff]
    %v2813 = vld [vmem:[#allocation8 + $0x1f0] sm:$0xff]
    %v2814 = vld [vmem:[#allocation8 + $0x1f8] sm:$0xff]
    %v2815 = vld [vmem:[#allocation8 + $0x200] sm:$0xff]
    %v2816 = vld [vmem:[#allocation8 + $0x208] sm:$0xff]
    %v2817 = vld [vmem:[#allocation8 + $0x210] sm:$0xff]
    %v2818 = vld [vmem:[#allocation8 + $0x218] sm:$0xff]
    %v2819 = vld [vmem:[#allocation8 + $0x220] sm:$0xff]
    %v2820 = vld [vmem:[#allocation8 + $0x228] sm:$0xff]
    %v2821 = vld [vmem:[#allocation8 + $0x230] sm:$0xff]
    %v2822 = vld [vmem:[#allocation8 + $0x238] sm:$0xff]
    %v2823 = vld [vmem:[#allocation8 + $0x240] sm:$0xff]
    %v2824 = vld [vmem:[#allocation8 + $0x248] sm:$0xff]
    %v2825 = vld [vmem:[#allocation8 + $0x250] sm:$0xff]
    %v2826 = vld [vmem:[#allocation8 + $0x258] sm:$0xff]
    %v2827 = vld [vmem:[#allocation8 + $0x260] sm:$0xff]
    %v2828 = vld [vmem:[#allocation8 + $0x268] sm:$0xff]
    %v2829 = vld [vmem:[#allocation8 + $0x270] sm:$0xff]
    %v2830 = vld [vmem:[#allocation8 + $0x278] sm:$0xff]
    %v2831 = vld [vmem:[#allocation8 + $0x280] sm:$0xff]
    %v2832 = vld [vmem:[#allocation8 + $0x288] sm:$0xff]
    %v2833 = vld [vmem:[#allocation8 + $0x290] sm:$0xff]
    %v2834 = vld [vmem:[#allocation8 + $0x298] sm:$0xff]
    %v2835 = vld [vmem:[#allocation8 + $0x2a0] sm:$0xff]
    %v2836 = vld [vmem:[#allocation8 + $0x2a8] sm:$0xff]
    %v2837 = vld [vmem:[#allocation8 + $0x2b0] sm:$0xff]
    %v2838 = vld [vmem:[#allocation8 + $0x2b8] sm:$0xff]
    %v2839 = vld [vmem:[#allocation8 + $0x2c0] sm:$0xff]
    %v2840 = vld [vmem:[#allocation8 + $0x2c8] sm:$0xff]
    %v2841 = vld [vmem:[#allocation8 + $0x2d0] sm:$0xff]
    %v2842 = vld [vmem:[#allocation8 + $0x2d8] sm:$0xff]
    %v2843 = vld [vmem:[#allocation8 + $0x2e0] sm:$0xff]
    %v2844 = vld [vmem:[#allocation8 + $0x2e8] sm:$0xff]
    %v2845 = vld [vmem:[#allocation8 + $0x2f0] sm:$0xff]
    %v2846 = vld [vmem:[#allocation8 + $0x2f8] sm:$0xff]
    %v2847 = vld [vmem:[#allocation8 + $0x300] sm:$0xff]
    %v2848 = vld [vmem:[#allocation8 + $0x308] sm:$0xff]
    %v2849 = vld [vmem:[#allocation8 + $0x310] sm:$0xff]
    %v2850 = vld [vmem:[#allocation8 + $0x318] sm:$0xff]
    %v2851 = vld [vmem:[#allocation8 + $0x320] sm:$0xff]
    %v2852 = vld [vmem:[#allocation8 + $0x328] sm:$0xff]
    %v2853 = vld [vmem:[#allocation8 + $0x330] sm:$0xff]
    %v2854 = vld [vmem:[#allocation8 + $0x338] sm:$0xff]
    %v2855 = vld [vmem:[#allocation8 + $0x340] sm:$0xff]
    %v2856 = vld [vmem:[#allocation8 + $0x348] sm:$0xff]
    %v2857 = vld [vmem:[#allocation8 + $0x350] sm:$0xff]
    %v2858 = vld [vmem:[#allocation8 + $0x358] sm:$0xff]
    %v2859 = vld [vmem:[#allocation8 + $0x360] sm:$0xff]
    %v2860 = vld [vmem:[#allocation8 + $0x368] sm:$0xff]
    %v2861 = vld [vmem:[#allocation8 + $0x370] sm:$0xff]
    %v2862 = vld [vmem:[#allocation8 + $0x378] sm:$0xff]
    %v2863 = vld [vmem:[#allocation8 + $0x380] sm:$0xff]
    %v2864 = vld [vmem:[#allocation8 + $0x388] sm:$0xff]
    %v2865 = vld [vmem:[#allocation8 + $0x390] sm:$0xff]
    %v2866 = vld [vmem:[#allocation8 + $0x398] sm:$0xff]
    %v2867 = vld [vmem:[#allocation8 + $0x3a0] sm:$0xff]
    %v2868 = vld [vmem:[#allocation8 + $0x3a8] sm:$0xff]
    %v2869 = vld [vmem:[#allocation8 + $0x3b0] sm:$0xff]
    %v2870 = vld [vmem:[#allocation8 + $0x3b8] sm:$0xff]
    %v2871 = vld [vmem:[#allocation8 + $0x3c0] sm:$0xff]
    %v2872 = vld [vmem:[#allocation8 + $0x3c8] sm:$0xff]
    %v2873 = vld [vmem:[#allocation8 + $0x3d0] sm:$0xff]
    %v2874 = vld [vmem:[#allocation8 + $0x3d8] sm:$0xff]
    %v2875 = vld [vmem:[#allocation8 + $0x3e0] sm:$0xff]
    %v2876 = vld [vmem:[#allocation8 + $0x3e8] sm:$0xff]
    %v2877 = vld [vmem:[#allocation8 + $0x3f0] sm:$0xff]
    %v2878 = vld [vmem:[#allocation8 + $0x3f8] sm:$0xff]
    %v2879 = vld [vmem:[#allocation8 + $0x400] sm:$0xff]
    %v2880 = vld [vmem:[#allocation8 + $0x408] sm:$0xff]
    %v2881 = vld [vmem:[#allocation8 + $0x410] sm:$0xff]
    %v2882 = vld [vmem:[#allocation8 + $0x418] sm:$0xff]
    %v2883 = vld [vmem:[#allocation8 + $0x420] sm:$0xff]
    %v2884 = vld [vmem:[#allocation8 + $0x428] sm:$0xff]
    %v2885 = vld [vmem:[#allocation8 + $0x430] sm:$0xff]
    %v2886 = vld [vmem:[#allocation8 + $0x438] sm:$0xff]
    %v2887 = vld [vmem:[#allocation8 + $0x440] sm:$0xff]
    %v2888 = vld [vmem:[#allocation8 + $0x448] sm:$0xff]
    %v2889 = vld [vmem:[#allocation8 + $0x450] sm:$0xff]
    %v2890 = vld [vmem:[#allocation8 + $0x458] sm:$0xff]
    %v2891 = vld [vmem:[#allocation8 + $0x460] sm:$0xff]
    %v2892 = vld [vmem:[#allocation8 + $0x468] sm:$0xff]
    %v2893 = vld [vmem:[#allocation8 + $0x470] sm:$0xff]
    %v2894 = vld [vmem:[#allocation8 + $0x478] sm:$0xff]
    %v2895 = vld [vmem:[#allocation8 + $0x480] sm:$0xff]
    %v2896 = vld [vmem:[#allocation8 + $0x488] sm:$0xff]
    %v2897 = vld [vmem:[#allocation8 + $0x490] sm:$0xff]
    %v2898 = vld [vmem:[#allocation8 + $0x498] sm:$0xff]
    %v2899 = vld [vmem:[#allocation8 + $0x4a0] sm:$0xff]
    %v2900 = vld [vmem:[#allocation8 + $0x4a8] sm:$0xff]
    %v2901 = vld [vmem:[#allocation8 + $0x4b0] sm:$0xff]
    %v2902 = vld [vmem:[#allocation8 + $0x4b8] sm:$0xff]
    %v2903 = vld [vmem:[#allocation8 + $0x4c0] sm:$0xff]
    %v2904 = vld [vmem:[#allocation8 + $0x4c8] sm:$0xff]
    %v2905 = vld [vmem:[#allocation8 + $0x4d0] sm:$0xff]
    %v2906 = vld [vmem:[#allocation8 + $0x4d8] sm:$0xff]
    %v2907 = vld [vmem:[#allocation8 + $0x4e0] sm:$0xff]
    %v2908 = vld [vmem:[#allocation8 + $0x4e8] sm:$0xff]
    %v2909 = vld [vmem:[#allocation8 + $0x4f0] sm:$0xff]
    %v2910 = vld [vmem:[#allocation8 + $0x4f8] sm:$0xff]
    %v2911 = vld [vmem:[#allocation8 + $0x500] sm:$0xff]
    %v2912 = vld [vmem:[#allocation8 + $0x508] sm:$0xff]
    %v2913 = vld [vmem:[#allocation8 + $0x510] sm:$0xff]
    %v2914 = vld [vmem:[#allocation8 + $0x518] sm:$0xff]
    %v2915 = vld [vmem:[#allocation8 + $0x520] sm:$0xff]
    %v2916 = vld [vmem:[#allocation8 + $0x528] sm:$0xff]
    %v2917 = vld [vmem:[#allocation8 + $0x530] sm:$0xff]
    %v2918 = vld [vmem:[#allocation8 + $0x538] sm:$0xff]
    %v2919 = vld [vmem:[#allocation8 + $0x540] sm:$0xff]
    %v2920 = vld [vmem:[#allocation8 + $0x548] sm:$0xff]
    %v2921 = vld [vmem:[#allocation8 + $0x550] sm:$0xff]
    %v2922 = vld [vmem:[#allocation8 + $0x558] sm:$0xff]
    %v2923 = vld [vmem:[#allocation8 + $0x560] sm:$0xff]
    %v2924 = vld [vmem:[#allocation8 + $0x568] sm:$0xff]
    %v2925 = vld [vmem:[#allocation8 + $0x570] sm:$0xff]
    %v2926 = vld [vmem:[#allocation8 + $0x578] sm:$0xff]
    %v2927 = vld [vmem:[#allocation8 + $0x580] sm:$0xff]
    %v2928 = vld [vmem:[#allocation8 + $0x588] sm:$0xff]
    %v2929 = vld [vmem:[#allocation8 + $0x590] sm:$0xff]
    %v2930 = vld [vmem:[#allocation8 + $0x598] sm:$0xff]
    %v2931 = vld [vmem:[#allocation8 + $0x5a0] sm:$0xff]
    %v2932 = vld [vmem:[#allocation8 + $0x5a8] sm:$0xff]
    %v2933 = vld [vmem:[#allocation8 + $0x5b0] sm:$0xff]
    %v2934 = vld [vmem:[#allocation8 + $0x5b8] sm:$0xff]
    %v2935 = vld [vmem:[#allocation8 + $0x5c0] sm:$0xff]
    %v2936 = vld [vmem:[#allocation8 + $0x5c8] sm:$0xff]
    %v2937 = vld [vmem:[#allocation8 + $0x5d0] sm:$0xff]
    %v2938 = vld [vmem:[#allocation8 + $0x5d8] sm:$0xff]
    %v2939 = vld [vmem:[#allocation8 + $0x5e0] sm:$0xff]
    %v2940 = vld [vmem:[#allocation8 + $0x5e8] sm:$0xff]
    %v2941 = vld [vmem:[#allocation8 + $0x5f0] sm:$0xff]
    %v2942 = vld [vmem:[#allocation8 + $0x5f8] sm:$0xff]
    %v2943 = vld [vmem:[#allocation8 + $0x600] sm:$0xff]
    %v2944 = vld [vmem:[#allocation8 + $0x608] sm:$0xff]
    %v2945 = vld [vmem:[#allocation8 + $0x610] sm:$0xff]
    %v2946 = vld [vmem:[#allocation8 + $0x618] sm:$0xff]
    %v2947 = vld [vmem:[#allocation8 + $0x620] sm:$0xff]
    %v2948 = vld [vmem:[#allocation8 + $0x628] sm:$0xff]
    %v2949 = vld [vmem:[#allocation8 + $0x630] sm:$0xff]
    %v2950 = vld [vmem:[#allocation8 + $0x638] sm:$0xff]
    %v2951 = vld [vmem:[#allocation8 + $0x640] sm:$0xff]
    %v2952 = vld [vmem:[#allocation8 + $0x648] sm:$0xff]
    %v2953 = vld [vmem:[#allocation8 + $0x650] sm:$0xff]
    %v2954 = vld [vmem:[#allocation8 + $0x658] sm:$0xff]
    %v2955 = vld [vmem:[#allocation8 + $0x660] sm:$0xff]
    %v2956 = vld [vmem:[#allocation8 + $0x668] sm:$0xff]
    %v2957 = vld [vmem:[#allocation8 + $0x670] sm:$0xff]
    %v2958 = vld [vmem:[#allocation8 + $0x678] sm:$0xff]
    %v2959 = vld [vmem:[#allocation8 + $0x680] sm:$0xff]
    %v2960 = vld [vmem:[#allocation8 + $0x688] sm:$0xff]
    %v2961 = vld [vmem:[#allocation8 + $0x690] sm:$0xff]
    %v2962 = vld [vmem:[#allocation8 + $0x698] sm:$0xff]
    %v2963 = vld [vmem:[#allocation8 + $0x6a0] sm:$0xff]
    %v2964 = vld [vmem:[#allocation8 + $0x6a8] sm:$0xff]
    %v2965 = vld [vmem:[#allocation8 + $0x6b0] sm:$0xff]
    %v2966 = vld [vmem:[#allocation8 + $0x6b8] sm:$0xff]
    %v2967 = vld [vmem:[#allocation8 + $0x6c0] sm:$0xff]
    %v2968 = vld [vmem:[#allocation8 + $0x6c8] sm:$0xff]
    %v2969 = vld [vmem:[#allocation8 + $0x6d0] sm:$0xff]
    %v2970 = vld [vmem:[#allocation8 + $0x6d8] sm:$0xff]
    %v2971 = vld [vmem:[#allocation8 + $0x6e0] sm:$0xff]
    %v2972 = vld [vmem:[#allocation8 + $0x6e8] sm:$0xff]
    %v2973 = vld [vmem:[#allocation8 + $0x6f0] sm:$0xff]
    %v2974 = vld [vmem:[#allocation8 + $0x6f8] sm:$0xff]
    %v2975 = vld [vmem:[#allocation8 + $0x700] sm:$0xff]
    %v2976 = vld [vmem:[#allocation8 + $0x708] sm:$0xff]
    %v2977 = vld [vmem:[#allocation8 + $0x710] sm:$0xff]
    %v2978 = vld [vmem:[#allocation8 + $0x718] sm:$0xff]
    %v2979 = vld [vmem:[#allocation8 + $0x720] sm:$0xff]
    %v2980 = vld [vmem:[#allocation8 + $0x728] sm:$0xff]
    %v2981 = vld [vmem:[#allocation8 + $0x730] sm:$0xff]
    %v2982 = vld [vmem:[#allocation8 + $0x738] sm:$0xff]
    %v2983 = vld [vmem:[#allocation8 + $0x740] sm:$0xff]
    %v2984 = vld [vmem:[#allocation8 + $0x748] sm:$0xff]
    %v2985 = vld [vmem:[#allocation8 + $0x750] sm:$0xff]
    %v2986 = vld [vmem:[#allocation8 + $0x758] sm:$0xff]
    %v2987 = vld [vmem:[#allocation8 + $0x760] sm:$0xff]
    %v2988 = vld [vmem:[#allocation8 + $0x768] sm:$0xff]
    %v2989 = vld [vmem:[#allocation8 + $0x770] sm:$0xff]
    %v2990 = vld [vmem:[#allocation8 + $0x778] sm:$0xff]
    %v2991 = vld [vmem:[#allocation8 + $0x780] sm:$0xff]
    %v2992 = vld [vmem:[#allocation8 + $0x788] sm:$0xff]
    %v2993 = vld [vmem:[#allocation8 + $0x790] sm:$0xff]
    %v2994 = vld [vmem:[#allocation8 + $0x798] sm:$0xff]
    %v2995 = vld [vmem:[#allocation8 + $0x7a0] sm:$0xff]
    %v2996 = vld [vmem:[#allocation8 + $0x7a8] sm:$0xff]
    %v2997 = vld [vmem:[#allocation8 + $0x7b0] sm:$0xff]
    %v2998 = vld [vmem:[#allocation8 + $0x7b8] sm:$0xff]
    %v2999 = vld [vmem:[#allocation8 + $0x7c0] sm:$0xff]
    %v3000 = vld [vmem:[#allocation8 + $0x7c8] sm:$0xff]
    %v3001 = vld [vmem:[#allocation8 + $0x7d0] sm:$0xff]
    %v3002 = vld [vmem:[#allocation8 + $0x7d8] sm:$0xff]
    %v3003 = vld [vmem:[#allocation8 + $0x7e0] sm:$0xff]
    %v3004 = vld [vmem:[#allocation8 + $0x7e8] sm:$0xff]
    %v3005 = vld [vmem:[#allocation8 + $0x7f0] sm:$0xff]
    %v3006 = vld [vmem:[#allocation8 + $0x7f8] sm:$0xff]
    %v3007 = vld [vmem:[#allocation8 + $0x800] sm:$0xff]
    %v3008 = vld [vmem:[#allocation8 + $0x808] sm:$0xff]
    %v3009 = vld [vmem:[#allocation8 + $0x810] sm:$0xff]
    %v3010 = vld [vmem:[#allocation8 + $0x818] sm:$0xff]
    %v3011 = vld [vmem:[#allocation8 + $0x820] sm:$0xff]
    %v3012 = vld [vmem:[#allocation8 + $0x828] sm:$0xff]
    %v3013 = vld [vmem:[#allocation8 + $0x830] sm:$0xff]
    %v3014 = vld [vmem:[#allocation8 + $0x838] sm:$0xff]
    %v3015 = vld [vmem:[#allocation8 + $0x840] sm:$0xff]
    %v3016 = vld [vmem:[#allocation8 + $0x848] sm:$0xff]
    %v3017 = vld [vmem:[#allocation8 + $0x850] sm:$0xff]
    %v3018 = vld [vmem:[#allocation8 + $0x858] sm:$0xff]
    %v3019 = vld [vmem:[#allocation8 + $0x860] sm:$0xff]
    %v3020 = vld [vmem:[#allocation8 + $0x868] sm:$0xff]
    %v3021 = vld [vmem:[#allocation8 + $0x870] sm:$0xff]
    %v3022 = vld [vmem:[#allocation8 + $0x878] sm:$0xff]
    %v3023 = vld [vmem:[#allocation8 + $0x880] sm:$0xff]
    %v3024 = vld [vmem:[#allocation8 + $0x888] sm:$0xff]
    %v3025 = vld [vmem:[#allocation8 + $0x890] sm:$0xff]
    %v3026 = vld [vmem:[#allocation8 + $0x898] sm:$0xff]
    %v3027 = vld [vmem:[#allocation8 + $0x8a0] sm:$0xff]
    %v3028 = vld [vmem:[#allocation8 + $0x8a8] sm:$0xff]
    %v3029 = vld [vmem:[#allocation8 + $0x8b0] sm:$0xff]
    %v3030 = vld [vmem:[#allocation8 + $0x8b8] sm:$0xff]
    %v3031 = vld [vmem:[#allocation8 + $0x8c0] sm:$0xff]
    %v3032 = vld [vmem:[#allocation8 + $0x8c8] sm:$0xff]
    %v3033 = vld [vmem:[#allocation8 + $0x8d0] sm:$0xff]
    %v3034 = vld [vmem:[#allocation8 + $0x8d8] sm:$0xff]
    %v3035 = vld [vmem:[#allocation8 + $0x8e0] sm:$0xff]
    %v3036 = vld [vmem:[#allocation8 + $0x8e8] sm:$0xff]
    %v3037 = vld [vmem:[#allocation8 + $0x8f0] sm:$0xff]
    %v3038 = vld [vmem:[#allocation8 + $0x8f8] sm:$0xff]
    %s3039 = scalar_lea.vmem [#allocation2], 6
    %v3040 = vld [vmem:[%s3039] ss:$8 sm:$0x3]
    %v3042 = vlaneseq
    %v3043 = vshrl.u32 %v3042, 7
    %v3044 = vsub.s32 0, %v3043
    %v3045 = vrot.slane %v3040, %v3044
    %v3046 = vlaneseq
    %v3047 = vshrl.u32 %v3046, 7
    %v3048 = vsub.s32 1, %v3047
    %v3049 = vrot.slane %v3040, %v3048
    %v3340 = vunpack.c.l.b16 %v2751
    %v3341 = vunpack.c.h.b16 %v2751
    %v3342 = vunpack.c.l.b16 %v2752
    %v3343 = vunpack.c.h.b16 %v2752
    %v3344 = vunpack.c.l.b16 %v2753
    %v3345 = vunpack.c.h.b16 %v2753
    %v3346 = vunpack.c.l.b16 %v2754
    %v3347 = vunpack.c.h.b16 %v2754
    %v3348 = vunpack.c.l.b16 %v2755
    %v3349 = vunpack.c.h.b16 %v2755
    %v3350 = vunpack.c.l.b16 %v2756
    %v3351 = vunpack.c.h.b16 %v2756
    %v3352 = vunpack.c.l.b16 %v2757
    %v3353 = vunpack.c.h.b16 %v2757
    %v3354 = vunpack.c.l.b16 %v2758
    %v3355 = vunpack.c.h.b16 %v2758
    %v3356 = vunpack.c.l.b16 %v2759
    %v3357 = vunpack.c.h.b16 %v2759
    %v3358 = vunpack.c.l.b16 %v2760
    %v3359 = vunpack.c.h.b16 %v2760
    %v3360 = vunpack.c.l.b16 %v2761
    %v3361 = vunpack.c.h.b16 %v2761
    %v3362 = vunpack.c.l.b16 %v2762
    %v3363 = vunpack.c.h.b16 %v2762
    %v3364 = vunpack.c.l.b16 %v2763
    %v3365 = vunpack.c.h.b16 %v2763
    %v3366 = vunpack.c.l.b16 %v2764
    %v3367 = vunpack.c.h.b16 %v2764
    %v3368 = vunpack.c.l.b16 %v2765
    %v3369 = vunpack.c.h.b16 %v2765
    %v3370 = vunpack.c.l.b16 %v2766
    %v3371 = vunpack.c.h.b16 %v2766
    %v3372 = vunpack.c.l.b16 %v2767
    %v3373 = vunpack.c.h.b16 %v2767
    %v3374 = vunpack.c.l.b16 %v2768
    %v3375 = vunpack.c.h.b16 %v2768
    %v3376 = vunpack.c.l.b16 %v2769
    %v3377 = vunpack.c.h.b16 %v2769
    %v3378 = vunpack.c.l.b16 %v2770
    %v3379 = vunpack.c.h.b16 %v2770
    %v3380 = vunpack.c.l.b16 %v2771
    %v3381 = vunpack.c.h.b16 %v2771
    %v3382 = vunpack.c.l.b16 %v2772
    %v3383 = vunpack.c.h.b16 %v2772
    %v3384 = vunpack.c.l.b16 %v2773
    %v3385 = vunpack.c.h.b16 %v2773
    %v3386 = vunpack.c.l.b16 %v2774
    %v3387 = vunpack.c.h.b16 %v2774
    %v3388 = vunpack.c.l.b16 %v2775
    %v3389 = vunpack.c.h.b16 %v2775
    %v3390 = vunpack.c.l.b16 %v2776
    %v3391 = vunpack.c.h.b16 %v2776
    %v3392 = vunpack.c.l.b16 %v2777
    %v3393 = vunpack.c.h.b16 %v2777
    %v3394 = vunpack.c.l.b16 %v2778
    %v3395 = vunpack.c.h.b16 %v2778
    %v3396 = vunpack.c.l.b16 %v2779
    %v3397 = vunpack.c.h.b16 %v2779
    %v3398 = vunpack.c.l.b16 %v2780
    %v3399 = vunpack.c.h.b16 %v2780
    %v3400 = vunpack.c.l.b16 %v2781
    %v3401 = vunpack.c.h.b16 %v2781
    %v3402 = vunpack.c.l.b16 %v2782
    %v3403 = vunpack.c.h.b16 %v2782
    %v3404 = vunpack.c.l.b16 %v2783
    %v3405 = vunpack.c.h.b16 %v2783
    %v3406 = vunpack.c.l.b16 %v2784
    %v3407 = vunpack.c.h.b16 %v2784
    %v3408 = vunpack.c.l.b16 %v2785
    %v3409 = vunpack.c.h.b16 %v2785
    %v3410 = vunpack.c.l.b16 %v2786
    %v3411 = vunpack.c.h.b16 %v2786
    %v3412 = vunpack.c.l.b16 %v2787
    %v3413 = vunpack.c.h.b16 %v2787
    %v3414 = vunpack.c.l.b16 %v2788
    %v3415 = vunpack.c.h.b16 %v2788
    %v3416 = vunpack.c.l.b16 %v2789
    %v3417 = vunpack.c.h.b16 %v2789
    %v3418 = vunpack.c.l.b16 %v2790
    %v3419 = vunpack.c.h.b16 %v2790
    %v3420 = vunpack.c.l.b16 %v2791
    %v3421 = vunpack.c.h.b16 %v2791
    %v3422 = vunpack.c.l.b16 %v2792
    %v3423 = vunpack.c.h.b16 %v2792
    %v3424 = vunpack.c.l.b16 %v2793
    %v3425 = vunpack.c.h.b16 %v2793
    %v3426 = vunpack.c.l.b16 %v2794
    %v3427 = vunpack.c.h.b16 %v2794
    %v3428 = vunpack.c.l.b16 %v2795
    %v3429 = vunpack.c.h.b16 %v2795
    %v3430 = vunpack.c.l.b16 %v2796
    %v3431 = vunpack.c.h.b16 %v2796
    %v3432 = vunpack.c.l.b16 %v2797
    %v3433 = vunpack.c.h.b16 %v2797
    %v3434 = vunpack.c.l.b16 %v2798
    %v3435 = vunpack.c.h.b16 %v2798
    %v3436 = vunpack.c.l.b16 %v2799
    %v3437 = vunpack.c.h.b16 %v2799
    %v3438 = vunpack.c.l.b16 %v2800
    %v3439 = vunpack.c.h.b16 %v2800
    %v3440 = vunpack.c.l.b16 %v2801
    %v3441 = vunpack.c.h.b16 %v2801
    %v3442 = vunpack.c.l.b16 %v2802
    %v3443 = vunpack.c.h.b16 %v2802
    %v3444 = vunpack.c.l.b16 %v2803
    %v3445 = vunpack.c.h.b16 %v2803
    %v3446 = vunpack.c.l.b16 %v2804
    %v3447 = vunpack.c.h.b16 %v2804
    %v3448 = vunpack.c.l.b16 %v2805
    %v3449 = vunpack.c.h.b16 %v2805
    %v3450 = vunpack.c.l.b16 %v2806
    %v3451 = vunpack.c.h.b16 %v2806
    %v3452 = vunpack.c.l.b16 %v2807
    %v3453 = vunpack.c.h.b16 %v2807
    %v3454 = vunpack.c.l.b16 %v2808
    %v3455 = vunpack.c.h.b16 %v2808
    %v3456 = vunpack.c.l.b16 %v2809
    %v3457 = vunpack.c.h.b16 %v2809
    %v3458 = vunpack.c.l.b16 %v2810
    %v3459 = vunpack.c.h.b16 %v2810
    %v3460 = vunpack.c.l.b16 %v2811
    %v3461 = vunpack.c.h.b16 %v2811
    %v3462 = vunpack.c.l.b16 %v2812
    %v3463 = vunpack.c.h.b16 %v2812
    %v3464 = vunpack.c.l.b16 %v2813
    %v3465 = vunpack.c.h.b16 %v2813
    %v3466 = vunpack.c.l.b16 %v2814
    %v3467 = vunpack.c.h.b16 %v2814
    %v3468 = vunpack.c.l.b16 %v2815
    %v3469 = vunpack.c.h.b16 %v2815
    %v3470 = vunpack.c.l.b16 %v2816
    %v3471 = vunpack.c.h.b16 %v2816
    %v3472 = vunpack.c.l.b16 %v2817
    %v3473 = vunpack.c.h.b16 %v2817
    %v3474 = vunpack.c.l.b16 %v2818
    %v3475 = vunpack.c.h.b16 %v2818
    %v3476 = vunpack.c.l.b16 %v2819
    %v3477 = vunpack.c.h.b16 %v2819
    %v3478 = vunpack.c.l.b16 %v2820
    %v3479 = vunpack.c.h.b16 %v2820
    %v3480 = vunpack.c.l.b16 %v2821
    %v3481 = vunpack.c.h.b16 %v2821
    %v3482 = vunpack.c.l.b16 %v2822
    %v3483 = vunpack.c.h.b16 %v2822
    %v3484 = vunpack.c.l.b16 %v2823
    %v3485 = vunpack.c.h.b16 %v2823
    %v3486 = vunpack.c.l.b16 %v2824
    %v3487 = vunpack.c.h.b16 %v2824
    %v3488 = vunpack.c.l.b16 %v2825
    %v3489 = vunpack.c.h.b16 %v2825
    %v3490 = vunpack.c.l.b16 %v2826
    %v3491 = vunpack.c.h.b16 %v2826
    %v3492 = vunpack.c.l.b16 %v2827
    %v3493 = vunpack.c.h.b16 %v2827
    %v3494 = vunpack.c.l.b16 %v2828
    %v3495 = vunpack.c.h.b16 %v2828
    %v3496 = vunpack.c.l.b16 %v2829
    %v3497 = vunpack.c.h.b16 %v2829
    %v3498 = vunpack.c.l.b16 %v2830
    %v3499 = vunpack.c.h.b16 %v2830
    %v3500 = vunpack.c.l.b16 %v2831
    %v3501 = vunpack.c.h.b16 %v2831
    %v3502 = vunpack.c.l.b16 %v2832
    %v3503 = vunpack.c.h.b16 %v2832
    %v3504 = vunpack.c.l.b16 %v2833
    %v3505 = vunpack.c.h.b16 %v2833
    %v3506 = vunpack.c.l.b16 %v2834
    %v3507 = vunpack.c.h.b16 %v2834
    %v3508 = vunpack.c.l.b16 %v2835
    %v3509 = vunpack.c.h.b16 %v2835
    %v3510 = vunpack.c.l.b16 %v2836
    %v3511 = vunpack.c.h.b16 %v2836
    %v3512 = vunpack.c.l.b16 %v2837
    %v3513 = vunpack.c.h.b16 %v2837
    %v3514 = vunpack.c.l.b16 %v2838
    %v3515 = vunpack.c.h.b16 %v2838
    %v3516 = vunpack.c.l.b16 %v2839
    %v3517 = vunpack.c.h.b16 %v2839
    %v3518 = vunpack.c.l.b16 %v2840
    %v3519 = vunpack.c.h.b16 %v2840
    %v3520 = vunpack.c.l.b16 %v2841
    %v3521 = vunpack.c.h.b16 %v2841
    %v3522 = vunpack.c.l.b16 %v2842
    %v3523 = vunpack.c.h.b16 %v2842
    %v3524 = vunpack.c.l.b16 %v2843
    %v3525 = vunpack.c.h.b16 %v2843
    %v3526 = vunpack.c.l.b16 %v2844
    %v3527 = vunpack.c.h.b16 %v2844
    %v3528 = vunpack.c.l.b16 %v2845
    %v3529 = vunpack.c.h.b16 %v2845
    %v3530 = vunpack.c.l.b16 %v2846
    %v3531 = vunpack.c.h.b16 %v2846
    %v3532 = vunpack.c.l.b16 %v2847
    %v3533 = vunpack.c.h.b16 %v2847
    %v3534 = vunpack.c.l.b16 %v2848
    %v3535 = vunpack.c.h.b16 %v2848
    %v3536 = vunpack.c.l.b16 %v2849
    %v3537 = vunpack.c.h.b16 %v2849
    %v3538 = vunpack.c.l.b16 %v2850
    %v3539 = vunpack.c.h.b16 %v2850
    %v3540 = vunpack.c.l.b16 %v2851
    %v3541 = vunpack.c.h.b16 %v2851
    %v3542 = vunpack.c.l.b16 %v2852
    %v3543 = vunpack.c.h.b16 %v2852
    %v3544 = vunpack.c.l.b16 %v2853
    %v3545 = vunpack.c.h.b16 %v2853
    %v3546 = vunpack.c.l.b16 %v2854
    %v3547 = vunpack.c.h.b16 %v2854
    %v3548 = vunpack.c.l.b16 %v2855
    %v3549 = vunpack.c.h.b16 %v2855
    %v3550 = vunpack.c.l.b16 %v2856
    %v3551 = vunpack.c.h.b16 %v2856
    %v3552 = vunpack.c.l.b16 %v2857
    %v3553 = vunpack.c.h.b16 %v2857
    %v3554 = vunpack.c.l.b16 %v2858
    %v3555 = vunpack.c.h.b16 %v2858
    %v3556 = vunpack.c.l.b16 %v2859
    %v3557 = vunpack.c.h.b16 %v2859
    %v3558 = vunpack.c.l.b16 %v2860
    %v3559 = vunpack.c.h.b16 %v2860
    %v3560 = vunpack.c.l.b16 %v2861
    %v3561 = vunpack.c.h.b16 %v2861
    %v3562 = vunpack.c.l.b16 %v2862
    %v3563 = vunpack.c.h.b16 %v2862
    %v3564 = vunpack.c.l.b16 %v2863
    %v3565 = vunpack.c.h.b16 %v2863
    %v3566 = vunpack.c.l.b16 %v2864
    %v3567 = vunpack.c.h.b16 %v2864
    %v3568 = vunpack.c.l.b16 %v2865
    %v3569 = vunpack.c.h.b16 %v2865
    %v3570 = vunpack.c.l.b16 %v2866
    %v3571 = vunpack.c.h.b16 %v2866
    %v3572 = vunpack.c.l.b16 %v2867
    %v3573 = vunpack.c.h.b16 %v2867
    %v3574 = vunpack.c.l.b16 %v2868
    %v3575 = vunpack.c.h.b16 %v2868
    %v3576 = vunpack.c.l.b16 %v2869
    %v3577 = vunpack.c.h.b16 %v2869
    %v3578 = vunpack.c.l.b16 %v2870
    %v3579 = vunpack.c.h.b16 %v2870
    %v3580 = vunpack.c.l.b16 %v2871
    %v3581 = vunpack.c.h.b16 %v2871
    %v3582 = vunpack.c.l.b16 %v2872
    %v3583 = vunpack.c.h.b16 %v2872
    %v3584 = vunpack.c.l.b16 %v2873
    %v3585 = vunpack.c.h.b16 %v2873
    %v3586 = vunpack.c.l.b16 %v2874
    %v3587 = vunpack.c.h.b16 %v2874
    %v3588 = vunpack.c.l.b16 %v2875
    %v3589 = vunpack.c.h.b16 %v2875
    %v3590 = vunpack.c.l.b16 %v2876
    %v3591 = vunpack.c.h.b16 %v2876
    %v3592 = vunpack.c.l.b16 %v2877
    %v3593 = vunpack.c.h.b16 %v2877
    %v3594 = vunpack.c.l.b16 %v2878
    %v3595 = vunpack.c.h.b16 %v2878
    %v3596 = vunpack.c.l.b16 %v2879
    %v3597 = vunpack.c.h.b16 %v2879
    %v3598 = vunpack.c.l.b16 %v2880
    %v3599 = vunpack.c.h.b16 %v2880
    %v3600 = vunpack.c.l.b16 %v2881
    %v3601 = vunpack.c.h.b16 %v2881
    %v3602 = vunpack.c.l.b16 %v2882
    %v3603 = vunpack.c.h.b16 %v2882
    %v3604 = vunpack.c.l.b16 %v2883
    %v3605 = vunpack.c.h.b16 %v2883
    %v3606 = vunpack.c.l.b16 %v2884
    %v3607 = vunpack.c.h.b16 %v2884
    %v3608 = vunpack.c.l.b16 %v2885
    %v3609 = vunpack.c.h.b16 %v2885
    %v3610 = vunpack.c.l.b16 %v2886
    %v3611 = vunpack.c.h.b16 %v2886
    %v3612 = vunpack.c.l.b16 %v2887
    %v3613 = vunpack.c.h.b16 %v2887
    %v3614 = vunpack.c.l.b16 %v2888
    %v3615 = vunpack.c.h.b16 %v2888
    %v3616 = vunpack.c.l.b16 %v2889
    %v3617 = vunpack.c.h.b16 %v2889
    %v3618 = vunpack.c.l.b16 %v2890
    %v3619 = vunpack.c.h.b16 %v2890
    %v3620 = vunpack.c.l.b16 %v2891
    %v3621 = vunpack.c.h.b16 %v2891
    %v3622 = vunpack.c.l.b16 %v2892
    %v3623 = vunpack.c.h.b16 %v2892
    %v3624 = vunpack.c.l.b16 %v2893
    %v3625 = vunpack.c.h.b16 %v2893
    %v3626 = vunpack.c.l.b16 %v2894
    %v3627 = vunpack.c.h.b16 %v2894
    %v3628 = vunpack.c.l.b16 %v2895
    %v3629 = vunpack.c.h.b16 %v2895
    %v3630 = vunpack.c.l.b16 %v2896
    %v3631 = vunpack.c.h.b16 %v2896
    %v3632 = vunpack.c.l.b16 %v2897
    %v3633 = vunpack.c.h.b16 %v2897
    %v3634 = vunpack.c.l.b16 %v2898
    %v3635 = vunpack.c.h.b16 %v2898
    %v3636 = vunpack.c.l.b16 %v2899
    %v3637 = vunpack.c.h.b16 %v2899
    %v3638 = vunpack.c.l.b16 %v2900
    %v3639 = vunpack.c.h.b16 %v2900
    %v3640 = vunpack.c.l.b16 %v2901
    %v3641 = vunpack.c.h.b16 %v2901
    %v3642 = vunpack.c.l.b16 %v2902
    %v3643 = vunpack.c.h.b16 %v2902
    %v3644 = vunpack.c.l.b16 %v2903
    %v3645 = vunpack.c.h.b16 %v2903
    %v3646 = vunpack.c.l.b16 %v2904
    %v3647 = vunpack.c.h.b16 %v2904
    %v3648 = vunpack.c.l.b16 %v2905
    %v3649 = vunpack.c.h.b16 %v2905
    %v3650 = vunpack.c.l.b16 %v2906
    %v3651 = vunpack.c.h.b16 %v2906
    %v3652 = vunpack.c.l.b16 %v2907
    %v3653 = vunpack.c.h.b16 %v2907
    %v3654 = vunpack.c.l.b16 %v2908
    %v3655 = vunpack.c.h.b16 %v2908
    %v3656 = vunpack.c.l.b16 %v2909
    %v3657 = vunpack.c.h.b16 %v2909
    %v3658 = vunpack.c.l.b16 %v2910
    %v3659 = vunpack.c.h.b16 %v2910
    %v3660 = vunpack.c.l.b16 %v2911
    %v3661 = vunpack.c.h.b16 %v2911
    %v3662 = vunpack.c.l.b16 %v2912
    %v3663 = vunpack.c.h.b16 %v2912
    %v3664 = vunpack.c.l.b16 %v2913
    %v3665 = vunpack.c.h.b16 %v2913
    %v3666 = vunpack.c.l.b16 %v2914
    %v3667 = vunpack.c.h.b16 %v2914
    %v3668 = vunpack.c.l.b16 %v2915
    %v3669 = vunpack.c.h.b16 %v2915
    %v3670 = vunpack.c.l.b16 %v2916
    %v3671 = vunpack.c.h.b16 %v2916
    %v3672 = vunpack.c.l.b16 %v2917
    %v3673 = vunpack.c.h.b16 %v2917
    %v3674 = vunpack.c.l.b16 %v2918
    %v3675 = vunpack.c.h.b16 %v2918
    %v3676 = vunpack.c.l.b16 %v2919
    %v3677 = vunpack.c.h.b16 %v2919
    %v3678 = vunpack.c.l.b16 %v2920
    %v3679 = vunpack.c.h.b16 %v2920
    %v3680 = vunpack.c.l.b16 %v2921
    %v3681 = vunpack.c.h.b16 %v2921
    %v3682 = vunpack.c.l.b16 %v2922
    %v3683 = vunpack.c.h.b16 %v2922
    %v3684 = vunpack.c.l.b16 %v2923
    %v3685 = vunpack.c.h.b16 %v2923
    %v3686 = vunpack.c.l.b16 %v2924
    %v3687 = vunpack.c.h.b16 %v2924
    %v3688 = vunpack.c.l.b16 %v2925
    %v3689 = vunpack.c.h.b16 %v2925
    %v3690 = vunpack.c.l.b16 %v2926
    %v3691 = vunpack.c.h.b16 %v2926
    %v3692 = vunpack.c.l.b16 %v2927
    %v3693 = vunpack.c.h.b16 %v2927
    %v3694 = vunpack.c.l.b16 %v2928
    %v3695 = vunpack.c.h.b16 %v2928
    %v3696 = vunpack.c.l.b16 %v2929
    %v3697 = vunpack.c.h.b16 %v2929
    %v3698 = vunpack.c.l.b16 %v2930
    %v3699 = vunpack.c.h.b16 %v2930
    %v3700 = vunpack.c.l.b16 %v2931
    %v3701 = vunpack.c.h.b16 %v2931
    %v3702 = vunpack.c.l.b16 %v2932
    %v3703 = vunpack.c.h.b16 %v2932
    %v3704 = vunpack.c.l.b16 %v2933
    %v3705 = vunpack.c.h.b16 %v2933
    %v3706 = vunpack.c.l.b16 %v2934
    %v3707 = vunpack.c.h.b16 %v2934
    %v3708 = vunpack.c.l.b16 %v2935
    %v3709 = vunpack.c.h.b16 %v2935
    %v3710 = vunpack.c.l.b16 %v2936
    %v3711 = vunpack.c.h.b16 %v2936
    %v3712 = vunpack.c.l.b16 %v2937
    %v3713 = vunpack.c.h.b16 %v2937
    %v3714 = vunpack.c.l.b16 %v2938
    %v3715 = vunpack.c.h.b16 %v2938
    %v3716 = vunpack.c.l.b16 %v2939
    %v3717 = vunpack.c.h.b16 %v2939
    %v3718 = vunpack.c.l.b16 %v2940
    %v3719 = vunpack.c.h.b16 %v2940
    %v3720 = vunpack.c.l.b16 %v2941
    %v3721 = vunpack.c.h.b16 %v2941
    %v3722 = vunpack.c.l.b16 %v2942
    %v3723 = vunpack.c.h.b16 %v2942
    %v3724 = vunpack.c.l.b16 %v2943
    %v3725 = vunpack.c.h.b16 %v2943
    %v3726 = vunpack.c.l.b16 %v2944
    %v3727 = vunpack.c.h.b16 %v2944
    %v3728 = vunpack.c.l.b16 %v2945
    %v3729 = vunpack.c.h.b16 %v2945
    %v3730 = vunpack.c.l.b16 %v2946
    %v3731 = vunpack.c.h.b16 %v2946
    %v3732 = vunpack.c.l.b16 %v2947
    %v3733 = vunpack.c.h.b16 %v2947
    %v3734 = vunpack.c.l.b16 %v2948
    %v3735 = vunpack.c.h.b16 %v2948
    %v3736 = vunpack.c.l.b16 %v2949
    %v3737 = vunpack.c.h.b16 %v2949
    %v3738 = vunpack.c.l.b16 %v2950
    %v3739 = vunpack.c.h.b16 %v2950
    %v3740 = vunpack.c.l.b16 %v2951
    %v3741 = vunpack.c.h.b16 %v2951
    %v3742 = vunpack.c.l.b16 %v2952
    %v3743 = vunpack.c.h.b16 %v2952
    %v3744 = vunpack.c.l.b16 %v2953
    %v3745 = vunpack.c.h.b16 %v2953
    %v3746 = vunpack.c.l.b16 %v2954
    %v3747 = vunpack.c.h.b16 %v2954
    %v3748 = vunpack.c.l.b16 %v2955
    %v3749 = vunpack.c.h.b16 %v2955
    %v3750 = vunpack.c.l.b16 %v2956
    %v3751 = vunpack.c.h.b16 %v2956
    %v3752 = vunpack.c.l.b16 %v2957
    %v3753 = vunpack.c.h.b16 %v2957
    %v3754 = vunpack.c.l.b16 %v2958
    %v3755 = vunpack.c.h.b16 %v2958
    %v3756 = vunpack.c.l.b16 %v2959
    %v3757 = vunpack.c.h.b16 %v2959
    %v3758 = vunpack.c.l.b16 %v2960
    %v3759 = vunpack.c.h.b16 %v2960
    %v3760 = vunpack.c.l.b16 %v2961
    %v3761 = vunpack.c.h.b16 %v2961
    %v3762 = vunpack.c.l.b16 %v2962
    %v3763 = vunpack.c.h.b16 %v2962
    %v3764 = vunpack.c.l.b16 %v2963
    %v3765 = vunpack.c.h.b16 %v2963
    %v3766 = vunpack.c.l.b16 %v2964
    %v3767 = vunpack.c.h.b16 %v2964
    %v3768 = vunpack.c.l.b16 %v2965
    %v3769 = vunpack.c.h.b16 %v2965
    %v3770 = vunpack.c.l.b16 %v2966
    %v3771 = vunpack.c.h.b16 %v2966
    %v3772 = vunpack.c.l.b16 %v2967
    %v3773 = vunpack.c.h.b16 %v2967
    %v3774 = vunpack.c.l.b16 %v2968
    %v3775 = vunpack.c.h.b16 %v2968
    %v3776 = vunpack.c.l.b16 %v2969
    %v3777 = vunpack.c.h.b16 %v2969
    %v3778 = vunpack.c.l.b16 %v2970
    %v3779 = vunpack.c.h.b16 %v2970
    %v3780 = vunpack.c.l.b16 %v2971
    %v3781 = vunpack.c.h.b16 %v2971
    %v3782 = vunpack.c.l.b16 %v2972
    %v3783 = vunpack.c.h.b16 %v2972
    %v3784 = vunpack.c.l.b16 %v2973
    %v3785 = vunpack.c.h.b16 %v2973
    %v3786 = vunpack.c.l.b16 %v2974
    %v3787 = vunpack.c.h.b16 %v2974
    %v3788 = vunpack.c.l.b16 %v2975
    %v3789 = vunpack.c.h.b16 %v2975
    %v3790 = vunpack.c.l.b16 %v2976
    %v3791 = vunpack.c.h.b16 %v2976
    %v3792 = vunpack.c.l.b16 %v2977
    %v3793 = vunpack.c.h.b16 %v2977
    %v3794 = vunpack.c.l.b16 %v2978
    %v3795 = vunpack.c.h.b16 %v2978
    %v3796 = vunpack.c.l.b16 %v2979
    %v3797 = vunpack.c.h.b16 %v2979
    %v3798 = vunpack.c.l.b16 %v2980
    %v3799 = vunpack.c.h.b16 %v2980
    %v3800 = vunpack.c.l.b16 %v2981
    %v3801 = vunpack.c.h.b16 %v2981
    %v3802 = vunpack.c.l.b16 %v2982
    %v3803 = vunpack.c.h.b16 %v2982
    %v3804 = vunpack.c.l.b16 %v2983
    %v3805 = vunpack.c.h.b16 %v2983
    %v3806 = vunpack.c.l.b16 %v2984
    %v3807 = vunpack.c.h.b16 %v2984
    %v3808 = vunpack.c.l.b16 %v2985
    %v3809 = vunpack.c.h.b16 %v2985
    %v3810 = vunpack.c.l.b16 %v2986
    %v3811 = vunpack.c.h.b16 %v2986
    %v3812 = vunpack.c.l.b16 %v2987
    %v3813 = vunpack.c.h.b16 %v2987
    %v3814 = vunpack.c.l.b16 %v2988
    %v3815 = vunpack.c.h.b16 %v2988
    %v3816 = vunpack.c.l.b16 %v2989
    %v3817 = vunpack.c.h.b16 %v2989
    %v3818 = vunpack.c.l.b16 %v2990
    %v3819 = vunpack.c.h.b16 %v2990
    %v3820 = vunpack.c.l.b16 %v2991
    %v3821 = vunpack.c.h.b16 %v2991
    %v3822 = vunpack.c.l.b16 %v2992
    %v3823 = vunpack.c.h.b16 %v2992
    %v3824 = vunpack.c.l.b16 %v2993
    %v3825 = vunpack.c.h.b16 %v2993
    %v3826 = vunpack.c.l.b16 %v2994
    %v3827 = vunpack.c.h.b16 %v2994
    %v3828 = vunpack.c.l.b16 %v2995
    %v3829 = vunpack.c.h.b16 %v2995
    %v3830 = vunpack.c.l.b16 %v2996
    %v3831 = vunpack.c.h.b16 %v2996
    %v3832 = vunpack.c.l.b16 %v2997
    %v3833 = vunpack.c.h.b16 %v2997
    %v3834 = vunpack.c.l.b16 %v2998
    %v3835 = vunpack.c.h.b16 %v2998
    %v3836 = vunpack.c.l.b16 %v2999
    %v3837 = vunpack.c.h.b16 %v2999
    %v3838 = vunpack.c.l.b16 %v3000
    %v3839 = vunpack.c.h.b16 %v3000
    %v3840 = vunpack.c.l.b16 %v3001
    %v3841 = vunpack.c.h.b16 %v3001
    %v3842 = vunpack.c.l.b16 %v3002
    %v3843 = vunpack.c.h.b16 %v3002
    %v3844 = vunpack.c.l.b16 %v3003
    %v3845 = vunpack.c.h.b16 %v3003
    %v3846 = vunpack.c.l.b16 %v3004
    %v3847 = vunpack.c.h.b16 %v3004
    %v3848 = vunpack.c.l.b16 %v3005
    %v3849 = vunpack.c.h.b16 %v3005
    %v3850 = vunpack.c.l.b16 %v3006
    %v3851 = vunpack.c.h.b16 %v3006
    %v3852 = vunpack.c.l.b16 %v3007
    %v3853 = vunpack.c.h.b16 %v3007
    %v3854 = vunpack.c.l.b16 %v3008
    %v3855 = vunpack.c.h.b16 %v3008
    %v3856 = vunpack.c.l.b16 %v3009
    %v3857 = vunpack.c.h.b16 %v3009
    %v3858 = vunpack.c.l.b16 %v3010
    %v3859 = vunpack.c.h.b16 %v3010
    %v3860 = vunpack.c.l.b16 %v3011
    %v3861 = vunpack.c.h.b16 %v3011
    %v3862 = vunpack.c.l.b16 %v3012
    %v3863 = vunpack.c.h.b16 %v3012
    %v3864 = vunpack.c.l.b16 %v3013
    %v3865 = vunpack.c.h.b16 %v3013
    %v3866 = vunpack.c.l.b16 %v3014
    %v3867 = vunpack.c.h.b16 %v3014
    %v3868 = vunpack.c.l.b16 %v3015
    %v3869 = vunpack.c.h.b16 %v3015
    %v3870 = vunpack.c.l.b16 %v3016
    %v3871 = vunpack.c.h.b16 %v3016
    %v3872 = vunpack.c.l.b16 %v3017
    %v3873 = vunpack.c.h.b16 %v3017
    %v3874 = vunpack.c.l.b16 %v3018
    %v3875 = vunpack.c.h.b16 %v3018
    %v3876 = vunpack.c.l.b16 %v3019
    %v3877 = vunpack.c.h.b16 %v3019
    %v3878 = vunpack.c.l.b16 %v3020
    %v3879 = vunpack.c.h.b16 %v3020
    %v3880 = vunpack.c.l.b16 %v3021
    %v3881 = vunpack.c.h.b16 %v3021
    %v3882 = vunpack.c.l.b16 %v3022
    %v3883 = vunpack.c.h.b16 %v3022
    %v3884 = vunpack.c.l.b16 %v3023
    %v3885 = vunpack.c.h.b16 %v3023
    %v3886 = vunpack.c.l.b16 %v3024
    %v3887 = vunpack.c.h.b16 %v3024
    %v3888 = vunpack.c.l.b16 %v3025
    %v3889 = vunpack.c.h.b16 %v3025
    %v3890 = vunpack.c.l.b16 %v3026
    %v3891 = vunpack.c.h.b16 %v3026
    %v3892 = vunpack.c.l.b16 %v3027
    %v3893 = vunpack.c.h.b16 %v3027
    %v3894 = vunpack.c.l.b16 %v3028
    %v3895 = vunpack.c.h.b16 %v3028
    %v3896 = vunpack.c.l.b16 %v3029
    %v3897 = vunpack.c.h.b16 %v3029
    %v3898 = vunpack.c.l.b16 %v3030
    %v3899 = vunpack.c.h.b16 %v3030
    %v3900 = vunpack.c.l.b16 %v3031
    %v3901 = vunpack.c.h.b16 %v3031
    %v3902 = vunpack.c.l.b16 %v3032
    %v3903 = vunpack.c.h.b16 %v3032
    %v3904 = vunpack.c.l.b16 %v3033
    %v3905 = vunpack.c.h.b16 %v3033
    %v3906 = vunpack.c.l.b16 %v3034
    %v3907 = vunpack.c.h.b16 %v3034
    %v3908 = vunpack.c.l.b16 %v3035
    %v3909 = vunpack.c.h.b16 %v3035
    %v3910 = vunpack.c.l.b16 %v3036
    %v3911 = vunpack.c.h.b16 %v3036
    %v3912 = vunpack.c.l.b16 %v3037
    %v3913 = vunpack.c.h.b16 %v3037
    %v3914 = vunpack.c.l.b16 %v3038
    %v3915 = vunpack.c.h.b16 %v3038
    %v3916 = vpack.c.b16 %v3342, %v3340
    %v3917 = vpack.c.b16 %v3343, %v3341
    %v3918 = vpack.c.b16 %v3346, %v3344
    %v3919 = vpack.c.b16 %v3347, %v3345
    %v3920 = vpack.c.b16 %v3350, %v3348
    %v3921 = vpack.c.b16 %v3351, %v3349
    %v3922 = vpack.c.b16 %v3354, %v3352
    %v3923 = vpack.c.b16 %v3355, %v3353
    %v3924 = vpack.c.b16 %v3358, %v3356
    %v3925 = vpack.c.b16 %v3359, %v3357
    %v3926 = vpack.c.b16 %v3362, %v3360
    %v3927 = vpack.c.b16 %v3363, %v3361
    %v3928 = vpack.c.b16 %v3366, %v3364
    %v3929 = vpack.c.b16 %v3367, %v3365
    %v3930 = vpack.c.b16 %v3370, %v3368
    %v3931 = vpack.c.b16 %v3371, %v3369
    %v3932 = vpack.c.b16 %v3374, %v3372
    %v3933 = vpack.c.b16 %v3375, %v3373
    %v3934 = vpack.c.b16 %v3378, %v3376
    %v3935 = vpack.c.b16 %v3379, %v3377
    %v3936 = vpack.c.b16 %v3382, %v3380
    %v3937 = vpack.c.b16 %v3383, %v3381
    %v3938 = vpack.c.b16 %v3386, %v3384
    %v3939 = vpack.c.b16 %v3387, %v3385
    %v3940 = vpack.c.b16 %v3390, %v3388
    %v3941 = vpack.c.b16 %v3391, %v3389
    %v3942 = vpack.c.b16 %v3394, %v3392
    %v3943 = vpack.c.b16 %v3395, %v3393
    %v3944 = vpack.c.b16 %v3398, %v3396
    %v3945 = vpack.c.b16 %v3399, %v3397
    %v3946 = vpack.c.b16 %v3402, %v3400
    %v3947 = vpack.c.b16 %v3403, %v3401
    %v3948 = vpack.c.b16 %v3406, %v3404
    %v3949 = vpack.c.b16 %v3407, %v3405
    %v3950 = vpack.c.b16 %v3410, %v3408
    %v3951 = vpack.c.b16 %v3411, %v3409
    %v3952 = vpack.c.b16 %v3414, %v3412
    %v3953 = vpack.c.b16 %v3415, %v3413
    %v3954 = vpack.c.b16 %v3418, %v3416
    %v3955 = vpack.c.b16 %v3419, %v3417
    %v3956 = vpack.c.b16 %v3422, %v3420
    %v3957 = vpack.c.b16 %v3423, %v3421
    %v3958 = vpack.c.b16 %v3426, %v3424
    %v3959 = vpack.c.b16 %v3427, %v3425
    %v3960 = vpack.c.b16 %v3430, %v3428
    %v3961 = vpack.c.b16 %v3431, %v3429
    %v3962 = vpack.c.b16 %v3434, %v3432
    %v3963 = vpack.c.b16 %v3435, %v3433
    %v3964 = vpack.c.b16 %v3438, %v3436
    %v3965 = vpack.c.b16 %v3439, %v3437
    %v3966 = vpack.c.b16 %v3442, %v3440
    %v3967 = vpack.c.b16 %v3443, %v3441
    %v3968 = vpack.c.b16 %v3446, %v3444
    %v3969 = vpack.c.b16 %v3447, %v3445
    %v3970 = vpack.c.b16 %v3450, %v3448
    %v3971 = vpack.c.b16 %v3451, %v3449
    %v3972 = vpack.c.b16 %v3454, %v3452
    %v3973 = vpack.c.b16 %v3455, %v3453
    %v3974 = vpack.c.b16 %v3458, %v3456
    %v3975 = vpack.c.b16 %v3459, %v3457
    %v3976 = vpack.c.b16 %v3462, %v3460
    %v3977 = vpack.c.b16 %v3463, %v3461
    %v3978 = vpack.c.b16 %v3466, %v3464
    %v3979 = vpack.c.b16 %v3467, %v3465
    %v3980 = vpack.c.b16 %v3470, %v3468
    %v3981 = vpack.c.b16 %v3471, %v3469
    %v3982 = vpack.c.b16 %v3474, %v3472
    %v3983 = vpack.c.b16 %v3475, %v3473
    %v3984 = vpack.c.b16 %v3478, %v3476
    %v3985 = vpack.c.b16 %v3479, %v3477
    %v3986 = vpack.c.b16 %v3482, %v3480
    %v3987 = vpack.c.b16 %v3483, %v3481
    %v3988 = vpack.c.b16 %v3486, %v3484
    %v3989 = vpack.c.b16 %v3487, %v3485
    %v3990 = vpack.c.b16 %v3490, %v3488
    %v3991 = vpack.c.b16 %v3491, %v3489
    %v3992 = vpack.c.b16 %v3494, %v3492
    %v3993 = vpack.c.b16 %v3495, %v3493
    %v3994 = vpack.c.b16 %v3498, %v3496
    %v3995 = vpack.c.b16 %v3499, %v3497
    %v3996 = vpack.c.b16 %v3502, %v3500
    %v3997 = vpack.c.b16 %v3503, %v3501
    %v3998 = vpack.c.b16 %v3506, %v3504
    %v3999 = vpack.c.b16 %v3507, %v3505
    %v4000 = vpack.c.b16 %v3510, %v3508
    %v4001 = vpack.c.b16 %v3511, %v3509
    %v4002 = vpack.c.b16 %v3514, %v3512
    %v4003 = vpack.c.b16 %v3515, %v3513
    %v4004 = vpack.c.b16 %v3518, %v3516
    %v4005 = vpack.c.b16 %v3519, %v3517
    %v4006 = vpack.c.b16 %v3522, %v3520
    %v4007 = vpack.c.b16 %v3523, %v3521
    %v4008 = vpack.c.b16 %v3526, %v3524
    %v4009 = vpack.c.b16 %v3527, %v3525
    %v4010 = vpack.c.b16 %v3530, %v3528
    %v4011 = vpack.c.b16 %v3531, %v3529
    %v4012 = vpack.c.b16 %v3534, %v3532
    %v4013 = vpack.c.b16 %v3535, %v3533
    %v4014 = vpack.c.b16 %v3538, %v3536
    %v4015 = vpack.c.b16 %v3539, %v3537
    %v4016 = vpack.c.b16 %v3542, %v3540
    %v4017 = vpack.c.b16 %v3543, %v3541
    %v4018 = vpack.c.b16 %v3546, %v3544
    %v4019 = vpack.c.b16 %v3547, %v3545
    %v4020 = vpack.c.b16 %v3550, %v3548
    %v4021 = vpack.c.b16 %v3551, %v3549
    %v4022 = vpack.c.b16 %v3554, %v3552
    %v4023 = vpack.c.b16 %v3555, %v3553
    %v4024 = vpack.c.b16 %v3558, %v3556
    %v4025 = vpack.c.b16 %v3559, %v3557
    %v4026 = vpack.c.b16 %v3562, %v3560
    %v4027 = vpack.c.b16 %v3563, %v3561
    %v4028 = vpack.c.b16 %v3566, %v3564
    %v4029 = vpack.c.b16 %v3567, %v3565
    %v4030 = vpack.c.b16 %v3570, %v3568
    %v4031 = vpack.c.b16 %v3571, %v3569
    %v4032 = vpack.c.b16 %v3574, %v3572
    %v4033 = vpack.c.b16 %v3575, %v3573
    %v4034 = vpack.c.b16 %v3578, %v3576
    %v4035 = vpack.c.b16 %v3579, %v3577
    %v4036 = vpack.c.b16 %v3582, %v3580
    %v4037 = vpack.c.b16 %v3583, %v3581
    %v4038 = vpack.c.b16 %v3586, %v3584
    %v4039 = vpack.c.b16 %v3587, %v3585
    %v4040 = vpack.c.b16 %v3590, %v3588
    %v4041 = vpack.c.b16 %v3591, %v3589
    %v4042 = vpack.c.b16 %v3594, %v3592
    %v4043 = vpack.c.b16 %v3595, %v3593
    %v4044 = vpack.c.b16 %v3598, %v3596
    %v4045 = vpack.c.b16 %v3599, %v3597
    %v4046 = vpack.c.b16 %v3602, %v3600
    %v4047 = vpack.c.b16 %v3603, %v3601
    %v4048 = vpack.c.b16 %v3606, %v3604
    %v4049 = vpack.c.b16 %v3607, %v3605
    %v4050 = vpack.c.b16 %v3610, %v3608
    %v4051 = vpack.c.b16 %v3611, %v3609
    %v4052 = vpack.c.b16 %v3614, %v3612
    %v4053 = vpack.c.b16 %v3615, %v3613
    %v4054 = vpack.c.b16 %v3618, %v3616
    %v4055 = vpack.c.b16 %v3619, %v3617
    %v4056 = vpack.c.b16 %v3622, %v3620
    %v4057 = vpack.c.b16 %v3623, %v3621
    %v4058 = vpack.c.b16 %v3626, %v3624
    %v4059 = vpack.c.b16 %v3627, %v3625
    %v4060 = vpack.c.b16 %v3630, %v3628
    %v4061 = vpack.c.b16 %v3631, %v3629
    %v4062 = vpack.c.b16 %v3634, %v3632
    %v4063 = vpack.c.b16 %v3635, %v3633
    %v4064 = vpack.c.b16 %v3638, %v3636
    %v4065 = vpack.c.b16 %v3639, %v3637
    %v4066 = vpack.c.b16 %v3642, %v3640
    %v4067 = vpack.c.b16 %v3643, %v3641
    %v4068 = vpack.c.b16 %v3646, %v3644
    %v4069 = vpack.c.b16 %v3647, %v3645
    %v4070 = vpack.c.b16 %v3650, %v3648
    %v4071 = vpack.c.b16 %v3651, %v3649
    %v4072 = vpack.c.b16 %v3654, %v3652
    %v4073 = vpack.c.b16 %v3655, %v3653
    %v4074 = vpack.c.b16 %v3658, %v3656
    %v4075 = vpack.c.b16 %v3659, %v3657
    %v4076 = vpack.c.b16 %v3662, %v3660
    %v4077 = vpack.c.b16 %v3663, %v3661
    %v4078 = vpack.c.b16 %v3666, %v3664
    %v4079 = vpack.c.b16 %v3667, %v3665
    %v4080 = vpack.c.b16 %v3670, %v3668
    %v4081 = vpack.c.b16 %v3671, %v3669
    %v4082 = vpack.c.b16 %v3674, %v3672
    %v4083 = vpack.c.b16 %v3675, %v3673
    %v4084 = vpack.c.b16 %v3678, %v3676
    %v4085 = vpack.c.b16 %v3679, %v3677
    %v4086 = vpack.c.b16 %v3682, %v3680
    %v4087 = vpack.c.b16 %v3683, %v3681
    %v4088 = vpack.c.b16 %v3686, %v3684
    %v4089 = vpack.c.b16 %v3687, %v3685
    %v4090 = vpack.c.b16 %v3690, %v3688
    %v4091 = vpack.c.b16 %v3691, %v3689
    %v4092 = vpack.c.b16 %v3694, %v3692
    %v4093 = vpack.c.b16 %v3695, %v3693
    %v4094 = vpack.c.b16 %v3698, %v3696
    %v4095 = vpack.c.b16 %v3699, %v3697
    %v4096 = vpack.c.b16 %v3702, %v3700
    %v4097 = vpack.c.b16 %v3703, %v3701
    %v4098 = vpack.c.b16 %v3706, %v3704
    %v4099 = vpack.c.b16 %v3707, %v3705
    %v4100 = vpack.c.b16 %v3710, %v3708
    %v4101 = vpack.c.b16 %v3711, %v3709
    %v4102 = vpack.c.b16 %v3714, %v3712
    %v4103 = vpack.c.b16 %v3715, %v3713
    %v4104 = vpack.c.b16 %v3718, %v3716
    %v4105 = vpack.c.b16 %v3719, %v3717
    %v4106 = vpack.c.b16 %v3722, %v3720
    %v4107 = vpack.c.b16 %v3723, %v3721
    %v4108 = vpack.c.b16 %v3726, %v3724
    %v4109 = vpack.c.b16 %v3727, %v3725
    %v4110 = vpack.c.b16 %v3730, %v3728
    %v4111 = vpack.c.b16 %v3731, %v3729
    %v4112 = vpack.c.b16 %v3734, %v3732
    %v4113 = vpack.c.b16 %v3735, %v3733
    %v4114 = vpack.c.b16 %v3738, %v3736
    %v4115 = vpack.c.b16 %v3739, %v3737
    %v4116 = vpack.c.b16 %v3742, %v3740
    %v4117 = vpack.c.b16 %v3743, %v3741
    %v4118 = vpack.c.b16 %v3746, %v3744
    %v4119 = vpack.c.b16 %v3747, %v3745
    %v4120 = vpack.c.b16 %v3750, %v3748
    %v4121 = vpack.c.b16 %v3751, %v3749
    %v4122 = vpack.c.b16 %v3754, %v3752
    %v4123 = vpack.c.b16 %v3755, %v3753
    %v4124 = vpack.c.b16 %v3758, %v3756
    %v4125 = vpack.c.b16 %v3759, %v3757
    %v4126 = vpack.c.b16 %v3762, %v3760
    %v4127 = vpack.c.b16 %v3763, %v3761
    %v4128 = vpack.c.b16 %v3766, %v3764
    %v4129 = vpack.c.b16 %v3767, %v3765
    %v4130 = vpack.c.b16 %v3770, %v3768
    %v4131 = vpack.c.b16 %v3771, %v3769
    %v4132 = vpack.c.b16 %v3774, %v3772
    %v4133 = vpack.c.b16 %v3775, %v3773
    %v4134 = vpack.c.b16 %v3778, %v3776
    %v4135 = vpack.c.b16 %v3779, %v3777
    %v4136 = vpack.c.b16 %v3782, %v3780
    %v4137 = vpack.c.b16 %v3783, %v3781
    %v4138 = vpack.c.b16 %v3786, %v3784
    %v4139 = vpack.c.b16 %v3787, %v3785
    %v4140 = vpack.c.b16 %v3790, %v3788
    %v4141 = vpack.c.b16 %v3791, %v3789
    %v4142 = vpack.c.b16 %v3794, %v3792
    %v4143 = vpack.c.b16 %v3795, %v3793
    %v4144 = vpack.c.b16 %v3798, %v3796
    %v4145 = vpack.c.b16 %v3799, %v3797
    %v4146 = vpack.c.b16 %v3802, %v3800
    %v4147 = vpack.c.b16 %v3803, %v3801
    %v4148 = vpack.c.b16 %v3806, %v3804
    %v4149 = vpack.c.b16 %v3807, %v3805
    %v4150 = vpack.c.b16 %v3810, %v3808
    %v4151 = vpack.c.b16 %v3811, %v3809
    %v4152 = vpack.c.b16 %v3814, %v3812
    %v4153 = vpack.c.b16 %v3815, %v3813
    %v4154 = vpack.c.b16 %v3818, %v3816
    %v4155 = vpack.c.b16 %v3819, %v3817
    %v4156 = vpack.c.b16 %v3822, %v3820
    %v4157 = vpack.c.b16 %v3823, %v3821
    %v4158 = vpack.c.b16 %v3826, %v3824
    %v4159 = vpack.c.b16 %v3827, %v3825
    %v4160 = vpack.c.b16 %v3830, %v3828
    %v4161 = vpack.c.b16 %v3831, %v3829
    %v4162 = vpack.c.b16 %v3834, %v3832
    %v4163 = vpack.c.b16 %v3835, %v3833
    %v4164 = vpack.c.b16 %v3838, %v3836
    %v4165 = vpack.c.b16 %v3839, %v3837
    %v4166 = vpack.c.b16 %v3842, %v3840
    %v4167 = vpack.c.b16 %v3843, %v3841
    %v4168 = vpack.c.b16 %v3846, %v3844
    %v4169 = vpack.c.b16 %v3847, %v3845
    %v4170 = vpack.c.b16 %v3850, %v3848
    %v4171 = vpack.c.b16 %v3851, %v3849
    %v4172 = vpack.c.b16 %v3854, %v3852
    %v4173 = vpack.c.b16 %v3855, %v3853
    %v4174 = vpack.c.b16 %v3858, %v3856
    %v4175 = vpack.c.b16 %v3859, %v3857
    %v4176 = vpack.c.b16 %v3862, %v3860
    %v4177 = vpack.c.b16 %v3863, %v3861
    %v4178 = vpack.c.b16 %v3866, %v3864
    %v4179 = vpack.c.b16 %v3867, %v3865
    %v4180 = vpack.c.b16 %v3870, %v3868
    %v4181 = vpack.c.b16 %v3871, %v3869
    %v4182 = vpack.c.b16 %v3874, %v3872
    %v4183 = vpack.c.b16 %v3875, %v3873
    %v4184 = vpack.c.b16 %v3878, %v3876
    %v4185 = vpack.c.b16 %v3879, %v3877
    %v4186 = vpack.c.b16 %v3882, %v3880
    %v4187 = vpack.c.b16 %v3883, %v3881
    %v4188 = vpack.c.b16 %v3886, %v3884
    %v4189 = vpack.c.b16 %v3887, %v3885
    %v4190 = vpack.c.b16 %v3890, %v3888
    %v4191 = vpack.c.b16 %v3891, %v3889
    %v4192 = vpack.c.b16 %v3894, %v3892
    %v4193 = vpack.c.b16 %v3895, %v3893
    %v4194 = vpack.c.b16 %v3898, %v3896
    %v4195 = vpack.c.b16 %v3899, %v3897
    %v4196 = vpack.c.b16 %v3902, %v3900
    %v4197 = vpack.c.b16 %v3903, %v3901
    %v4198 = vpack.c.b16 %v3906, %v3904
    %v4199 = vpack.c.b16 %v3907, %v3905
    %v4200 = vpack.c.b16 %v3910, %v3908
    %v4201 = vpack.c.b16 %v3911, %v3909
    %v4202 = vpack.c.b16 %v3914, %v3912
    %v4203 = vpack.c.b16 %v3915, %v3913
    %4492 = vmatprep.subr.bf16.mxu0 %v3931
    %4493 = vmatpush1.bf16.msra.mxu0 %v3930
    %4494 = vmatprep.subr.bf16.mxu0 %v3929
    %4495 = vmatpush1.bf16.msra.mxu0 %v3928
    %4496 = vmatprep.subr.bf16.mxu0 %v3927
    %4497 = vmatpush1.bf16.msra.mxu0 %v3926
    %4498 = vmatprep.subr.bf16.mxu0 %v3925
    %4499 = vmatpush1.bf16.msra.mxu0 %v3924
    %4500 = vmatprep.subr.bf16.mxu0 %v3923
    %4501 = vmatpush1.bf16.msra.mxu0 %v3922
    %4502 = vmatprep.subr.bf16.mxu0 %v3921
    %4503 = vmatpush1.bf16.msra.mxu0 %v3920
    %4504 = vmatprep.subr.bf16.mxu0 %v3919
    %4505 = vmatpush1.bf16.msra.mxu0 %v3918
    %4506 = vmatprep.subr.bf16.mxu0 %v3917
    %4507 = vmatpush1.bf16.msra.mxu0 %v3916
    %4508 = vmatprep.subr.bf16.mxu0 %v3947
    %4509 = vmatpush2.bf16.msra.mxu0 %v3946
    %4510 = vmatprep.subr.bf16.mxu0 %v3945
    %4511 = vmatpush2.bf16.msra.mxu0 %v3944
    %4512 = vmatprep.subr.bf16.mxu0 %v3943
    %4513 = vmatpush2.bf16.msra.mxu0 %v3942
    %4514 = vmatprep.subr.bf16.mxu0 %v3941
    %4515 = vmatpush2.bf16.msra.mxu0 %v3940
    %4516 = vmatprep.subr.bf16.mxu0 %v3939
    %4517 = vmatpush2.bf16.msra.mxu0 %v3938
    %4518 = vmatprep.subr.bf16.mxu0 %v3937
    %4519 = vmatpush2.bf16.msra.mxu0 %v3936
    %4520 = vmatprep.subr.bf16.mxu0 %v3935
    %4521 = vmatpush2.bf16.msra.mxu0 %v3934
    %4522 = vmatprep.subr.bf16.mxu0 %v3933
    %4523 = vmatpush2.bf16.msra.mxu0 %v3932
    %4524 = vmatprep.mubr.bf16.mxu0 %v2734
    %4525 = vmatmul.mubr.bf16.gmra.mxu0 %v2733
    %v4526 = vpop.f32.mrf.mxu0
    %v4527 = vadd.f32 %v3045, %v4526
    %v4528 = vpop.f32.mrf.mxu0
    %v4529 = vadd.f32 %v3049, %v4528
    %v4530 = vpop.f32.mrf.mxu0
    %v4531 = vpop.f32.mrf.mxu0
    %4532 = vdwg.mxu0
    %4533 = vmatprep.subr.bf16.mxu0 %v3963
    %4534 = vmatpush1.bf16.msra.mxu0 %v3962
    %4535 = vmatprep.subr.bf16.mxu0 %v3961
    %4536 = vmatpush1.bf16.msra.mxu0 %v3960
    %4537 = vmatprep.subr.bf16.mxu0 %v3959
    %4538 = vmatpush1.bf16.msra.mxu0 %v3958
    %4539 = vmatprep.subr.bf16.mxu0 %v3957
    %4540 = vmatpush1.bf16.msra.mxu0 %v3956
    %4541 = vmatprep.subr.bf16.mxu0 %v3955
    %4542 = vmatpush1.bf16.msra.mxu0 %v3954
    %4543 = vmatprep.subr.bf16.mxu0 %v3953
    %4544 = vmatpush1.bf16.msra.mxu0 %v3952
    %4545 = vmatprep.subr.bf16.mxu0 %v3951
    %4546 = vmatpush1.bf16.msra.mxu0 %v3950
    %4547 = vmatprep.subr.bf16.mxu0 %v3949
    %4548 = vmatpush1.bf16.msra.mxu0 %v3948
    %4549 = vmatprep.subr.bf16.mxu0 %v3979
    %4550 = vmatpush2.bf16.msra.mxu0 %v3978
    %4551 = vmatprep.subr.bf16.mxu0 %v3977
    %4552 = vmatpush2.bf16.msra.mxu0 %v3976
    %4553 = vmatprep.subr.bf16.mxu0 %v3975
    %4554 = vmatpush2.bf16.msra.mxu0 %v3974
    %4555 = vmatprep.subr.bf16.mxu0 %v3973
    %4556 = vmatpush2.bf16.msra.mxu0 %v3972
    %4557 = vmatprep.subr.bf16.mxu0 %v3971
    %4558 = vmatpush2.bf16.msra.mxu0 %v3970
    %4559 = vmatprep.subr.bf16.mxu0 %v3969
    %4560 = vmatpush2.bf16.msra.mxu0 %v3968
    %4561 = vmatprep.subr.bf16.mxu0 %v3967
    %4562 = vmatpush2.bf16.msra.mxu0 %v3966
    %4563 = vmatprep.subr.bf16.mxu0 %v3965
    %4564 = vmatpush2.bf16.msra.mxu0 %v3964
    %4565 = vmatprep.mubr.bf16.mxu0 %v2736
    %4566 = vmatmul.mubr.bf16.gmra.mxu0 %v2735
    %v4567 = vpop.f32.mrf.mxu0
    %v4568 = vadd.f32 %v4527, %v4567
    %v4569 = vpop.f32.mrf.mxu0
    %v4570 = vadd.f32 %v4529, %v4569
    %v4571 = vpop.f32.mrf.mxu0
    %v4572 = vpop.f32.mrf.mxu0
    %4573 = vdwg.mxu0
    %4574 = vmatprep.subr.bf16.mxu0 %v3995
    %4575 = vmatpush1.bf16.msra.mxu0 %v3994
    %4576 = vmatprep.subr.bf16.mxu0 %v3993
    %4577 = vmatpush1.bf16.msra.mxu0 %v3992
    %4578 = vmatprep.subr.bf16.mxu0 %v3991
    %4579 = vmatpush1.bf16.msra.mxu0 %v3990
    %4580 = vmatprep.subr.bf16.mxu0 %v3989
    %4581 = vmatpush1.bf16.msra.mxu0 %v3988
    %4582 = vmatprep.subr.bf16.mxu0 %v3987
    %4583 = vmatpush1.bf16.msra.mxu0 %v3986
    %4584 = vmatprep.subr.bf16.mxu0 %v3985
    %4585 = vmatpush1.bf16.msra.mxu0 %v3984
    %4586 = vmatprep.subr.bf16.mxu0 %v3983
    %4587 = vmatpush1.bf16.msra.mxu0 %v3982
    %4588 = vmatprep.subr.bf16.mxu0 %v3981
    %4589 = vmatpush1.bf16.msra.mxu0 %v3980
    %4590 = vmatprep.subr.bf16.mxu0 %v4011
    %4591 = vmatpush2.bf16.msra.mxu0 %v4010
    %4592 = vmatprep.subr.bf16.mxu0 %v4009
    %4593 = vmatpush2.bf16.msra.mxu0 %v4008
    %4594 = vmatprep.subr.bf16.mxu0 %v4007
    %4595 = vmatpush2.bf16.msra.mxu0 %v4006
    %4596 = vmatprep.subr.bf16.mxu0 %v4005
    %4597 = vmatpush2.bf16.msra.mxu0 %v4004
    %4598 = vmatprep.subr.bf16.mxu0 %v4003
    %4599 = vmatpush2.bf16.msra.mxu0 %v4002
    %4600 = vmatprep.subr.bf16.mxu0 %v4001
    %4601 = vmatpush2.bf16.msra.mxu0 %v4000
    %4602 = vmatprep.subr.bf16.mxu0 %v3999
    %4603 = vmatpush2.bf16.msra.mxu0 %v3998
    %4604 = vmatprep.subr.bf16.mxu0 %v3997
    %4605 = vmatpush2.bf16.msra.mxu0 %v3996
    %4606 = vmatprep.mubr.bf16.mxu0 %v2738
    %4607 = vmatmul.mubr.bf16.gmra.mxu0 %v2737
    %v4608 = vpop.f32.mrf.mxu0
    %v4609 = vadd.f32 %v4568, %v4608
    %v4610 = vpop.f32.mrf.mxu0
    %v4611 = vadd.f32 %v4570, %v4610
    %v4612 = vpop.f32.mrf.mxu0
    %v4613 = vpop.f32.mrf.mxu0
    %4614 = vdwg.mxu0
    %4615 = vmatprep.subr.bf16.mxu0 %v4027
    %4616 = vmatpush1.bf16.msra.mxu0 %v4026
    %4617 = vmatprep.subr.bf16.mxu0 %v4025
    %4618 = vmatpush1.bf16.msra.mxu0 %v4024
    %4619 = vmatprep.subr.bf16.mxu0 %v4023
    %4620 = vmatpush1.bf16.msra.mxu0 %v4022
    %4621 = vmatprep.subr.bf16.mxu0 %v4021
    %4622 = vmatpush1.bf16.msra.mxu0 %v4020
    %4623 = vmatprep.subr.bf16.mxu0 %v4019
    %4624 = vmatpush1.bf16.msra.mxu0 %v4018
    %4625 = vmatprep.subr.bf16.mxu0 %v4017
    %4626 = vmatpush1.bf16.msra.mxu0 %v4016
    %4627 = vmatprep.subr.bf16.mxu0 %v4015
    %4628 = vmatpush1.bf16.msra.mxu0 %v4014
    %4629 = vmatprep.subr.bf16.mxu0 %v4013
    %4630 = vmatpush1.bf16.msra.mxu0 %v4012
    %4631 = vmatprep.subr.bf16.mxu0 %v4043
    %4632 = vmatpush2.bf16.msra.mxu0 %v4042
    %4633 = vmatprep.subr.bf16.mxu0 %v4041
    %4634 = vmatpush2.bf16.msra.mxu0 %v4040
    %4635 = vmatprep.subr.bf16.mxu0 %v4039
    %4636 = vmatpush2.bf16.msra.mxu0 %v4038
    %4637 = vmatprep.subr.bf16.mxu0 %v4037
    %4638 = vmatpush2.bf16.msra.mxu0 %v4036
    %4639 = vmatprep.subr.bf16.mxu0 %v4035
    %4640 = vmatpush2.bf16.msra.mxu0 %v4034
    %4641 = vmatprep.subr.bf16.mxu0 %v4033
    %4642 = vmatpush2.bf16.msra.mxu0 %v4032
    %4643 = vmatprep.subr.bf16.mxu0 %v4031
    %4644 = vmatpush2.bf16.msra.mxu0 %v4030
    %4645 = vmatprep.subr.bf16.mxu0 %v4029
    %4646 = vmatpush2.bf16.msra.mxu0 %v4028
    %4647 = vmatprep.mubr.bf16.mxu0 %v2740
    %4648 = vmatmul.mubr.bf16.gmra.mxu0 %v2739
    %v4649 = vpop.f32.mrf.mxu0
    %v4650 = vadd.f32 %v4609, %v4649
    %v4651 = vpop.f32.mrf.mxu0
    %v4652 = vadd.f32 %v4611, %v4651
    %v4653 = vpop.f32.mrf.mxu0
    %v4654 = vpop.f32.mrf.mxu0
    %4655 = vdwg.mxu0
    %4656 = vmatprep.subr.bf16.mxu0 %v4059
    %4657 = vmatpush1.bf16.msra.mxu0 %v4058
    %4658 = vmatprep.subr.bf16.mxu0 %v4057
    %4659 = vmatpush1.bf16.msra.mxu0 %v4056
    %4660 = vmatprep.subr.bf16.mxu0 %v4055
    %4661 = vmatpush1.bf16.msra.mxu0 %v4054
    %4662 = vmatprep.subr.bf16.mxu0 %v4053
    %4663 = vmatpush1.bf16.msra.mxu0 %v4052
    %4664 = vmatprep.subr.bf16.mxu0 %v4051
    %4665 = vmatpush1.bf16.msra.mxu0 %v4050
    %4666 = vmatprep.subr.bf16.mxu0 %v4049
    %4667 = vmatpush1.bf16.msra.mxu0 %v4048
    %4668 = vmatprep.subr.bf16.mxu0 %v4047
    %4669 = vmatpush1.bf16.msra.mxu0 %v4046
    %4670 = vmatprep.subr.bf16.mxu0 %v4045
    %4671 = vmatpush1.bf16.msra.mxu0 %v4044
    %4672 = vmatprep.subr.bf16.mxu0 %v4075
    %4673 = vmatpush2.bf16.msra.mxu0 %v4074
    %4674 = vmatprep.subr.bf16.mxu0 %v4073
    %4675 = vmatpush2.bf16.msra.mxu0 %v4072
    %4676 = vmatprep.subr.bf16.mxu0 %v4071
    %4677 = vmatpush2.bf16.msra.mxu0 %v4070
    %4678 = vmatprep.subr.bf16.mxu0 %v4069
    %4679 = vmatpush2.bf16.msra.mxu0 %v4068
    %4680 = vmatprep.subr.bf16.mxu0 %v4067
    %4681 = vmatpush2.bf16.msra.mxu0 %v4066
    %4682 = vmatprep.subr.bf16.mxu0 %v4065
    %4683 = vmatpush2.bf16.msra.mxu0 %v4064
    %4684 = vmatprep.subr.bf16.mxu0 %v4063
    %4685 = vmatpush2.bf16.msra.mxu0 %v4062
    %4686 = vmatprep.subr.bf16.mxu0 %v4061
    %4687 = vmatpush2.bf16.msra.mxu0 %v4060
    %4688 = vmatprep.mubr.bf16.mxu0 %v2742
    %4689 = vmatmul.mubr.bf16.gmra.mxu0 %v2741
    %v4690 = vpop.f32.mrf.mxu0
    %v4691 = vadd.f32 %v4650, %v4690
    %v4692 = vpop.f32.mrf.mxu0
    %v4693 = vadd.f32 %v4652, %v4692
    %v4694 = vpop.f32.mrf.mxu0
    %v4695 = vpop.f32.mrf.mxu0
    %4696 = vdwg.mxu0
    %4697 = vmatprep.subr.bf16.mxu0 %v4091
    %4698 = vmatpush1.bf16.msra.mxu0 %v4090
    %4699 = vmatprep.subr.bf16.mxu0 %v4089
    %4700 = vmatpush1.bf16.msra.mxu0 %v4088
    %4701 = vmatprep.subr.bf16.mxu0 %v4087
    %4702 = vmatpush1.bf16.msra.mxu0 %v4086
    %4703 = vmatprep.subr.bf16.mxu0 %v4085
    %4704 = vmatpush1.bf16.msra.mxu0 %v4084
    %4705 = vmatprep.subr.bf16.mxu0 %v4083
    %4706 = vmatpush1.bf16.msra.mxu0 %v4082
    %4707 = vmatprep.subr.bf16.mxu0 %v4081
    %4708 = vmatpush1.bf16.msra.mxu0 %v4080
    %4709 = vmatprep.subr.bf16.mxu0 %v4079
    %4710 = vmatpush1.bf16.msra.mxu0 %v4078
    %4711 = vmatprep.subr.bf16.mxu0 %v4077
    %4712 = vmatpush1.bf16.msra.mxu0 %v4076
    %4713 = vmatprep.subr.bf16.mxu0 %v4107
    %4714 = vmatpush2.bf16.msra.mxu0 %v4106
    %4715 = vmatprep.subr.bf16.mxu0 %v4105
    %4716 = vmatpush2.bf16.msra.mxu0 %v4104
    %4717 = vmatprep.subr.bf16.mxu0 %v4103
    %4718 = vmatpush2.bf16.msra.mxu0 %v4102
    %4719 = vmatprep.subr.bf16.mxu0 %v4101
    %4720 = vmatpush2.bf16.msra.mxu0 %v4100
    %4721 = vmatprep.subr.bf16.mxu0 %v4099
    %4722 = vmatpush2.bf16.msra.mxu0 %v4098
    %4723 = vmatprep.subr.bf16.mxu0 %v4097
    %4724 = vmatpush2.bf16.msra.mxu0 %v4096
    %4725 = vmatprep.subr.bf16.mxu0 %v4095
    %4726 = vmatpush2.bf16.msra.mxu0 %v4094
    %4727 = vmatprep.subr.bf16.mxu0 %v4093
    %4728 = vmatpush2.bf16.msra.mxu0 %v4092
    %4729 = vmatprep.mubr.bf16.mxu0 %v2744
    %4730 = vmatmul.mubr.bf16.gmra.mxu0 %v2743
    %v4731 = vpop.f32.mrf.mxu0
    %v4732 = vadd.f32 %v4691, %v4731
    %v4733 = vpop.f32.mrf.mxu0
    %v4734 = vadd.f32 %v4693, %v4733
    %v4735 = vpop.f32.mrf.mxu0
    %v4736 = vpop.f32.mrf.mxu0
    %4737 = vdwg.mxu0
    %4738 = vmatprep.subr.bf16.mxu0 %v4123
    %4739 = vmatpush1.bf16.msra.mxu0 %v4122
    %4740 = vmatprep.subr.bf16.mxu0 %v4121
    %4741 = vmatpush1.bf16.msra.mxu0 %v4120
    %4742 = vmatprep.subr.bf16.mxu0 %v4119
    %4743 = vmatpush1.bf16.msra.mxu0 %v4118
    %4744 = vmatprep.subr.bf16.mxu0 %v4117
    %4745 = vmatpush1.bf16.msra.mxu0 %v4116
    %4746 = vmatprep.subr.bf16.mxu0 %v4115
    %4747 = vmatpush1.bf16.msra.mxu0 %v4114
    %4748 = vmatprep.subr.bf16.mxu0 %v4113
    %4749 = vmatpush1.bf16.msra.mxu0 %v4112
    %4750 = vmatprep.subr.bf16.mxu0 %v4111
    %4751 = vmatpush1.bf16.msra.mxu0 %v4110
    %4752 = vmatprep.subr.bf16.mxu0 %v4109
    %4753 = vmatpush1.bf16.msra.mxu0 %v4108
    %4754 = vmatprep.subr.bf16.mxu0 %v4139
    %4755 = vmatpush2.bf16.msra.mxu0 %v4138
    %4756 = vmatprep.subr.bf16.mxu0 %v4137
    %4757 = vmatpush2.bf16.msra.mxu0 %v4136
    %4758 = vmatprep.subr.bf16.mxu0 %v4135
    %4759 = vmatpush2.bf16.msra.mxu0 %v4134
    %4760 = vmatprep.subr.bf16.mxu0 %v4133
    %4761 = vmatpush2.bf16.msra.mxu0 %v4132
    %4762 = vmatprep.subr.bf16.mxu0 %v4131
    %4763 = vmatpush2.bf16.msra.mxu0 %v4130
    %4764 = vmatprep.subr.bf16.mxu0 %v4129
    %4765 = vmatpush2.bf16.msra.mxu0 %v4128
    %4766 = vmatprep.subr.bf16.mxu0 %v4127
    %4767 = vmatpush2.bf16.msra.mxu0 %v4126
    %4768 = vmatprep.subr.bf16.mxu0 %v4125
    %4769 = vmatpush2.bf16.msra.mxu0 %v4124
    %4770 = vmatprep.mubr.bf16.mxu0 %v2746
    %4771 = vmatmul.mubr.bf16.gmra.mxu0 %v2745
    %v4772 = vpop.f32.mrf.mxu0
    %v4773 = vadd.f32 %v4732, %v4772
    %v4774 = vpop.f32.mrf.mxu0
    %v4775 = vadd.f32 %v4734, %v4774
    %v4776 = vpop.f32.mrf.mxu0
    %v4777 = vpop.f32.mrf.mxu0
    %4778 = vdwg.mxu0
    %4779 = vmatprep.subr.bf16.mxu0 %v4155
    %4780 = vmatpush1.bf16.msra.mxu0 %v4154
    %4781 = vmatprep.subr.bf16.mxu0 %v4153
    %4782 = vmatpush1.bf16.msra.mxu0 %v4152
    %4783 = vmatprep.subr.bf16.mxu0 %v4151
    %4784 = vmatpush1.bf16.msra.mxu0 %v4150
    %4785 = vmatprep.subr.bf16.mxu0 %v4149
    %4786 = vmatpush1.bf16.msra.mxu0 %v4148
    %4787 = vmatprep.subr.bf16.mxu0 %v4147
    %4788 = vmatpush1.bf16.msra.mxu0 %v4146
    %4789 = vmatprep.subr.bf16.mxu0 %v4145
    %4790 = vmatpush1.bf16.msra.mxu0 %v4144
    %4791 = vmatprep.subr.bf16.mxu0 %v4143
    %4792 = vmatpush1.bf16.msra.mxu0 %v4142
    %4793 = vmatprep.subr.bf16.mxu0 %v4141
    %4794 = vmatpush1.bf16.msra.mxu0 %v4140
    %4795 = vmatprep.subr.bf16.mxu0 %v4171
    %4796 = vmatpush2.bf16.msra.mxu0 %v4170
    %4797 = vmatprep.subr.bf16.mxu0 %v4169
    %4798 = vmatpush2.bf16.msra.mxu0 %v4168
    %4799 = vmatprep.subr.bf16.mxu0 %v4167
    %4800 = vmatpush2.bf16.msra.mxu0 %v4166
    %4801 = vmatprep.subr.bf16.mxu0 %v4165
    %4802 = vmatpush2.bf16.msra.mxu0 %v4164
    %4803 = vmatprep.subr.bf16.mxu0 %v4163
    %4804 = vmatpush2.bf16.msra.mxu0 %v4162
    %4805 = vmatprep.subr.bf16.mxu0 %v4161
    %4806 = vmatpush2.bf16.msra.mxu0 %v4160
    %4807 = vmatprep.subr.bf16.mxu0 %v4159
    %4808 = vmatpush2.bf16.msra.mxu0 %v4158
    %4809 = vmatprep.subr.bf16.mxu0 %v4157
    %4810 = vmatpush2.bf16.msra.mxu0 %v4156
    %4811 = vmatprep.mubr.bf16.mxu0 %v2748
    %4812 = vmatmul.mubr.bf16.gmra.mxu0 %v2747
    %v4813 = vpop.f32.mrf.mxu0
    %v4814 = vadd.f32 %v4773, %v4813
    %v4815 = vpop.f32.mrf.mxu0
    %v4816 = vadd.f32 %v4775, %v4815
    %v4817 = vpop.f32.mrf.mxu0
    %v4818 = vpop.f32.mrf.mxu0
    %4819 = vdwg.mxu0
    %4820 = vmatprep.subr.bf16.mxu0 %v4187
    %4821 = vmatpush1.bf16.msra.mxu0 %v4186
    %4822 = vmatprep.subr.bf16.mxu0 %v4185
    %4823 = vmatpush1.bf16.msra.mxu0 %v4184
    %4824 = vmatprep.subr.bf16.mxu0 %v4183
    %4825 = vmatpush1.bf16.msra.mxu0 %v4182
    %4826 = vmatprep.subr.bf16.mxu0 %v4181
    %4827 = vmatpush1.bf16.msra.mxu0 %v4180
    %4828 = vmatprep.subr.bf16.mxu0 %v4179
    %4829 = vmatpush1.bf16.msra.mxu0 %v4178
    %4830 = vmatprep.subr.bf16.mxu0 %v4177
    %4831 = vmatpush1.bf16.msra.mxu0 %v4176
    %4832 = vmatprep.subr.bf16.mxu0 %v4175
    %4833 = vmatpush1.bf16.msra.mxu0 %v4174
    %4834 = vmatprep.subr.bf16.mxu0 %v4173
    %4835 = vmatpush1.bf16.msra.mxu0 %v4172
    %4836 = vmatprep.subr.bf16.mxu0 %v4203
    %4837 = vmatpush2.bf16.msra.mxu0 %v4202
    %4838 = vmatprep.subr.bf16.mxu0 %v4201
    %4839 = vmatpush2.bf16.msra.mxu0 %v4200
    %4840 = vmatprep.subr.bf16.mxu0 %v4199
    %4841 = vmatpush2.bf16.msra.mxu0 %v4198
    %4842 = vmatprep.subr.bf16.mxu0 %v4197
    %4843 = vmatpush2.bf16.msra.mxu0 %v4196
    %4844 = vmatprep.subr.bf16.mxu0 %v4195
    %4845 = vmatpush2.bf16.msra.mxu0 %v4194
    %4846 = vmatprep.subr.bf16.mxu0 %v4193
    %4847 = vmatpush2.bf16.msra.mxu0 %v4192
    %4848 = vmatprep.subr.bf16.mxu0 %v4191
    %4849 = vmatpush2.bf16.msra.mxu0 %v4190
    %4850 = vmatprep.subr.bf16.mxu0 %v4189
    %4851 = vmatpush2.bf16.msra.mxu0 %v4188
    %4852 = vmatprep.mubr.bf16.mxu0 %v2750
    %4853 = vmatmul.mubr.bf16.gmra.mxu0 %v2749
    %v4854 = vpop.f32.mrf.mxu0
    %v4855 = vadd.f32 %v4814, %v4854
    %v4856 = vpop.f32.mrf.mxu0
    %v4857 = vadd.f32 %v4816, %v4856
    %v4858 = vpop.f32.mrf.mxu0
    %v4859 = vpop.f32.mrf.mxu0
    %4860 = vdwg.mxu0
    %v4861 = vmax.f32 %v4855, 0.0
    %v4862 = vmax.f32 %v4857, 0.0
    %v4863 = vpack.c.bf16 %v4861, %v4861
    %v4864 = vpack.c.bf16 %v4862, %v4862
    %v4865 = vld [vmem:[#allocation10] sm:$0xf]
    %v4866 = vld [vmem:[#allocation10 + $0x4] sm:$0xf]
    %v4867 = vld [vmem:[#allocation10 + $0x8] sm:$0xf]
    %v4868 = vld [vmem:[#allocation10 + $0xc] sm:$0xf]
    %v4869 = vld [vmem:[#allocation10 + $0x10] sm:$0xf]
    %v4870 = vld [vmem:[#allocation10 + $0x14] sm:$0xf]
    %v4871 = vld [vmem:[#allocation10 + $0x18] sm:$0xf]
    %v4872 = vld [vmem:[#allocation10 + $0x1c] sm:$0xf]
    %v4873 = vld [vmem:[#allocation10 + $0x20] sm:$0xf]
    %v4874 = vld [vmem:[#allocation10 + $0x24] sm:$0xf]
    %v4875 = vld [vmem:[#allocation10 + $0x28] sm:$0xf]
    %v4876 = vld [vmem:[#allocation10 + $0x2c] sm:$0xf]
    %v4877 = vld [vmem:[#allocation10 + $0x30] sm:$0xf]
    %v4878 = vld [vmem:[#allocation10 + $0x34] sm:$0xf]
    %v4879 = vld [vmem:[#allocation10 + $0x38] sm:$0xf]
    %v4880 = vld [vmem:[#allocation10 + $0x3c] sm:$0xf]
    %v4881 = vld [vmem:[#allocation10 + $0x40] sm:$0xf]
    %v4882 = vld [vmem:[#allocation10 + $0x44] sm:$0xf]
    %v4883 = vld [vmem:[#allocation10 + $0x48] sm:$0xf]
    %v4884 = vld [vmem:[#allocation10 + $0x4c] sm:$0xf]
    %v4885 = vld [vmem:[#allocation10 + $0x50] sm:$0xf]
    %v4886 = vld [vmem:[#allocation10 + $0x54] sm:$0xf]
    %v4887 = vld [vmem:[#allocation10 + $0x58] sm:$0xf]
    %v4888 = vld [vmem:[#allocation10 + $0x5c] sm:$0xf]
    %v4889 = vld [vmem:[#allocation10 + $0x60] sm:$0xf]
    %v4890 = vld [vmem:[#allocation10 + $0x64] sm:$0xf]
    %v4891 = vld [vmem:[#allocation10 + $0x68] sm:$0xf]
    %v4892 = vld [vmem:[#allocation10 + $0x6c] sm:$0xf]
    %v4893 = vld [vmem:[#allocation10 + $0x70] sm:$0xf]
    %v4894 = vld [vmem:[#allocation10 + $0x74] sm:$0xf]
    %v4895 = vld [vmem:[#allocation10 + $0x78] sm:$0xf]
    %v4896 = vld [vmem:[#allocation10 + $0x7c] sm:$0xf]
    %v4897 = vld [vmem:[#allocation2 + $0x7] ss:$0 sm:$0xff]
    %v4930 = vunpack.c.l.b16 %v4865
    %v4931 = vunpack.c.l.b16 %v4866
    %v4932 = vunpack.c.l.b16 %v4867
    %v4933 = vunpack.c.l.b16 %v4868
    %v4934 = vunpack.c.l.b16 %v4869
    %v4935 = vunpack.c.l.b16 %v4870
    %v4936 = vunpack.c.l.b16 %v4871
    %v4937 = vunpack.c.l.b16 %v4872
    %v4938 = vunpack.c.l.b16 %v4873
    %v4939 = vunpack.c.l.b16 %v4874
    %v4940 = vunpack.c.l.b16 %v4875
    %v4941 = vunpack.c.l.b16 %v4876
    %v4942 = vunpack.c.l.b16 %v4877
    %v4943 = vunpack.c.l.b16 %v4878
    %v4944 = vunpack.c.l.b16 %v4879
    %v4945 = vunpack.c.l.b16 %v4880
    %v4946 = vunpack.c.l.b16 %v4881
    %v4947 = vunpack.c.l.b16 %v4882
    %v4948 = vunpack.c.l.b16 %v4883
    %v4949 = vunpack.c.l.b16 %v4884
    %v4950 = vunpack.c.l.b16 %v4885
    %v4951 = vunpack.c.l.b16 %v4886
    %v4952 = vunpack.c.l.b16 %v4887
    %v4953 = vunpack.c.l.b16 %v4888
    %v4954 = vunpack.c.l.b16 %v4889
    %v4955 = vunpack.c.l.b16 %v4890
    %v4956 = vunpack.c.l.b16 %v4891
    %v4957 = vunpack.c.l.b16 %v4892
    %v4958 = vunpack.c.l.b16 %v4893
    %v4959 = vunpack.c.l.b16 %v4894
    %v4960 = vunpack.c.l.b16 %v4895
    %v4961 = vunpack.c.l.b16 %v4896
    %v4962 = vpack.c.b16 %v4931, %v4930
    %v4963 = vpack.c.b16 %v4933, %v4932
    %v4964 = vpack.c.b16 %v4935, %v4934
    %v4965 = vpack.c.b16 %v4937, %v4936
    %v4966 = vpack.c.b16 %v4939, %v4938
    %v4967 = vpack.c.b16 %v4941, %v4940
    %v4968 = vpack.c.b16 %v4943, %v4942
    %v4969 = vpack.c.b16 %v4945, %v4944
    %v4970 = vpack.c.b16 %v4947, %v4946
    %v4971 = vpack.c.b16 %v4949, %v4948
    %v4972 = vpack.c.b16 %v4951, %v4950
    %v4973 = vpack.c.b16 %v4953, %v4952
    %v4974 = vpack.c.b16 %v4955, %v4954
    %v4975 = vpack.c.b16 %v4957, %v4956
    %v4976 = vpack.c.b16 %v4959, %v4958
    %v4977 = vpack.c.b16 %v4961, %v4960
    %4994 = vmatprep.subr.bf16.mxu0 0
    %4995 = vmatpush1.bf16.msra.mxu0 %v4969
    %4996 = vmatprep.subr.bf16.mxu0 0
    %4997 = vmatpush1.bf16.msra.mxu0 %v4968
    %4998 = vmatprep.subr.bf16.mxu0 0
    %4999 = vmatpush1.bf16.msra.mxu0 %v4967
    %5000 = vmatprep.subr.bf16.mxu0 0
    %5001 = vmatpush1.bf16.msra.mxu0 %v4966
    %5002 = vmatprep.subr.bf16.mxu0 0
    %5003 = vmatpush1.bf16.msra.mxu0 %v4965
    %5004 = vmatprep.subr.bf16.mxu0 0
    %5005 = vmatpush1.bf16.msra.mxu0 %v4964
    %5006 = vmatprep.subr.bf16.mxu0 0
    %5007 = vmatpush1.bf16.msra.mxu0 %v4963
    %5008 = vmatprep.subr.bf16.mxu0 0
    %5009 = vmatpush1.bf16.msra.mxu0 %v4962
    %5010 = vmatprep.subr.bf16.mxu0 0
    %5011 = vmatpush2.bf16.msra.mxu0 %v4977
    %5012 = vmatprep.subr.bf16.mxu0 0
    %5013 = vmatpush2.bf16.msra.mxu0 %v4976
    %5014 = vmatprep.subr.bf16.mxu0 0
    %5015 = vmatpush2.bf16.msra.mxu0 %v4975
    %5016 = vmatprep.subr.bf16.mxu0 0
    %5017 = vmatpush2.bf16.msra.mxu0 %v4974
    %5018 = vmatprep.subr.bf16.mxu0 0
    %5019 = vmatpush2.bf16.msra.mxu0 %v4973
    %5020 = vmatprep.subr.bf16.mxu0 0
    %5021 = vmatpush2.bf16.msra.mxu0 %v4972
    %5022 = vmatprep.subr.bf16.mxu0 0
    %5023 = vmatpush2.bf16.msra.mxu0 %v4971
    %5024 = vmatprep.subr.bf16.mxu0 0
    %5025 = vmatpush2.bf16.msra.mxu0 %v4970
    %5026 = vmatprep.mubr.bf16.mxu0 %v4864
    %5027 = vmatmul.mubr.bf16.gmra.mxu0 %v4863
    %v5028 = vpop.f32.mrf.mxu0
    %v5029 = vadd.f32 %v4897, %v5028
    %v5030 = vpop.f32.mrf.mxu0
    %v5031 = vpop.f32.mrf.mxu0
    %v5032 = vpop.f32.mrf.mxu0
    %5033 = vdwg.mxu0
    %5034 = vst [vmem:[#allocation11] sm:$0x3] %v5029
    // Predicated region
    $region54: #{qnetwork2dconv_forward.1} parent=1 // pred_check
      _
    $region55: #{qnetwork2dconv_forward.1} parent=1 // pred_check_branch
      %5036 = sbr.rel (0) target = $region57
    $region56: #{qnetwork2dconv_forward.1} parent=1 // pred_region
      %s5038 = ssub.s32 32, 32
      %5039 = vsyncadd [#allocation4], %s5038
      %s5041 = sshll.u32 [#allocation11], 4
      %s5042 = int_to_ptr.vmem [resolvable:$true] %s5041
      %5044 = dma.vmem_to_hbm [thread:$0]  %s5042, 32, %s8, [#allocation4]
    $region57: #{qnetwork2dconv_forward.1} parent=1 // pred_fallthru
      _
    // Predicated region
    $region58: #{qnetwork2dconv_forward.1} parent=1 // pred_check
      _
    $region59: #{qnetwork2dconv_forward.1} parent=1 // pred_check_branch
      %5046 = sbr.rel (0) target = $region61
    $region60: #{qnetwork2dconv_forward.1} parent=1 // pred_region
      %5047 = dma.done [#allocation4], 32
    $region61: #{qnetwork2dconv_forward.1} parent=1 // pred_fallthru
      _
    %5048 = vsyncpa [#allocation3], 1
    %5049 = vsyncpa [#allocation6], 1
    %5050 = vsyncpa [#allocation9], 1
    %5051 = vsyncpa [#allocation4], 1

</llo_original>
